<compile_context>
chip_gen: v7x
topology: tpu7x:2x2x1
jax: 0.10.0
libtpu: 0.0.40
codegen_flags: <defaults>
</compile_context>

<pallas_src>
import jax
import jax.numpy as jnp
import numpy as np
from jax.experimental import pallas as pl
from jax.experimental.pallas import tpu as pltpu


def _round_up(v, m):
    return ((v + m - 1) // m) * m


def _tpu_defaults():
    """(token_tile, vmem_limit_bytes) tuned per TPU generation."""
    try:
        kind = jax.devices()[0].device_kind.lower()
    except Exception:
        kind = ""
    if "v7" in kind:          # 64 MiB VMEM/TC, ~311 FLOP/B crossover
        return 256, 48 * 1024 * 1024
    if "v6" in kind:          # 128 MiB VMEM, ~680 FLOP/B crossover
        return 512, 96 * 1024 * 1024
    if "v5" in kind:          # 128 MiB VMEM, ~240 FLOP/B crossover
        return 512, 64 * 1024 * 1024
    return 256, 64 * 1024 * 1024


# ---------------- Pallas kernel ----------------

def expert_kernel(tile_r, exp_r, first_r, act_r,
                  x_ref, w1_ref, b1_ref, w2_ref, g_ref, o_ref):
    # grid = (schedule_slot, hidden_chunk)
    s = pl.program_id(0)
    h = pl.program_id(1)

    # First scheduled step of a new token tile: zero the resident output block.
    @pl.when(jnp.logical_and(first_r[s] == 1, h == 0))
    def _init():
        o_ref[...] = jnp.zeros_like(o_ref)

    # Trailing padding slots (active == 0) do no compute and (via the index
    # maps) issue no DMAs; every real slot is active by construction.
    @pl.when(act_r[s] == 1)
    def _compute():
        # relu(x @ W1[:, hchunk] + b1[hchunk]) @ W2[hchunk, :]
        hid = jnp.dot(x_ref[...], w1_ref[0], preferred_element_type=jnp.float32)
        hid = jnp.maximum(hid + b1_ref[0], 0.0)
        y = jnp.dot(hid.astype(w2_ref.dtype), w2_ref[0],
                    preferred_element_type=jnp.float32)
        o_ref[...] += g_ref[0] * y


# ---------------- pallas_call wrapper ----------------

def _run_experts(x_pad, w1p, b1p, w2p, gates_t,
                 sched_tile, sched_exp, first_slot, act_slot,
                 tm, th, vmem_limit):
    Np, Dp = x_pad.shape
    E, _, Hp = w1p.shape
    Dop = w2p.shape[2]
    Hn = Hp // th
    s_len = sched_tile.shape[0]
    last_chunk = Hn - 1

    def h_idx(h, a, s):
        # Padding slots keep the last-resident hidden chunk -> weight DMA elided.
        return jnp.where(a[s] == 1, h, last_chunk)

    grid_spec = pltpu.PrefetchScalarGridSpec(
        num_scalar_prefetch=4,            # tile, expert, first-of-tile, active
        grid=(s_len, Hn),
        in_specs=[
            # token tile (stays resident while the scheduled tile is unchanged)
            pl.BlockSpec((tm, Dp), lambda s, h, t, e, f, a: (t[s], 0)),
            # expert weight / bias slices, chunked along H
            pl.BlockSpec((1, Dp, th),
                         lambda s, h, t, e, f, a: (e[s], 0, h_idx(h, a, s))),
            pl.BlockSpec((1, 1, th),
                         lambda s, h, t, e, f, a: (e[s], 0, h_idx(h, a, s))),
            pl.BlockSpec((1, th, Dop),
                         lambda s, h, t, e, f, a: (e[s], h_idx(h, a, s), 0)),
            # per-(expert, tile) gate column
            pl.BlockSpec((1, tm, 1), lambda s, h, t, e, f, a: (e[s], t[s], 0)),
        ],
        out_specs=pl.BlockSpec((tm, Dop), lambda s, h, t, e, f, a: (t[s], 0)),
        scratch_shapes=[],
    )

    return pl.pallas_call(
        expert_kernel,
        out_shape=jax.ShapeDtypeStruct((Np, Dop), jnp.float32),
        grid_spec=grid_spec,
        compiler_params=pltpu.CompilerParams(
            # Both axes accumulate into a revisited output block -> arbitrary.
            # TODO(synk): v7x dual-TC split of the schedule axis via core_map.
            dimension_semantics=("arbitrary", "arbitrary"),
            vmem_limit_bytes=vmem_limit,
        ),
    )(sched_tile, sched_exp, first_slot, act_slot,
      x_pad, w1p, b1p, w2p, gates_t)


# ---------------- forward ----------------

def switch_moe_forward(x, params, top_k, tm=None, hidden_chunk=512,
                       compute_dtype=jnp.bfloat16):
    """x: [B, S, D_in] -> [B, S, D_out]."""
    wr, br, w1, b1, w2, b2 = params
    B, S, D = x.shape
    E = wr.shape[1]
    H = w1.shape[2]
    Dout = w2.shape[2]
    N = B * S

    tm_default, vmem_limit = _tpu_defaults()
    if tm is None:
        tm = tm_default

    x_flat_f32 = x.reshape(N, D).astype(jnp.float32)

    # Router: tiny [N,D]x[D,E] matmul, left to XLA (f32 so top-k is exact).
    logits = jnp.dot(x_flat_f32, wr) + br.reshape(1, E)
    topv, topi = jax.lax.top_k(logits, top_k)
    gates = jax.nn.softmax(topv, axis=1)
    gates_dense = jnp.sum(
        jax.nn.one_hot(topi, E, dtype=jnp.float32) * gates[..., None], axis=1)

    # Sort tokens by their primary expert so token tiles are expert-coherent.
    order = jnp.argsort(topi[:, 0])
    inv = jnp.argsort(order)
    xs = x.reshape(N, D).astype(compute_dtype)[order]   # gather in bf16
    gs = gates_dense[order]

    # Padding: tokens to a tile multiple (x16 for bf16 sublane packing),
    # features to lane-dense multiples of 128.
    tm_eff = min(tm, _round_up(N, 16))
    Np = _round_up(N, tm_eff)
    Dp = _round_up(D, 128)
    Dop = _round_up(Dout, 128)
    if H > hidden_chunk:
        th = hidden_chunk
        Hp = _round_up(H, th)
    else:
        Hp = _round_up(H, 128)
        th = Hp

    xs = jnp.pad(xs, ((0, Np - N), (0, Dp - D)))
    gs = jnp.pad(gs, ((0, Np - N), (0, 0)))              # padded tokens: zero gates

    w1p = jnp.pad(w1, ((0, 0), (0, Dp - D), (0, Hp - H))).astype(compute_dtype)
    w2p = jnp.pad(w2, ((0, 0), (0, Hp - H), (0, Dop - Dout))).astype(compute_dtype)
    b1p = jnp.pad(b1, ((0, 0), (0, Hp - H))).reshape(E, 1, Hp).astype(jnp.float32)
    gates_t = gs.T.reshape(E, Np, 1)                     # gate slab for BlockSpec

    # ---- compacted (tile, expert) schedule (static length, built in-jit) ----
    T = Np // tm_eff
    if top_k == 1:
        s_len = T + E - 1                                # sorted top-1: tight bound
    else:
        s_len = T * min(E, tm_eff * top_k)
    s_len = max(1, min(s_len, T * E))

    active_te = gs.reshape(T, tm_eff, E).max(axis=1) > 0.0      # (T, E)
    act_flat = active_te.reshape(-1)
    flat_idx = jnp.arange(T * E, dtype=jnp.int32)
    num_act = jnp.sum(act_flat.astype(jnp.int32))
    pos = jnp.cumsum(act_flat.astype(jnp.int32)) - 1
    last_act = jnp.maximum(jnp.max(jnp.where(act_flat, flat_idx, -1)), 0)

    sched = jnp.full((s_len,), last_act, dtype=jnp.int32)       # pad = repeat last
    sched = sched.at[jnp.where(act_flat, pos, s_len)].set(flat_idx, mode="drop")

    sched_tile = (sched // E).astype(jnp.int32)
    sched_exp = (sched % E).astype(jnp.int32)
    slot = jnp.arange(s_len, dtype=jnp.int32)
    act_slot = (slot < num_act).astype(jnp.int32)
    prev_tile = jnp.concatenate([jnp.full((1,), -1, jnp.int32), sched_tile[:-1]])
    first_slot = ((sched_tile != prev_tile) & (act_slot == 1)).astype(jnp.int32)

    out_pad = _run_experts(xs, w1p, b1p, w2p, gates_t,
                           sched_tile, sched_exp, first_slot, act_slot,
                           tm_eff, th, vmem_limit)

    # Unpad + unsort; the b2 contribution (gate * b2) is folded in here.
    out = out_pad[:N, :Dout][inv] + jnp.dot(gates_dense, b2)
    return out.reshape(B, S, Dout)


# ---------------- reference (plain JAX, same bf16-MXU / f32-accum math) ----------------

def reference_forward(x, params, top_k, compute_dtype=jnp.bfloat16):
    wr, br, w1, b1, w2, b2 = params
    B, S, D = x.shape
    E = wr.shape[1]
    x_flat = x.reshape(-1, D).astype(jnp.float32)

    logits = x_flat @ wr + br.reshape(1, E)
    topv, topi = jax.lax.top_k(logits, top_k)
    gates = jax.nn.softmax(topv, axis=1)
    gates_dense = jnp.sum(
        jax.nn.one_hot(topi, E, dtype=jnp.float32) * gates[..., None], axis=1)

    xc = x_flat.astype(compute_dtype)
    out = jnp.zeros((x_flat.shape[0], w2.shape[2]), jnp.float32)
    for e in range(E):
        h = jnp.dot(xc, w1[e].astype(compute_dtype),
                    preferred_element_type=jnp.float32) + b1[e]
        h = jnp.maximum(h, 0.0)
        y = jnp.dot(h.astype(compute_dtype), w2[e].astype(compute_dtype),
                    preferred_element_type=jnp.float32) + b2[e]
        out = out + gates_dense[:, e:e + 1] * y
    return out.reshape(B, S, -1)


# ---------------- main ----------------

if __name__ == "__main__":
    B, S = 2, 8
    D_IN, HIDDEN, D_OUT = 32, 64, 32
    NUM_EXPERTS, TOP_K = 4, 1

    key = jax.random.PRNGKey(0)
    ks = jax.random.split(key, 8)

    wr = jax.random.uniform(ks[0], (D_IN, NUM_EXPERTS), jnp.float32,
                            -1.0, 1.0) / jnp.sqrt(D_IN)
    br = jax.random.uniform(ks[1], (1, NUM_EXPERTS), jnp.float32,
                            -1.0, 1.0) / jnp.sqrt(D_IN)
    w1 = jax.random.uniform(ks[2], (NUM_EXPERTS, D_IN, HIDDEN), jnp.float32,
                            -1.0, 1.0) / jnp.sqrt(D_IN)
    b1 = jax.random.uniform(ks[3], (NUM_EXPERTS, HIDDEN), jnp.float32,
                            -1.0, 1.0) / jnp.sqrt(D_IN)
    w2 = jax.random.uniform(ks[4], (NUM_EXPERTS, HIDDEN, D_OUT), jnp.float32,
                            -1.0, 1.0) / jnp.sqrt(HIDDEN)
    b2 = jax.random.uniform(ks[5], (NUM_EXPERTS, D_OUT), jnp.float32,
                            -1.0, 1.0) / jnp.sqrt(HIDDEN)
    params = (wr, br, w1, b1, w2, b2)

    x = jax.random.normal(ks[6], (B, S, D_IN), jnp.float32)

    fwd = jax.jit(lambda xx, pp: switch_moe_forward(xx, pp, TOP_K))
    out = jax.block_until_ready(fwd(x, params))

    ref = reference_forward(x, params, TOP_K)
    np.testing.assert_allclose(np.asarray(out), np.asarray(ref),
                               rtol=1e-3, atol=1e-3)
    assert out.shape == (B, S, D_OUT)
    print("KERNEL_OK")
</pallas_src>

<mosaic_0001>
module attributes {stable_mosaic.version = 11 : i64} {
  func.func @expert_kernel(%arg0: i32, %arg1: i32, %arg2: memref<4xi32, #tpu.memory_space<smem>>, %arg3: memref<4xi32, #tpu.memory_space<smem>>, %arg4: memref<4xi32, #tpu.memory_space<smem>>, %arg5: memref<4xi32, #tpu.memory_space<smem>>, %arg6: memref<16x128xbf16, #tpu.memory_space<vmem>>, %arg7: memref<1x128x128xbf16, #tpu.memory_space<vmem>>, %arg8: memref<1x1x128xf32, #tpu.memory_space<vmem>>, %arg9: memref<1x128x128xbf16, #tpu.memory_space<vmem>>, %arg10: memref<1x16x1xf32, #tpu.memory_space<vmem>>, %arg11: memref<16x128xf32, #tpu.memory_space<vmem>>) attributes {dimension_semantics = [#tpu.dimension_semantics<arbitrary>, #tpu.dimension_semantics<arbitrary>], iteration_bounds = array<i64: 4, 1>, scalar_prefetch = 4 : i64, scratch_operands = 0 : i64, tpu.core_type = #tpu.core_type<tc>, window_params = [{transform_indices = @transform_0, window_bounds = array<i64: 16, 128>}, {transform_indices = @transform_1, window_bounds = array<i64: 1, 128, 128>}, {transform_indices = @transform_2, window_bounds = array<i64: 1, 1, 128>}, {transform_indices = @transform_3, window_bounds = array<i64: 1, 128, 128>}, {transform_indices = @transform_4, window_bounds = array<i64: 1, 16, 1>}, {transform_indices = @transform_5, window_bounds = array<i64: 16, 128>}]} {
    %0 = arith.index_cast %arg0 : i32 to index
    %1 = memref.load %arg4[%0] : memref<4xi32, #tpu.memory_space<smem>>
    %c1_i32 = arith.constant 1 : i32
    %2 = arith.cmpi eq, %1, %c1_i32 : i32
    %c0_i32 = arith.constant 0 : i32
    %3 = arith.cmpi eq, %arg1, %c0_i32 : i32
    %4 = arith.andi %2, %3 : i1
    %5 = arith.extui %4 : i1 to i32
    %c0_i32_0 = arith.constant 0 : i32
    %6 = arith.cmpi ne, %5, %c0_i32_0 : i32
    scf.if %6 {
      %cst = arith.constant 0.000000e+00 : f32
      %12 = vector.broadcast %cst : f32 to vector<16x128xf32>
      %c0 = arith.constant 0 : index
      %c0_3 = arith.constant 0 : index
      %13 = vector.load %arg11[%c0, %c0_3] : memref<16x128xf32, #tpu.memory_space<vmem>>, vector<16x128xf32>
      tpu.vector_store %arg11[%c0, %c0_3], %12 {strides = array<i32>} : memref<16x128xf32, #tpu.memory_space<vmem>>, vector<16x128xf32>,
    } else {
    }
    %7 = arith.index_cast %arg0 : i32 to index
    %8 = memref.load %arg5[%7] : memref<4xi32, #tpu.memory_space<smem>>
    %c1_i32_1 = arith.constant 1 : i32
    %9 = arith.cmpi eq, %8, %c1_i32_1 : i32
    %10 = arith.extui %9 : i1 to i32
    %c0_i32_2 = arith.constant 0 : i32
    %11 = arith.cmpi ne, %10, %c0_i32_2 : i32
    scf.if %11 {
      %c0 = arith.constant 0 : index
      %c0_3 = arith.constant 0 : index
      %12 = vector.load %arg6[%c0, %c0_3] : memref<16x128xbf16, #tpu.memory_space<vmem>>, vector<16x128xbf16>
      %c0_4 = arith.constant 0 : index
      %c0_5 = arith.constant 0 : index
      %c0_6 = arith.constant 0 : index
      %13 = vector.load %arg7[%c0_4, %c0_5, %c0_6] : memref<1x128x128xbf16, #tpu.memory_space<vmem>>, vector<1x128x128xbf16>
      %14 = vector.shape_cast %13 : vector<1x128x128xbf16> to vector<128x128xbf16>
      %cst = arith.constant dense<0.000000e+00> : vector<16x128xf32>
      %15 = tpu.matmul %12, %14, %cst {dimension_numbers = #tpu.dot_dimension_numbers<[1], [0], [0], [1], [0, 0, 1, 1], [], []>} : vector<16x128xbf16>, vector<128x128xbf16>, vector<16x128xf32> -> vector<16x128xf32>
      %c0_7 = arith.constant 0 : index
      %c0_8 = arith.constant 0 : index
      %c0_9 = arith.constant 0 : index
      %16 = vector.load %arg8[%c0_7, %c0_8, %c0_9] : memref<1x1x128xf32, #tpu.memory_space<vmem>>, vector<1x1x128xf32>
      %17 = vector.shape_cast %16 : vector<1x1x128xf32> to vector<1x128xf32>
      %18 = vector.broadcast %17 : vector<1x128xf32> to vector<16x128xf32>
      %19 = arith.addf %15, %18 : vector<16x128xf32>
      %cst_10 = arith.constant 0.000000e+00 : f32
      %20 = vector.broadcast %cst_10 : f32 to vector<16x128xf32>
      %21 = arith.maximumf %19, %20 : vector<16x128xf32>
      %22 = arith.truncf %21 : vector<16x128xf32> to vector<16x128xbf16>
      %c0_11 = arith.constant 0 : index
      %c0_12 = arith.constant 0 : index
      %c0_13 = arith.constant 0 : index
      %23 = vector.load %arg9[%c0_11, %c0_12, %c0_13] : memref<1x128x128xbf16, #tpu.memory_space<vmem>>, vector<1x128x128xbf16>
      %24 = vector.shape_cast %23 : vector<1x128x128xbf16> to vector<128x128xbf16>
      %cst_14 = arith.constant dense<0.000000e+00> : vector<16x128xf32>
      %25 = tpu.matmul %22, %24, %cst_14 {dimension_numbers = #tpu.dot_dimension_numbers<[1], [0], [0], [1], [0, 0, 1, 1], [], []>} : vector<16x128xbf16>, vector<128x128xbf16>, vector<16x128xf32> -> vector<16x128xf32>
      %c0_15 = arith.constant 0 : index
      %c0_16 = arith.constant 0 : index
      %26 = vector.load %arg11[%c0_15, %c0_16] : memref<16x128xf32, #tpu.memory_space<vmem>>, vector<16x128xf32>
      %c0_17 = arith.constant 0 : index
      %c0_18 = arith.constant 0 : index
      %c0_19 = arith.constant 0 : index
      %27 = vector.load %arg10[%c0_17, %c0_18, %c0_19] : memref<1x16x1xf32, #tpu.memory_space<vmem>>, vector<1x16x1xf32>
      %28 = vector.shape_cast %27 : vector<1x16x1xf32> to vector<16x1xf32>
      %29 = vector.broadcast %28 : vector<16x1xf32> to vector<16x128xf32>
      %30 = arith.mulf %29, %25 : vector<16x128xf32>
      %31 = arith.addf %26, %30 : vector<16x128xf32>
      %c0_20 = arith.constant 0 : index
      %c0_21 = arith.constant 0 : index
      %32 = vector.load %arg11[%c0_20, %c0_21] : memref<16x128xf32, #tpu.memory_space<vmem>>, vector<16x128xf32>
      tpu.vector_store %arg11[%c0_20, %c0_21], %31 {strides = array<i32>} : memref<16x128xf32, #tpu.memory_space<vmem>>, vector<16x128xf32>,
    } else {
    }
    return
  }
  func.func @transform_0(%arg0: i32, %arg1: i32, %arg2: memref<4xi32, #tpu.memory_space<smem>>, %arg3: memref<4xi32, #tpu.memory_space<smem>>, %arg4: memref<4xi32, #tpu.memory_space<smem>>, %arg5: memref<4xi32, #tpu.memory_space<smem>>) -> (i32, i32) {
    %0 = arith.index_cast %arg0 : i32 to index
    %1 = memref.load %arg2[%0] : memref<4xi32, #tpu.memory_space<smem>>
    %c0_i32 = arith.constant 0 : i32
    %c0_i32_0 = arith.constant 0 : i32
    return %1, %c0_i32 : i32, i32
  }
  func.func @transform_1(%arg0: i32, %arg1: i32, %arg2: memref<4xi32, #tpu.memory_space<smem>>, %arg3: memref<4xi32, #tpu.memory_space<smem>>, %arg4: memref<4xi32, #tpu.memory_space<smem>>, %arg5: memref<4xi32, #tpu.memory_space<smem>>) -> (i32, i32, i32) {
    %0 = arith.index_cast %arg0 : i32 to index
    %1 = memref.load %arg3[%0] : memref<4xi32, #tpu.memory_space<smem>>
    %2 = arith.index_cast %arg0 : i32 to index
    %3 = memref.load %arg5[%2] : memref<4xi32, #tpu.memory_space<smem>>
    %c1_i32 = arith.constant 1 : i32
    %4 = arith.cmpi eq, %3, %c1_i32 : i32
    %c0_i32 = arith.constant 0 : i32
    %5 = arith.select %4, %arg1, %c0_i32 : i32
    %c0_i32_0 = arith.constant 0 : i32
    %c0_i32_1 = arith.constant 0 : i32
    return %1, %c0_i32_0, %5 : i32, i32, i32
  }
  func.func @transform_2(%arg0: i32, %arg1: i32, %arg2: memref<4xi32, #tpu.memory_space<smem>>, %arg3: memref<4xi32, #tpu.memory_space<smem>>, %arg4: memref<4xi32, #tpu.memory_space<smem>>, %arg5: memref<4xi32, #tpu.memory_space<smem>>) -> (i32, i32, i32) {
    %0 = arith.index_cast %arg0 : i32 to index
    %1 = memref.load %arg3[%0] : memref<4xi32, #tpu.memory_space<smem>>
    %2 = arith.index_cast %arg0 : i32 to index
    %3 = memref.load %arg5[%2] : memref<4xi32, #tpu.memory_space<smem>>
    %c1_i32 = arith.constant 1 : i32
    %4 = arith.cmpi eq, %3, %c1_i32 : i32
    %c0_i32 = arith.constant 0 : i32
    %5 = arith.select %4, %arg1, %c0_i32 : i32
    %c0_i32_0 = arith.constant 0 : i32
    %c0_i32_1 = arith.constant 0 : i32
    return %1, %c0_i32_0, %5 : i32, i32, i32
  }
  func.func @transform_3(%arg0: i32, %arg1: i32, %arg2: memref<4xi32, #tpu.memory_space<smem>>, %arg3: memref<4xi32, #tpu.memory_space<smem>>, %arg4: memref<4xi32, #tpu.memory_space<smem>>, %arg5: memref<4xi32, #tpu.memory_space<smem>>) -> (i32, i32, i32) {
    %0 = arith.index_cast %arg0 : i32 to index
    %1 = memref.load %arg3[%0] : memref<4xi32, #tpu.memory_space<smem>>
    %2 = arith.index_cast %arg0 : i32 to index
    %3 = memref.load %arg5[%2] : memref<4xi32, #tpu.memory_space<smem>>
    %c1_i32 = arith.constant 1 : i32
    %4 = arith.cmpi eq, %3, %c1_i32 : i32
    %c0_i32 = arith.constant 0 : i32
    %5 = arith.select %4, %arg1, %c0_i32 : i32
    %c0_i32_0 = arith.constant 0 : i32
    %c0_i32_1 = arith.constant 0 : i32
    return %1, %5, %c0_i32_0 : i32, i32, i32
  }
  func.func @transform_4(%arg0: i32, %arg1: i32, %arg2: memref<4xi32, #tpu.memory_space<smem>>, %arg3: memref<4xi32, #tpu.memory_space<smem>>, %arg4: memref<4xi32, #tpu.memory_space<smem>>, %arg5: memref<4xi32, #tpu.memory_space<smem>>) -> (i32, i32, i32) {
    %0 = arith.index_cast %arg0 : i32 to index
    %1 = memref.load %arg3[%0] : memref<4xi32, #tpu.memory_space<smem>>
    %2 = arith.index_cast %arg0 : i32 to index
    %3 = memref.load %arg2[%2] : memref<4xi32, #tpu.memory_space<smem>>
    %c0_i32 = arith.constant 0 : i32
    %c0_i32_0 = arith.constant 0 : i32
    return %1, %3, %c0_i32 : i32, i32, i32
  }
  func.func @transform_5(%arg0: i32, %arg1: i32, %arg2: memref<4xi32, #tpu.memory_space<smem>>, %arg3: memref<4xi32, #tpu.memory_space<smem>>, %arg4: memref<4xi32, #tpu.memory_space<smem>>, %arg5: memref<4xi32, #tpu.memory_space<smem>>) -> (i32, i32) {
    %0 = arith.index_cast %arg0 : i32 to index
    %1 = memref.load %arg2[%0] : memref<4xi32, #tpu.memory_space<smem>>
    %c0_i32 = arith.constant 0 : i32
    %c0_i32_0 = arith.constant 0 : i32
    return %1, %c0_i32 : i32, i32
  }
}

</mosaic_0001>

<llo_original>
// kernel: custom-call
$region0: #{custom-call}
  #allocation0 [shape = 'u32[8,128]{1,0}', space=vmem, size = 0x1000, scoped, tag = 'scratch']
  #allocation1 [shape = 'u32[8,128]{1,0}', space=vmem, size = 0x1000, scoped, tag = 'scratch']
  #allocation2 [shape = 'u32[8,128]{1,0}', space=vmem, size = 0x1000, scoped, tag = 'scratch']
  #allocation3 [shape = 'u32[8,128]{1,0}', space=vmem, size = 0x1000, scoped, tag = 'scratch']
  #allocation4 [shape = 'u32[8,128]{1,0}', space=vmem, size = 0x1000, scoped, tag = 'scratch']
  #allocation5 [shape = 'u32[8,128]{1,0}', space=vmem, size = 0x1000, scoped, tag = 'scratch']
  #allocation6 [shape = 'u32[8,128]{1,0}', space=vmem, size = 0x1000, scoped, tag = 'scratch']
  %s0 = inlined_call_operand.vmem [shape: f32[16,4], index: 0, kind: input, shape index: {}]
  %s1 = inlined_call_operand.vmem [shape: f32[16,1], index: 1, kind: output, shape index: {0}]
  %s2 = inlined_call_operand.vmem [shape: s32[16,1], index: 2, kind: output, shape index: {1}]
  %3 = xla_tuple %s1, %s2
  %4 = xla_tuple 2147483648, 2147483647
  $region1: #{custom-call} parent=0
    #allocation7 [shape = 'u8[4096]{0}', space=vmem, size = 0x1000, scoped, tag = 'operand span for operand 1']
    #allocation8 [shape = 'u8[512]{0}', space=vmem, size = 0x400, scoped, tag = 'packed  for operand 1']
    #allocation9 [shape = 'u8[4096]{0}', space=vmem, size = 0x1000, scoped, tag = 'operand span for operand 2']
    #allocation10 [shape = 'u8[512]{0}', space=vmem, size = 0x400, scoped, tag = 'packed  for operand 2']
    #allocation11 [shape = 'f32[1,128]{1,0:T(8,128)}', space=vmem, size = 0x1000, scoped, tag = 'scoped memory for custom-call']
    #allocation12 [shape = 'f32[1,128]{1,0:T(8,128)}', space=vmem, size = 0x1000, scoped, tag = 'scoped memory for custom-call']
    #allocation13 [shape = 's32[1,128]{1,0:T(8,128)}', space=vmem, size = 0x1000, scoped, tag = 'scoped memory for custom-call']
    #allocation14 [shape = 's32[1,128]{1,0:T(8,128)}', space=vmem, size = 0x1000, scoped, tag = 'scoped memory for custom-call']
    %5 = xla_tuple [#allocation7], [#allocation9]
    %6 = vst [vmem:[#allocation11] sm:$0xff] 2147483648
    %7 = vst [vmem:[#allocation13] sm:$0xff] 2147483647
    %8 = xla_tuple [#allocation11], [#allocation13]
    %9 = xla_tuple [#allocation12], [#allocation14]
    $region2: #{custom-call} parent=1
      #allocation15 [shape = 'u8[4096]{0}', space=vmem, size = 0x1000, scoped, tag = 'operand span for operand 0']
      #allocation16 [shape = 's32[1024]{0}', space=vmem, size = 0x1000, scoped, tag = 'scoped memory for custom-call']
      // Predicated region
      $region3: #{custom-call} parent=2 // pred_check
        _
      $region4: #{custom-call} parent=2 // pred_check_branch
        %11 = sbr.rel (0) target = $region6
      $region5: #{custom-call} parent=2 // pred_region
        // Predicated region
        $region7: #{custom-call} parent=5 // pred_check
          _
        $region8: #{custom-call} parent=5 // pred_check_branch
          %13 = sbr.rel (0) target = $region10
        $region9: #{custom-call} parent=5 // pred_region
          // Predicated region
          $region11: #{custom-call} parent=9 // pred_check
            _
          $region12: #{custom-call} parent=9 // pred_check_branch
            %15 = sbr.rel target = $region14
          $region13: #{custom-call} parent=9 // pred_region
            // Predicated region
            $region26: #{custom-call} parent=13 // pred_check
              _
            $region27: #{custom-call} parent=13 // pred_check_branch
              %30 = sbr.rel (0) target = $region29
            $region28: #{custom-call} parent=13 // pred_region
              loop: start=0, step=1, limit=1
              $region30: #{custom-call} parent=28 // loop_pre_header
                _
              $region31: #{custom-call} parent=28 // loop_header
                %s33 = sphi 0, %s37
                %p34 = scmp.ge.s32.totalorder %s33, 1
                %s38 = sphi %s0, %s0
                %s39 = sphi [#allocation15], [#allocation15]
              $region32: #{custom-call} parent=28 // loop_header_branch
                %36 = sbr.rel (%p34) target = $region36
              $region33: #{custom-call} parent=28 // loop_body
                %v40 = vld [vmem:[%s38] sm:$0xf]
                %41 = vst [vmem:[%s39] sm:$0xf] %v40
              $region34: #{custom-call} parent=28 // loop_footer
                %s37 = sadd.s32 1, %s33
              $region35: #{custom-call} parent=28 // loop_footer_branch
                %32 = sbr.rel target = $region31
              $region36: #{custom-call} parent=28 // loop_exit
                _
            $region29: #{custom-call} parent=13 // pred_fallthru
              _
          $region14: #{custom-call} parent=9 // pred_fallthru
            _
          // Predicated region
          $region15: #{custom-call} parent=9 // pred_check
            _
          $region16: #{custom-call} parent=9 // pred_check_branch
            %17 = sbr.rel (0) target = $region18
          $region17: #{custom-call} parent=9 // pred_region
            loop: start=0, step=1, limit=1
            $region19: #{custom-call} parent=17 // loop_pre_header
              _
            $region20: #{custom-call} parent=17 // loop_header
              %s20 = sphi 0, %s24
              %p21 = scmp.ge.s32.totalorder %s20, 1
              %s25 = sphi %s0, %s0
              %s26 = sphi [#allocation15], [#allocation15]
            $region21: #{custom-call} parent=17 // loop_header_branch
              %23 = sbr.rel (%p21) target = $region25
            $region22: #{custom-call} parent=17 // loop_body
              %v27 = vld [vmem:[%s25] sm:$0xf]
              %28 = vst [vmem:[%s26] sm:$0xf] %v27
            $region23: #{custom-call} parent=17 // loop_footer
              %s24 = sadd.s32 1, %s20
            $region24: #{custom-call} parent=17 // loop_footer_branch
              %19 = sbr.rel target = $region20
            $region25: #{custom-call} parent=17 // loop_exit
              _
          $region18: #{custom-call} parent=9 // pred_fallthru
            _
        $region10: #{custom-call} parent=5 // pred_fallthru
          _
        %42 = vnop
      $region6: #{custom-call} parent=2 // pred_fallthru
        _
      // Predicated region
      $region37: #{custom-call} parent=2 // pred_check
        _
      $region38: #{custom-call} parent=2 // pred_check_branch
        %44 = sbr.rel (0) target = $region40
      $region39: #{custom-call} parent=2 // pred_region
        _
      $region40: #{custom-call} parent=2 // pred_fallthru
        _
      %v45 = vlaneseq
      %v46 = vshrl.u32 %v45, 7
      %v48 = vld [vmem:[#allocation15] sm:$0xff]
      %vm49 = vcmp.lt.s32.totalorder %v48, 0
      %v50 = vsub.s32 2147483647, %v48
      %v51 = vsel %vm49, %v50, %v48
      %vm53 = vcmp.lt.s32.totalorder %v46, 4
      %v54 = vsel %vm53, %v51, 2147483648
      %55 = vst [vmem:[#allocation15] sm:$0xff] %v54
      %v56 = vlaneseq
      %v57 = vshrl.u32 %v56, 7
      %60 = vst [vmem:[#allocation16] sm:$0xff] %v57
      %61 = xla_tuple [#allocation15], [#allocation16]
      %62 = vst [vmem:[#allocation12] sm:$0xff] 2147483648
      %63 = vst [vmem:[#allocation14] sm:$0xff] 2147483647
      %64 = xla_tuple [#allocation12], [#allocation14]
      loop: start=0, step=1, limit=1
      $region41: #{custom-call} parent=2 // loop_pre_header
        _
      $region42: #{custom-call} parent=2 // loop_header
        %s66 = sphi 0, %s70
        %p67 = scmp.ge.s32.totalorder %s66, 1
      $region43: #{custom-call} parent=2 // loop_header_branch
        %69 = sbr.rel (%p67) target = $region47
      $region44: #{custom-call} parent=2 // loop_body
        %v71 = vld [vmem:[#allocation15] sm:$0xff]
        %v72 = vld [vmem:[#allocation16] sm:$0xff]
        %73 = xla_tuple %v71, %v72
        %v74 = vrot.slane %v71, 1
        %v75 = vrot.slane %v72, 1
        %76 = xla_tuple %v74, %v75
        %vm77 = vcmp.gt.s32.totalorder %v74, %v71
        %vm78 = vcmp.eq.s32.totalorder %v74, %v71
        %vm79 = vcmp.lt.s32.totalorder %v75, %v72
        %vm80 = vmand %vm78, %vm79
        %vm81 = vmor %vm77, %vm80
        %v82 = vsel %vm81, %v74, %v71
        %v83 = vsel %vm81, %v75, %v72
        %84 = xla_tuple %v82, %v83
        %v85 = vrot.slane %v82, 1
        %v86 = vrot.slane %v83, 1
        %87 = xla_tuple %v85, %v86
        %vm88 = vcmp.gt.s32.totalorder %v85, %v82
        %vm89 = vcmp.eq.s32.totalorder %v85, %v82
        %vm90 = vcmp.lt.s32.totalorder %v86, %v83
        %vm91 = vmand %vm89, %vm90
        %vm92 = vmor %vm88, %vm91
        %v93 = vsel %vm92, %v85, %v82
        %v94 = vsel %vm92, %v86, %v83
        %95 = xla_tuple %v93, %v94
        %v96 = vrot.slane %v93, 1
        %v97 = vrot.slane %v94, 1
        %98 = xla_tuple %v96, %v97
        %vm99 = vcmp.gt.s32.totalorder %v96, %v93
        %vm100 = vcmp.eq.s32.totalorder %v96, %v93
        %vm101 = vcmp.lt.s32.totalorder %v97, %v94
        %vm102 = vmand %vm100, %vm101
        %vm103 = vmor %vm99, %vm102
        %v104 = vsel %vm103, %v96, %v93
        %v105 = vsel %vm103, %v97, %v94
        %106 = xla_tuple %v104, %v105
        %v107 = vrot.slane %v104, 1
        %v108 = vrot.slane %v105, 1
        %109 = xla_tuple %v107, %v108
        %vm110 = vcmp.gt.s32.totalorder %v107, %v104
        %vm111 = vcmp.eq.s32.totalorder %v107, %v104
        %vm112 = vcmp.lt.s32.totalorder %v108, %v105
        %vm113 = vmand %vm111, %vm112
        %vm114 = vmor %vm110, %vm113
        %v115 = vsel %vm114, %v107, %v104
        %v116 = vsel %vm114, %v108, %v105
        %117 = xla_tuple %v115, %v116
        %v118 = vrot.slane %v115, 1
        %v119 = vrot.slane %v116, 1
        %120 = xla_tuple %v118, %v119
        %vm121 = vcmp.gt.s32.totalorder %v118, %v115
        %vm122 = vcmp.eq.s32.totalorder %v118, %v115
        %vm123 = vcmp.lt.s32.totalorder %v119, %v116
        %vm124 = vmand %vm122, %vm123
        %vm125 = vmor %vm121, %vm124
        %v126 = vsel %vm125, %v118, %v115
        %v127 = vsel %vm125, %v119, %v116
        %128 = xla_tuple %v126, %v127
        %v129 = vrot.slane %v126, 1
        %v130 = vrot.slane %v127, 1
        %131 = xla_tuple %v129, %v130
        %vm132 = vcmp.gt.s32.totalorder %v129, %v126
        %vm133 = vcmp.eq.s32.totalorder %v129, %v126
        %vm134 = vcmp.lt.s32.totalorder %v130, %v127
        %vm135 = vmand %vm133, %vm134
        %vm136 = vmor %vm132, %vm135
        %v137 = vsel %vm136, %v129, %v126
        %v138 = vsel %vm136, %v130, %v127
        %139 = xla_tuple %v137, %v138
        %v140 = vrot.slane %v137, 1
        %v141 = vrot.slane %v138, 1
        %142 = xla_tuple %v140, %v141
        %vm143 = vcmp.gt.s32.totalorder %v140, %v137
        %vm144 = vcmp.eq.s32.totalorder %v140, %v137
        %vm145 = vcmp.lt.s32.totalorder %v141, %v138
        %vm146 = vmand %vm144, %vm145
        %vm147 = vmor %vm143, %vm146
        %v148 = vsel %vm147, %v140, %v137
        %v149 = vsel %vm147, %v141, %v138
        %150 = xla_tuple %v148, %v149
        %s151 = scalar_lea.vmem [#allocation12], %s66
        %152 = vst [vmem:[%s151] sm:$0x1] %v148
        %s153 = scalar_lea.vmem [#allocation14], %s66
        %154 = vst [vmem:[%s153] sm:$0x1] %v149
        %155 = xla_tuple %152, %154
        %156 = vxpose.xlu0.b32.start [1/16] %v149, 128
        %157 = vxpose.xlu0.b32.cont [2/16] 0.0, 128
        %158 = vxpose.xlu0.b32.cont [3/16] 0.0, 128
        %159 = vxpose.xlu0.b32.cont [4/16] 0.0, 128
        %160 = vxpose.xlu0.b32.cont [5/16] 0.0, 128
        %161 = vxpose.xlu0.b32.cont [6/16] 0.0, 128
        %162 = vxpose.xlu0.b32.cont [7/16] 0.0, 128
        %163 = vxpose.xlu0.b32.cont [8/16] 0.0, 128
        %164 = vxpose.xlu0.b32.cont [9/16] 0.0, 128
        %165 = vxpose.xlu0.b32.cont [10/16] 0.0, 128
        %166 = vxpose.xlu0.b32.cont [11/16] 0.0, 128
        %167 = vxpose.xlu0.b32.cont [12/16] 0.0, 128
        %168 = vxpose.xlu0.b32.cont [13/16] 0.0, 128
        %169 = vxpose.xlu0.b32.cont [14/16] 0.0, 128
        %170 = vxpose.xlu0.b32.cont [15/16] 0.0, 128
        %171 = vxpose.xlu0.b32.end [16/16] 0.0, 128
        %v172 = vpop.trf.xlu0
        %v173 = vpop.trf.xlu0
        %v174 = vpop.trf.xlu0
        %v175 = vpop.trf.xlu0
        %v176 = vpop.trf.xlu0
        %v177 = vpop.trf.xlu0
        %v178 = vpop.trf.xlu0
        %v179 = vpop.trf.xlu0
        %v180 = vpop.trf.xlu0
        %v181 = vpop.trf.xlu0
        %v182 = vpop.trf.xlu0
        %v183 = vpop.trf.xlu0
        %v184 = vpop.trf.xlu0
        %v185 = vpop.trf.xlu0
        %v186 = vpop.trf.xlu0
        %v187 = vpop.trf.xlu0
        %s188 = vtos %v172
        %s189 = sshrl.u32 %s188, 3
        %p190 = scmp.lt.s32.totalorder %s188, 0
        %s191 = ssub.s32 0, %s188
        %s192 = scalar_select %p190, %s191, %s188
        %s193 = sand.u32 %s192, 7
        %s194 = ssub.s32 0, %s193
        %s195 = scalar_select %p190, %s194, %s193
        %v196 = vlaneseq
        %s197 = smul.u32 %s195, 128
        %v198 = vstv %s197
        %vm200 = vcmp.eq.s32.totalorder %v196, %v198
        %s201 = smul.addr %s189, 8
        %s202 = scalar_lea.vmem [#allocation15], %s201
        %203 = vst.msk [vmem:[%s202] sm:$0xff] %vm200, 2147483648
        %s204 = smul.addr %s189, 8
        %s205 = scalar_lea.vmem [#allocation16], %s204
        %206 = vst.msk [vmem:[%s205] sm:$0xff] %vm200, 2147483647
        %207 = xla_tuple %203, %206
        %v208 = vrot.slane %v172, 1
        %s209 = vtos %v208
        %s210 = sshrl.u32 %s209, 3
        %p211 = scmp.lt.s32.totalorder %s209, 0
        %s212 = ssub.s32 0, %s209
        %s213 = scalar_select %p211, %s212, %s209
        %s214 = sand.u32 %s213, 7
        %s215 = ssub.s32 0, %s214
        %s216 = scalar_select %p211, %s215, %s214
        %v217 = vlaneseq
        %s218 = smul.u32 %s216, 128
        %v219 = vstv %s218
        %v220 = vadd.s32 %v219, 1
        %vm221 = vcmp.eq.s32.totalorder %v217, %v220
        %s222 = smul.addr %s210, 8
        %s223 = scalar_lea.vmem [#allocation15], %s222
        %224 = vst.msk [vmem:[%s223] sm:$0xff] %vm221, 2147483648
        %s225 = smul.addr %s210, 8
        %s226 = scalar_lea.vmem [#allocation16], %s225
        %227 = vst.msk [vmem:[%s226] sm:$0xff] %vm221, 2147483647
        %228 = xla_tuple %224, %227
        %v229 = vrot.slane %v208, 1
        %s230 = vtos %v229
        %s231 = sshrl.u32 %s230, 3
        %p232 = scmp.lt.s32.totalorder %s230, 0
        %s233 = ssub.s32 0, %s230
        %s234 = scalar_select %p232, %s233, %s230
        %s235 = sand.u32 %s234, 7
        %s236 = ssub.s32 0, %s235
        %s237 = scalar_select %p232, %s236, %s235
        %v238 = vlaneseq
        %s239 = smul.u32 %s237, 128
        %v240 = vstv %s239
        %v241 = vadd.s32 %v240, 2
        %vm242 = vcmp.eq.s32.totalorder %v238, %v241
        %s243 = smul.addr %s231, 8
        %s244 = scalar_lea.vmem [#allocation15], %s243
        %245 = vst.msk [vmem:[%s244] sm:$0xff] %vm242, 2147483648
        %s246 = smul.addr %s231, 8
        %s247 = scalar_lea.vmem [#allocation16], %s246
        %248 = vst.msk [vmem:[%s247] sm:$0xff] %vm242, 2147483647
        %249 = xla_tuple %245, %248
        %v250 = vrot.slane %v229, 1
        %s251 = vtos %v250
        %s252 = sshrl.u32 %s251, 3
        %p253 = scmp.lt.s32.totalorder %s251, 0
        %s254 = ssub.s32 0, %s251
        %s255 = scalar_select %p253, %s254, %s251
        %s256 = sand.u32 %s255, 7
        %s257 = ssub.s32 0, %s256
        %s258 = scalar_select %p253, %s257, %s256
        %v259 = vlaneseq
        %s260 = smul.u32 %s258, 128
        %v261 = vstv %s260
        %v262 = vadd.s32 %v261, 3
        %vm263 = vcmp.eq.s32.totalorder %v259, %v262
        %s264 = smul.addr %s252, 8
        %s265 = scalar_lea.vmem [#allocation15], %s264
        %266 = vst.msk [vmem:[%s265] sm:$0xff] %vm263, 2147483648
        %s267 = smul.addr %s252, 8
        %s268 = scalar_lea.vmem [#allocation16], %s267
        %269 = vst.msk [vmem:[%s268] sm:$0xff] %vm263, 2147483647
        %270 = xla_tuple %266, %269
        %v271 = vrot.slane %v250, 1
        %s272 = vtos %v271
        %s273 = sshrl.u32 %s272, 3
        %p274 = scmp.lt.s32.totalorder %s272, 0
        %s275 = ssub.s32 0, %s272
        %s276 = scalar_select %p274, %s275, %s272
        %s277 = sand.u32 %s276, 7
        %s278 = ssub.s32 0, %s277
        %s279 = scalar_select %p274, %s278, %s277
        %v280 = vlaneseq
        %s281 = smul.u32 %s279, 128
        %v282 = vstv %s281
        %v283 = vadd.s32 %v282, 4
        %vm284 = vcmp.eq.s32.totalorder %v280, %v283
        %s285 = smul.addr %s273, 8
        %s286 = scalar_lea.vmem [#allocation15], %s285
        %287 = vst.msk [vmem:[%s286] sm:$0xff] %vm284, 2147483648
        %s288 = smul.addr %s273, 8
        %s289 = scalar_lea.vmem [#allocation16], %s288
        %290 = vst.msk [vmem:[%s289] sm:$0xff] %vm284, 2147483647
        %291 = xla_tuple %287, %290
        %v292 = vrot.slane %v271, 1
        %s293 = vtos %v292
        %s294 = sshrl.u32 %s293, 3
        %p295 = scmp.lt.s32.totalorder %s293, 0
        %s296 = ssub.s32 0, %s293
        %s297 = scalar_select %p295, %s296, %s293
        %s298 = sand.u32 %s297, 7
        %s299 = ssub.s32 0, %s298
        %s300 = scalar_select %p295, %s299, %s298
        %v301 = vlaneseq
        %s302 = smul.u32 %s300, 128
        %v303 = vstv %s302
        %v304 = vadd.s32 %v303, 5
        %vm305 = vcmp.eq.s32.totalorder %v301, %v304
        %s306 = smul.addr %s294, 8
        %s307 = scalar_lea.vmem [#allocation15], %s306
        %308 = vst.msk [vmem:[%s307] sm:$0xff] %vm305, 2147483648
        %s309 = smul.addr %s294, 8
        %s310 = scalar_lea.vmem [#allocation16], %s309
        %311 = vst.msk [vmem:[%s310] sm:$0xff] %vm305, 2147483647
        %312 = xla_tuple %308, %311
        %v313 = vrot.slane %v292, 1
        %s314 = vtos %v313
        %s315 = sshrl.u32 %s314, 3
        %p316 = scmp.lt.s32.totalorder %s314, 0
        %s317 = ssub.s32 0, %s314
        %s318 = scalar_select %p316, %s317, %s314
        %s319 = sand.u32 %s318, 7
        %s320 = ssub.s32 0, %s319
        %s321 = scalar_select %p316, %s320, %s319
        %v322 = vlaneseq
        %s323 = smul.u32 %s321, 128
        %v324 = vstv %s323
        %v325 = vadd.s32 %v324, 6
        %vm326 = vcmp.eq.s32.totalorder %v322, %v325
        %s327 = smul.addr %s315, 8
        %s328 = scalar_lea.vmem [#allocation15], %s327
        %329 = vst.msk [vmem:[%s328] sm:$0xff] %vm326, 2147483648
        %s330 = smul.addr %s315, 8
        %s331 = scalar_lea.vmem [#allocation16], %s330
        %332 = vst.msk [vmem:[%s331] sm:$0xff] %vm326, 2147483647
        %333 = xla_tuple %329, %332
        %v334 = vrot.slane %v313, 1
        %s335 = vtos %v334
        %s336 = sshrl.u32 %s335, 3
        %p337 = scmp.lt.s32.totalorder %s335, 0
        %s338 = ssub.s32 0, %s335
        %s339 = scalar_select %p337, %s338, %s335
        %s340 = sand.u32 %s339, 7
        %s341 = ssub.s32 0, %s340
        %s342 = scalar_select %p337, %s341, %s340
        %v343 = vlaneseq
        %s344 = smul.u32 %s342, 128
        %v345 = vstv %s344
        %v346 = vadd.s32 %v345, 7
        %vm347 = vcmp.eq.s32.totalorder %v343, %v346
        %s348 = smul.addr %s336, 8
        %s349 = scalar_lea.vmem [#allocation15], %s348
        %350 = vst.msk [vmem:[%s349] sm:$0xff] %vm347, 2147483648
        %s351 = smul.addr %s336, 8
        %s352 = scalar_lea.vmem [#allocation16], %s351
        %353 = vst.msk [vmem:[%s352] sm:$0xff] %vm347, 2147483647
        %354 = xla_tuple %350, %353
        %v355 = vrot.slane %v334, 1
        %s356 = vtos %v173
        %s357 = sshrl.u32 %s356, 3
        %p358 = scmp.lt.s32.totalorder %s356, 0
        %s359 = ssub.s32 0, %s356
        %s360 = scalar_select %p358, %s359, %s356
        %s361 = sand.u32 %s360, 7
        %s362 = ssub.s32 0, %s361
        %s363 = scalar_select %p358, %s362, %s361
        %v364 = vlaneseq
        %s365 = smul.u32 %s363, 128
        %v366 = vstv %s365
        %v367 = vadd.s32 %v366, 8
        %vm368 = vcmp.eq.s32.totalorder %v364, %v367
        %s369 = smul.addr %s357, 8
        %s370 = scalar_lea.vmem [#allocation15], %s369
        %371 = vst.msk [vmem:[%s370] sm:$0xff] %vm368, 2147483648
        %s372 = smul.addr %s357, 8
        %s373 = scalar_lea.vmem [#allocation16], %s372
        %374 = vst.msk [vmem:[%s373] sm:$0xff] %vm368, 2147483647
        %375 = xla_tuple %371, %374
        %v376 = vrot.slane %v173, 1
        %s377 = vtos %v376
        %s378 = sshrl.u32 %s377, 3
        %p379 = scmp.lt.s32.totalorder %s377, 0
        %s380 = ssub.s32 0, %s377
        %s381 = scalar_select %p379, %s380, %s377
        %s382 = sand.u32 %s381, 7
        %s383 = ssub.s32 0, %s382
        %s384 = scalar_select %p379, %s383, %s382
        %v385 = vlaneseq
        %s386 = smul.u32 %s384, 128
        %v387 = vstv %s386
        %v388 = vadd.s32 %v387, 9
        %vm389 = vcmp.eq.s32.totalorder %v385, %v388
        %s390 = smul.addr %s378, 8
        %s391 = scalar_lea.vmem [#allocation15], %s390
        %392 = vst.msk [vmem:[%s391] sm:$0xff] %vm389, 2147483648
        %s393 = smul.addr %s378, 8
        %s394 = scalar_lea.vmem [#allocation16], %s393
        %395 = vst.msk [vmem:[%s394] sm:$0xff] %vm389, 2147483647
        %396 = xla_tuple %392, %395
        %v397 = vrot.slane %v376, 1
        %s398 = vtos %v397
        %s399 = sshrl.u32 %s398, 3
        %p400 = scmp.lt.s32.totalorder %s398, 0
        %s401 = ssub.s32 0, %s398
        %s402 = scalar_select %p400, %s401, %s398
        %s403 = sand.u32 %s402, 7
        %s404 = ssub.s32 0, %s403
        %s405 = scalar_select %p400, %s404, %s403
        %v406 = vlaneseq
        %s407 = smul.u32 %s405, 128
        %v408 = vstv %s407
        %v409 = vadd.s32 %v408, 10
        %vm410 = vcmp.eq.s32.totalorder %v406, %v409
        %s411 = smul.addr %s399, 8
        %s412 = scalar_lea.vmem [#allocation15], %s411
        %413 = vst.msk [vmem:[%s412] sm:$0xff] %vm410, 2147483648
        %s414 = smul.addr %s399, 8
        %s415 = scalar_lea.vmem [#allocation16], %s414
        %416 = vst.msk [vmem:[%s415] sm:$0xff] %vm410, 2147483647
        %417 = xla_tuple %413, %416
        %v418 = vrot.slane %v397, 1
        %s419 = vtos %v418
        %s420 = sshrl.u32 %s419, 3
        %p421 = scmp.lt.s32.totalorder %s419, 0
        %s422 = ssub.s32 0, %s419
        %s423 = scalar_select %p421, %s422, %s419
        %s424 = sand.u32 %s423, 7
        %s425 = ssub.s32 0, %s424
        %s426 = scalar_select %p421, %s425, %s424
        %v427 = vlaneseq
        %s428 = smul.u32 %s426, 128
        %v429 = vstv %s428
        %v430 = vadd.s32 %v429, 11
        %vm431 = vcmp.eq.s32.totalorder %v427, %v430
        %s432 = smul.addr %s420, 8
        %s433 = scalar_lea.vmem [#allocation15], %s432
        %434 = vst.msk [vmem:[%s433] sm:$0xff] %vm431, 2147483648
        %s435 = smul.addr %s420, 8
        %s436 = scalar_lea.vmem [#allocation16], %s435
        %437 = vst.msk [vmem:[%s436] sm:$0xff] %vm431, 2147483647
        %438 = xla_tuple %434, %437
        %v439 = vrot.slane %v418, 1
        %s440 = vtos %v439
        %s441 = sshrl.u32 %s440, 3
        %p442 = scmp.lt.s32.totalorder %s440, 0
        %s443 = ssub.s32 0, %s440
        %s444 = scalar_select %p442, %s443, %s440
        %s445 = sand.u32 %s444, 7
        %s446 = ssub.s32 0, %s445
        %s447 = scalar_select %p442, %s446, %s445
        %v448 = vlaneseq
        %s449 = smul.u32 %s447, 128
        %v450 = vstv %s449
        %v451 = vadd.s32 %v450, 12
        %vm452 = vcmp.eq.s32.totalorder %v448, %v451
        %s453 = smul.addr %s441, 8
        %s454 = scalar_lea.vmem [#allocation15], %s453
        %455 = vst.msk [vmem:[%s454] sm:$0xff] %vm452, 2147483648
        %s456 = smul.addr %s441, 8
        %s457 = scalar_lea.vmem [#allocation16], %s456
        %458 = vst.msk [vmem:[%s457] sm:$0xff] %vm452, 2147483647
        %459 = xla_tuple %455, %458
        %v460 = vrot.slane %v439, 1
        %s461 = vtos %v460
        %s462 = sshrl.u32 %s461, 3
        %p463 = scmp.lt.s32.totalorder %s461, 0
        %s464 = ssub.s32 0, %s461
        %s465 = scalar_select %p463, %s464, %s461
        %s466 = sand.u32 %s465, 7
        %s467 = ssub.s32 0, %s466
        %s468 = scalar_select %p463, %s467, %s466
        %v469 = vlaneseq
        %s470 = smul.u32 %s468, 128
        %v471 = vstv %s470
        %v472 = vadd.s32 %v471, 13
        %vm473 = vcmp.eq.s32.totalorder %v469, %v472
        %s474 = smul.addr %s462, 8
        %s475 = scalar_lea.vmem [#allocation15], %s474
        %476 = vst.msk [vmem:[%s475] sm:$0xff] %vm473, 2147483648
        %s477 = smul.addr %s462, 8
        %s478 = scalar_lea.vmem [#allocation16], %s477
        %479 = vst.msk [vmem:[%s478] sm:$0xff] %vm473, 2147483647
        %480 = xla_tuple %476, %479
        %v481 = vrot.slane %v460, 1
        %s482 = vtos %v481
        %s483 = sshrl.u32 %s482, 3
        %p484 = scmp.lt.s32.totalorder %s482, 0
        %s485 = ssub.s32 0, %s482
        %s486 = scalar_select %p484, %s485, %s482
        %s487 = sand.u32 %s486, 7
        %s488 = ssub.s32 0, %s487
        %s489 = scalar_select %p484, %s488, %s487
        %v490 = vlaneseq
        %s491 = smul.u32 %s489, 128
        %v492 = vstv %s491
        %v493 = vadd.s32 %v492, 14
        %vm494 = vcmp.eq.s32.totalorder %v490, %v493
        %s495 = smul.addr %s483, 8
        %s496 = scalar_lea.vmem [#allocation15], %s495
        %497 = vst.msk [vmem:[%s496] sm:$0xff] %vm494, 2147483648
        %s498 = smul.addr %s483, 8
        %s499 = scalar_lea.vmem [#allocation16], %s498
        %500 = vst.msk [vmem:[%s499] sm:$0xff] %vm494, 2147483647
        %501 = xla_tuple %497, %500
        %v502 = vrot.slane %v481, 1
        %s503 = vtos %v502
        %s504 = sshrl.u32 %s503, 3
        %p505 = scmp.lt.s32.totalorder %s503, 0
        %s506 = ssub.s32 0, %s503
        %s507 = scalar_select %p505, %s506, %s503
        %s508 = sand.u32 %s507, 7
        %s509 = ssub.s32 0, %s508
        %s510 = scalar_select %p505, %s509, %s508
        %v511 = vlaneseq
        %s512 = smul.u32 %s510, 128
        %v513 = vstv %s512
        %v514 = vadd.s32 %v513, 15
        %vm515 = vcmp.eq.s32.totalorder %v511, %v514
        %s516 = smul.addr %s504, 8
        %s517 = scalar_lea.vmem [#allocation15], %s516
        %518 = vst.msk [vmem:[%s517] sm:$0xff] %vm515, 2147483648
        %s519 = smul.addr %s504, 8
        %s520 = scalar_lea.vmem [#allocation16], %s519
        %521 = vst.msk [vmem:[%s520] sm:$0xff] %vm515, 2147483647
        %522 = xla_tuple %518, %521
        %v523 = vrot.slane %v502, 1
        %s524 = vtos %v174
        %s525 = sshrl.u32 %s524, 3
        %p526 = scmp.lt.s32.totalorder %s524, 0
        %s527 = ssub.s32 0, %s524
        %s528 = scalar_select %p526, %s527, %s524
        %s529 = sand.u32 %s528, 7
        %s530 = ssub.s32 0, %s529
        %s531 = scalar_select %p526, %s530, %s529
        %v532 = vlaneseq
        %s533 = smul.u32 %s531, 128
        %v534 = vstv %s533
        %v535 = vadd.s32 %v534, 16
        %vm536 = vcmp.eq.s32.totalorder %v532, %v535
        %s537 = smul.addr %s525, 8
        %s538 = scalar_lea.vmem [#allocation15], %s537
        %539 = vst.msk [vmem:[%s538] sm:$0xff] %vm536, 2147483648
        %s540 = smul.addr %s525, 8
        %s541 = scalar_lea.vmem [#allocation16], %s540
        %542 = vst.msk [vmem:[%s541] sm:$0xff] %vm536, 2147483647
        %543 = xla_tuple %539, %542
        %v544 = vrot.slane %v174, 1
        %s545 = vtos %v544
        %s546 = sshrl.u32 %s545, 3
        %p547 = scmp.lt.s32.totalorder %s545, 0
        %s548 = ssub.s32 0, %s545
        %s549 = scalar_select %p547, %s548, %s545
        %s550 = sand.u32 %s549, 7
        %s551 = ssub.s32 0, %s550
        %s552 = scalar_select %p547, %s551, %s550
        %v553 = vlaneseq
        %s554 = smul.u32 %s552, 128
        %v555 = vstv %s554
        %v556 = vadd.s32 %v555, 17
        %vm557 = vcmp.eq.s32.totalorder %v553, %v556
        %s558 = smul.addr %s546, 8
        %s559 = scalar_lea.vmem [#allocation15], %s558
        %560 = vst.msk [vmem:[%s559] sm:$0xff] %vm557, 2147483648
        %s561 = smul.addr %s546, 8
        %s562 = scalar_lea.vmem [#allocation16], %s561
        %563 = vst.msk [vmem:[%s562] sm:$0xff] %vm557, 2147483647
        %564 = xla_tuple %560, %563
        %v565 = vrot.slane %v544, 1
        %s566 = vtos %v565
        %s567 = sshrl.u32 %s566, 3
        %p568 = scmp.lt.s32.totalorder %s566, 0
        %s569 = ssub.s32 0, %s566
        %s570 = scalar_select %p568, %s569, %s566
        %s571 = sand.u32 %s570, 7
        %s572 = ssub.s32 0, %s571
        %s573 = scalar_select %p568, %s572, %s571
        %v574 = vlaneseq
        %s575 = smul.u32 %s573, 128
        %v576 = vstv %s575
        %v577 = vadd.s32 %v576, 18
        %vm578 = vcmp.eq.s32.totalorder %v574, %v577
        %s579 = smul.addr %s567, 8
        %s580 = scalar_lea.vmem [#allocation15], %s579
        %581 = vst.msk [vmem:[%s580] sm:$0xff] %vm578, 2147483648
        %s582 = smul.addr %s567, 8
        %s583 = scalar_lea.vmem [#allocation16], %s582
        %584 = vst.msk [vmem:[%s583] sm:$0xff] %vm578, 2147483647
        %585 = xla_tuple %581, %584
        %v586 = vrot.slane %v565, 1
        %s587 = vtos %v586
        %s588 = sshrl.u32 %s587, 3
        %p589 = scmp.lt.s32.totalorder %s587, 0
        %s590 = ssub.s32 0, %s587
        %s591 = scalar_select %p589, %s590, %s587
        %s592 = sand.u32 %s591, 7
        %s593 = ssub.s32 0, %s592
        %s594 = scalar_select %p589, %s593, %s592
        %v595 = vlaneseq
        %s596 = smul.u32 %s594, 128
        %v597 = vstv %s596
        %v598 = vadd.s32 %v597, 19
        %vm599 = vcmp.eq.s32.totalorder %v595, %v598
        %s600 = smul.addr %s588, 8
        %s601 = scalar_lea.vmem [#allocation15], %s600
        %602 = vst.msk [vmem:[%s601] sm:$0xff] %vm599, 2147483648
        %s603 = smul.addr %s588, 8
        %s604 = scalar_lea.vmem [#allocation16], %s603
        %605 = vst.msk [vmem:[%s604] sm:$0xff] %vm599, 2147483647
        %606 = xla_tuple %602, %605
        %v607 = vrot.slane %v586, 1
        %s608 = vtos %v607
        %s609 = sshrl.u32 %s608, 3
        %p610 = scmp.lt.s32.totalorder %s608, 0
        %s611 = ssub.s32 0, %s608
        %s612 = scalar_select %p610, %s611, %s608
        %s613 = sand.u32 %s612, 7
        %s614 = ssub.s32 0, %s613
        %s615 = scalar_select %p610, %s614, %s613
        %v616 = vlaneseq
        %s617 = smul.u32 %s615, 128
        %v618 = vstv %s617
        %v619 = vadd.s32 %v618, 20
        %vm620 = vcmp.eq.s32.totalorder %v616, %v619
        %s621 = smul.addr %s609, 8
        %s622 = scalar_lea.vmem [#allocation15], %s621
        %623 = vst.msk [vmem:[%s622] sm:$0xff] %vm620, 2147483648
        %s624 = smul.addr %s609, 8
        %s625 = scalar_lea.vmem [#allocation16], %s624
        %626 = vst.msk [vmem:[%s625] sm:$0xff] %vm620, 2147483647
        %627 = xla_tuple %623, %626
        %v628 = vrot.slane %v607, 1
        %s629 = vtos %v628
        %s630 = sshrl.u32 %s629, 3
        %p631 = scmp.lt.s32.totalorder %s629, 0
        %s632 = ssub.s32 0, %s629
        %s633 = scalar_select %p631, %s632, %s629
        %s634 = sand.u32 %s633, 7
        %s635 = ssub.s32 0, %s634
        %s636 = scalar_select %p631, %s635, %s634
        %v637 = vlaneseq
        %s638 = smul.u32 %s636, 128
        %v639 = vstv %s638
        %v640 = vadd.s32 %v639, 21
        %vm641 = vcmp.eq.s32.totalorder %v637, %v640
        %s642 = smul.addr %s630, 8
        %s643 = scalar_lea.vmem [#allocation15], %s642
        %644 = vst.msk [vmem:[%s643] sm:$0xff] %vm641, 2147483648
        %s645 = smul.addr %s630, 8
        %s646 = scalar_lea.vmem [#allocation16], %s645
        %647 = vst.msk [vmem:[%s646] sm:$0xff] %vm641, 2147483647
        %648 = xla_tuple %644, %647
        %v649 = vrot.slane %v628, 1
        %s650 = vtos %v649
        %s651 = sshrl.u32 %s650, 3
        %p652 = scmp.lt.s32.totalorder %s650, 0
        %s653 = ssub.s32 0, %s650
        %s654 = scalar_select %p652, %s653, %s650
        %s655 = sand.u32 %s654, 7
        %s656 = ssub.s32 0, %s655
        %s657 = scalar_select %p652, %s656, %s655
        %v658 = vlaneseq
        %s659 = smul.u32 %s657, 128
        %v660 = vstv %s659
        %v661 = vadd.s32 %v660, 22
        %vm662 = vcmp.eq.s32.totalorder %v658, %v661
        %s663 = smul.addr %s651, 8
        %s664 = scalar_lea.vmem [#allocation15], %s663
        %665 = vst.msk [vmem:[%s664] sm:$0xff] %vm662, 2147483648
        %s666 = smul.addr %s651, 8
        %s667 = scalar_lea.vmem [#allocation16], %s666
        %668 = vst.msk [vmem:[%s667] sm:$0xff] %vm662, 2147483647
        %669 = xla_tuple %665, %668
        %v670 = vrot.slane %v649, 1
        %s671 = vtos %v670
        %s672 = sshrl.u32 %s671, 3
        %p673 = scmp.lt.s32.totalorder %s671, 0
        %s674 = ssub.s32 0, %s671
        %s675 = scalar_select %p673, %s674, %s671
        %s676 = sand.u32 %s675, 7
        %s677 = ssub.s32 0, %s676
        %s678 = scalar_select %p673, %s677, %s676
        %v679 = vlaneseq
        %s680 = smul.u32 %s678, 128
        %v681 = vstv %s680
        %v682 = vadd.s32 %v681, 23
        %vm683 = vcmp.eq.s32.totalorder %v679, %v682
        %s684 = smul.addr %s672, 8
        %s685 = scalar_lea.vmem [#allocation15], %s684
        %686 = vst.msk [vmem:[%s685] sm:$0xff] %vm683, 2147483648
        %s687 = smul.addr %s672, 8
        %s688 = scalar_lea.vmem [#allocation16], %s687
        %689 = vst.msk [vmem:[%s688] sm:$0xff] %vm683, 2147483647
        %690 = xla_tuple %686, %689
        %v691 = vrot.slane %v670, 1
        %s692 = vtos %v175
        %s693 = sshrl.u32 %s692, 3
        %p694 = scmp.lt.s32.totalorder %s692, 0
        %s695 = ssub.s32 0, %s692
        %s696 = scalar_select %p694, %s695, %s692
        %s697 = sand.u32 %s696, 7
        %s698 = ssub.s32 0, %s697
        %s699 = scalar_select %p694, %s698, %s697
        %v700 = vlaneseq
        %s701 = smul.u32 %s699, 128
        %v702 = vstv %s701
        %v703 = vadd.s32 %v702, 24
        %vm704 = vcmp.eq.s32.totalorder %v700, %v703
        %s705 = smul.addr %s693, 8
        %s706 = scalar_lea.vmem [#allocation15], %s705
        %707 = vst.msk [vmem:[%s706] sm:$0xff] %vm704, 2147483648
        %s708 = smul.addr %s693, 8
        %s709 = scalar_lea.vmem [#allocation16], %s708
        %710 = vst.msk [vmem:[%s709] sm:$0xff] %vm704, 2147483647
        %711 = xla_tuple %707, %710
        %v712 = vrot.slane %v175, 1
        %s713 = vtos %v712
        %s714 = sshrl.u32 %s713, 3
        %p715 = scmp.lt.s32.totalorder %s713, 0
        %s716 = ssub.s32 0, %s713
        %s717 = scalar_select %p715, %s716, %s713
        %s718 = sand.u32 %s717, 7
        %s719 = ssub.s32 0, %s718
        %s720 = scalar_select %p715, %s719, %s718
        %v721 = vlaneseq
        %s722 = smul.u32 %s720, 128
        %v723 = vstv %s722
        %v724 = vadd.s32 %v723, 25
        %vm725 = vcmp.eq.s32.totalorder %v721, %v724
        %s726 = smul.addr %s714, 8
        %s727 = scalar_lea.vmem [#allocation15], %s726
        %728 = vst.msk [vmem:[%s727] sm:$0xff] %vm725, 2147483648
        %s729 = smul.addr %s714, 8
        %s730 = scalar_lea.vmem [#allocation16], %s729
        %731 = vst.msk [vmem:[%s730] sm:$0xff] %vm725, 2147483647
        %732 = xla_tuple %728, %731
        %v733 = vrot.slane %v712, 1
        %s734 = vtos %v733
        %s735 = sshrl.u32 %s734, 3
        %p736 = scmp.lt.s32.totalorder %s734, 0
        %s737 = ssub.s32 0, %s734
        %s738 = scalar_select %p736, %s737, %s734
        %s739 = sand.u32 %s738, 7
        %s740 = ssub.s32 0, %s739
        %s741 = scalar_select %p736, %s740, %s739
        %v742 = vlaneseq
        %s743 = smul.u32 %s741, 128
        %v744 = vstv %s743
        %v745 = vadd.s32 %v744, 26
        %vm746 = vcmp.eq.s32.totalorder %v742, %v745
        %s747 = smul.addr %s735, 8
        %s748 = scalar_lea.vmem [#allocation15], %s747
        %749 = vst.msk [vmem:[%s748] sm:$0xff] %vm746, 2147483648
        %s750 = smul.addr %s735, 8
        %s751 = scalar_lea.vmem [#allocation16], %s750
        %752 = vst.msk [vmem:[%s751] sm:$0xff] %vm746, 2147483647
        %753 = xla_tuple %749, %752
        %v754 = vrot.slane %v733, 1
        %s755 = vtos %v754
        %s756 = sshrl.u32 %s755, 3
        %p757 = scmp.lt.s32.totalorder %s755, 0
        %s758 = ssub.s32 0, %s755
        %s759 = scalar_select %p757, %s758, %s755
        %s760 = sand.u32 %s759, 7
        %s761 = ssub.s32 0, %s760
        %s762 = scalar_select %p757, %s761, %s760
        %v763 = vlaneseq
        %s764 = smul.u32 %s762, 128
        %v765 = vstv %s764
        %v766 = vadd.s32 %v765, 27
        %vm767 = vcmp.eq.s32.totalorder %v763, %v766
        %s768 = smul.addr %s756, 8
        %s769 = scalar_lea.vmem [#allocation15], %s768
        %770 = vst.msk [vmem:[%s769] sm:$0xff] %vm767, 2147483648
        %s771 = smul.addr %s756, 8
        %s772 = scalar_lea.vmem [#allocation16], %s771
        %773 = vst.msk [vmem:[%s772] sm:$0xff] %vm767, 2147483647
        %774 = xla_tuple %770, %773
        %v775 = vrot.slane %v754, 1
        %s776 = vtos %v775
        %s777 = sshrl.u32 %s776, 3
        %p778 = scmp.lt.s32.totalorder %s776, 0
        %s779 = ssub.s32 0, %s776
        %s780 = scalar_select %p778, %s779, %s776
        %s781 = sand.u32 %s780, 7
        %s782 = ssub.s32 0, %s781
        %s783 = scalar_select %p778, %s782, %s781
        %v784 = vlaneseq
        %s785 = smul.u32 %s783, 128
        %v786 = vstv %s785
        %v787 = vadd.s32 %v786, 28
        %vm788 = vcmp.eq.s32.totalorder %v784, %v787
        %s789 = smul.addr %s777, 8
        %s790 = scalar_lea.vmem [#allocation15], %s789
        %791 = vst.msk [vmem:[%s790] sm:$0xff] %vm788, 2147483648
        %s792 = smul.addr %s777, 8
        %s793 = scalar_lea.vmem [#allocation16], %s792
        %794 = vst.msk [vmem:[%s793] sm:$0xff] %vm788, 2147483647
        %795 = xla_tuple %791, %794
        %v796 = vrot.slane %v775, 1
        %s797 = vtos %v796
        %s798 = sshrl.u32 %s797, 3
        %p799 = scmp.lt.s32.totalorder %s797, 0
        %s800 = ssub.s32 0, %s797
        %s801 = scalar_select %p799, %s800, %s797
        %s802 = sand.u32 %s801, 7
        %s803 = ssub.s32 0, %s802
        %s804 = scalar_select %p799, %s803, %s802
        %v805 = vlaneseq
        %s806 = smul.u32 %s804, 128
        %v807 = vstv %s806
        %v808 = vadd.s32 %v807, 29
        %vm809 = vcmp.eq.s32.totalorder %v805, %v808
        %s810 = smul.addr %s798, 8
        %s811 = scalar_lea.vmem [#allocation15], %s810
        %812 = vst.msk [vmem:[%s811] sm:$0xff] %vm809, 2147483648
        %s813 = smul.addr %s798, 8
        %s814 = scalar_lea.vmem [#allocation16], %s813
        %815 = vst.msk [vmem:[%s814] sm:$0xff] %vm809, 2147483647
        %816 = xla_tuple %812, %815
        %v817 = vrot.slane %v796, 1
        %s818 = vtos %v817
        %s819 = sshrl.u32 %s818, 3
        %p820 = scmp.lt.s32.totalorder %s818, 0
        %s821 = ssub.s32 0, %s818
        %s822 = scalar_select %p820, %s821, %s818
        %s823 = sand.u32 %s822, 7
        %s824 = ssub.s32 0, %s823
        %s825 = scalar_select %p820, %s824, %s823
        %v826 = vlaneseq
        %s827 = smul.u32 %s825, 128
        %v828 = vstv %s827
        %v829 = vadd.s32 %v828, 30
        %vm830 = vcmp.eq.s32.totalorder %v826, %v829
        %s831 = smul.addr %s819, 8
        %s832 = scalar_lea.vmem [#allocation15], %s831
        %833 = vst.msk [vmem:[%s832] sm:$0xff] %vm830, 2147483648
        %s834 = smul.addr %s819, 8
        %s835 = scalar_lea.vmem [#allocation16], %s834
        %836 = vst.msk [vmem:[%s835] sm:$0xff] %vm830, 2147483647
        %837 = xla_tuple %833, %836
        %v838 = vrot.slane %v817, 1
        %s839 = vtos %v838
        %s840 = sshrl.u32 %s839, 3
        %p841 = scmp.lt.s32.totalorder %s839, 0
        %s842 = ssub.s32 0, %s839
        %s843 = scalar_select %p841, %s842, %s839
        %s844 = sand.u32 %s843, 7
        %s845 = ssub.s32 0, %s844
        %s846 = scalar_select %p841, %s845, %s844
        %v847 = vlaneseq
        %s848 = smul.u32 %s846, 128
        %v849 = vstv %s848
        %v850 = vadd.s32 %v849, 31
        %vm851 = vcmp.eq.s32.totalorder %v847, %v850
        %s852 = smul.addr %s840, 8
        %s853 = scalar_lea.vmem [#allocation15], %s852
        %854 = vst.msk [vmem:[%s853] sm:$0xff] %vm851, 2147483648
        %s855 = smul.addr %s840, 8
        %s856 = scalar_lea.vmem [#allocation16], %s855
        %857 = vst.msk [vmem:[%s856] sm:$0xff] %vm851, 2147483647
        %858 = xla_tuple %854, %857
        %v859 = vrot.slane %v838, 1
        %s860 = vtos %v176
        %s861 = sshrl.u32 %s860, 3
        %p862 = scmp.lt.s32.totalorder %s860, 0
        %s863 = ssub.s32 0, %s860
        %s864 = scalar_select %p862, %s863, %s860
        %s865 = sand.u32 %s864, 7
        %s866 = ssub.s32 0, %s865
        %s867 = scalar_select %p862, %s866, %s865
        %v868 = vlaneseq
        %s869 = smul.u32 %s867, 128
        %v870 = vstv %s869
        %v871 = vadd.s32 %v870, 32
        %vm872 = vcmp.eq.s32.totalorder %v868, %v871
        %s873 = smul.addr %s861, 8
        %s874 = scalar_lea.vmem [#allocation15], %s873
        %875 = vst.msk [vmem:[%s874] sm:$0xff] %vm872, 2147483648
        %s876 = smul.addr %s861, 8
        %s877 = scalar_lea.vmem [#allocation16], %s876
        %878 = vst.msk [vmem:[%s877] sm:$0xff] %vm872, 2147483647
        %879 = xla_tuple %875, %878
        %v880 = vrot.slane %v176, 1
        %s881 = vtos %v880
        %s882 = sshrl.u32 %s881, 3
        %p883 = scmp.lt.s32.totalorder %s881, 0
        %s884 = ssub.s32 0, %s881
        %s885 = scalar_select %p883, %s884, %s881
        %s886 = sand.u32 %s885, 7
        %s887 = ssub.s32 0, %s886
        %s888 = scalar_select %p883, %s887, %s886
        %v889 = vlaneseq
        %s890 = smul.u32 %s888, 128
        %v891 = vstv %s890
        %v892 = vadd.s32 %v891, 33
        %vm893 = vcmp.eq.s32.totalorder %v889, %v892
        %s894 = smul.addr %s882, 8
        %s895 = scalar_lea.vmem [#allocation15], %s894
        %896 = vst.msk [vmem:[%s895] sm:$0xff] %vm893, 2147483648
        %s897 = smul.addr %s882, 8
        %s898 = scalar_lea.vmem [#allocation16], %s897
        %899 = vst.msk [vmem:[%s898] sm:$0xff] %vm893, 2147483647
        %900 = xla_tuple %896, %899
        %v901 = vrot.slane %v880, 1
        %s902 = vtos %v901
        %s903 = sshrl.u32 %s902, 3
        %p904 = scmp.lt.s32.totalorder %s902, 0
        %s905 = ssub.s32 0, %s902
        %s906 = scalar_select %p904, %s905, %s902
        %s907 = sand.u32 %s906, 7
        %s908 = ssub.s32 0, %s907
        %s909 = scalar_select %p904, %s908, %s907
        %v910 = vlaneseq
        %s911 = smul.u32 %s909, 128
        %v912 = vstv %s911
        %v913 = vadd.s32 %v912, 34
        %vm914 = vcmp.eq.s32.totalorder %v910, %v913
        %s915 = smul.addr %s903, 8
        %s916 = scalar_lea.vmem [#allocation15], %s915
        %917 = vst.msk [vmem:[%s916] sm:$0xff] %vm914, 2147483648
        %s918 = smul.addr %s903, 8
        %s919 = scalar_lea.vmem [#allocation16], %s918
        %920 = vst.msk [vmem:[%s919] sm:$0xff] %vm914, 2147483647
        %921 = xla_tuple %917, %920
        %v922 = vrot.slane %v901, 1
        %s923 = vtos %v922
        %s924 = sshrl.u32 %s923, 3
        %p925 = scmp.lt.s32.totalorder %s923, 0
        %s926 = ssub.s32 0, %s923
        %s927 = scalar_select %p925, %s926, %s923
        %s928 = sand.u32 %s927, 7
        %s929 = ssub.s32 0, %s928
        %s930 = scalar_select %p925, %s929, %s928
        %v931 = vlaneseq
        %s932 = smul.u32 %s930, 128
        %v933 = vstv %s932
        %v934 = vadd.s32 %v933, 35
        %vm935 = vcmp.eq.s32.totalorder %v931, %v934
        %s936 = smul.addr %s924, 8
        %s937 = scalar_lea.vmem [#allocation15], %s936
        %938 = vst.msk [vmem:[%s937] sm:$0xff] %vm935, 2147483648
        %s939 = smul.addr %s924, 8
        %s940 = scalar_lea.vmem [#allocation16], %s939
        %941 = vst.msk [vmem:[%s940] sm:$0xff] %vm935, 2147483647
        %942 = xla_tuple %938, %941
        %v943 = vrot.slane %v922, 1
        %s944 = vtos %v943
        %s945 = sshrl.u32 %s944, 3
        %p946 = scmp.lt.s32.totalorder %s944, 0
        %s947 = ssub.s32 0, %s944
        %s948 = scalar_select %p946, %s947, %s944
        %s949 = sand.u32 %s948, 7
        %s950 = ssub.s32 0, %s949
        %s951 = scalar_select %p946, %s950, %s949
        %v952 = vlaneseq
        %s953 = smul.u32 %s951, 128
        %v954 = vstv %s953
        %v955 = vadd.s32 %v954, 36
        %vm956 = vcmp.eq.s32.totalorder %v952, %v955
        %s957 = smul.addr %s945, 8
        %s958 = scalar_lea.vmem [#allocation15], %s957
        %959 = vst.msk [vmem:[%s958] sm:$0xff] %vm956, 2147483648
        %s960 = smul.addr %s945, 8
        %s961 = scalar_lea.vmem [#allocation16], %s960
        %962 = vst.msk [vmem:[%s961] sm:$0xff] %vm956, 2147483647
        %963 = xla_tuple %959, %962
        %v964 = vrot.slane %v943, 1
        %s965 = vtos %v964
        %s966 = sshrl.u32 %s965, 3
        %p967 = scmp.lt.s32.totalorder %s965, 0
        %s968 = ssub.s32 0, %s965
        %s969 = scalar_select %p967, %s968, %s965
        %s970 = sand.u32 %s969, 7
        %s971 = ssub.s32 0, %s970
        %s972 = scalar_select %p967, %s971, %s970
        %v973 = vlaneseq
        %s974 = smul.u32 %s972, 128
        %v975 = vstv %s974
        %v976 = vadd.s32 %v975, 37
        %vm977 = vcmp.eq.s32.totalorder %v973, %v976
        %s978 = smul.addr %s966, 8
        %s979 = scalar_lea.vmem [#allocation15], %s978
        %980 = vst.msk [vmem:[%s979] sm:$0xff] %vm977, 2147483648
        %s981 = smul.addr %s966, 8
        %s982 = scalar_lea.vmem [#allocation16], %s981
        %983 = vst.msk [vmem:[%s982] sm:$0xff] %vm977, 2147483647
        %984 = xla_tuple %980, %983
        %v985 = vrot.slane %v964, 1
        %s986 = vtos %v985
        %s987 = sshrl.u32 %s986, 3
        %p988 = scmp.lt.s32.totalorder %s986, 0
        %s989 = ssub.s32 0, %s986
        %s990 = scalar_select %p988, %s989, %s986
        %s991 = sand.u32 %s990, 7
        %s992 = ssub.s32 0, %s991
        %s993 = scalar_select %p988, %s992, %s991
        %v994 = vlaneseq
        %s995 = smul.u32 %s993, 128
        %v996 = vstv %s995
        %v997 = vadd.s32 %v996, 38
        %vm998 = vcmp.eq.s32.totalorder %v994, %v997
        %s999 = smul.addr %s987, 8
        %s1000 = scalar_lea.vmem [#allocation15], %s999
        %1001 = vst.msk [vmem:[%s1000] sm:$0xff] %vm998, 2147483648
        %s1002 = smul.addr %s987, 8
        %s1003 = scalar_lea.vmem [#allocation16], %s1002
        %1004 = vst.msk [vmem:[%s1003] sm:$0xff] %vm998, 2147483647
        %1005 = xla_tuple %1001, %1004
        %v1006 = vrot.slane %v985, 1
        %s1007 = vtos %v1006
        %s1008 = sshrl.u32 %s1007, 3
        %p1009 = scmp.lt.s32.totalorder %s1007, 0
        %s1010 = ssub.s32 0, %s1007
        %s1011 = scalar_select %p1009, %s1010, %s1007
        %s1012 = sand.u32 %s1011, 7
        %s1013 = ssub.s32 0, %s1012
        %s1014 = scalar_select %p1009, %s1013, %s1012
        %v1015 = vlaneseq
        %s1016 = smul.u32 %s1014, 128
        %v1017 = vstv %s1016
        %v1018 = vadd.s32 %v1017, 39
        %vm1019 = vcmp.eq.s32.totalorder %v1015, %v1018
        %s1020 = smul.addr %s1008, 8
        %s1021 = scalar_lea.vmem [#allocation15], %s1020
        %1022 = vst.msk [vmem:[%s1021] sm:$0xff] %vm1019, 2147483648
        %s1023 = smul.addr %s1008, 8
        %s1024 = scalar_lea.vmem [#allocation16], %s1023
        %1025 = vst.msk [vmem:[%s1024] sm:$0xff] %vm1019, 2147483647
        %1026 = xla_tuple %1022, %1025
        %v1027 = vrot.slane %v1006, 1
        %s1028 = vtos %v177
        %s1029 = sshrl.u32 %s1028, 3
        %p1030 = scmp.lt.s32.totalorder %s1028, 0
        %s1031 = ssub.s32 0, %s1028
        %s1032 = scalar_select %p1030, %s1031, %s1028
        %s1033 = sand.u32 %s1032, 7
        %s1034 = ssub.s32 0, %s1033
        %s1035 = scalar_select %p1030, %s1034, %s1033
        %v1036 = vlaneseq
        %s1037 = smul.u32 %s1035, 128
        %v1038 = vstv %s1037
        %v1039 = vadd.s32 %v1038, 40
        %vm1040 = vcmp.eq.s32.totalorder %v1036, %v1039
        %s1041 = smul.addr %s1029, 8
        %s1042 = scalar_lea.vmem [#allocation15], %s1041
        %1043 = vst.msk [vmem:[%s1042] sm:$0xff] %vm1040, 2147483648
        %s1044 = smul.addr %s1029, 8
        %s1045 = scalar_lea.vmem [#allocation16], %s1044
        %1046 = vst.msk [vmem:[%s1045] sm:$0xff] %vm1040, 2147483647
        %1047 = xla_tuple %1043, %1046
        %v1048 = vrot.slane %v177, 1
        %s1049 = vtos %v1048
        %s1050 = sshrl.u32 %s1049, 3
        %p1051 = scmp.lt.s32.totalorder %s1049, 0
        %s1052 = ssub.s32 0, %s1049
        %s1053 = scalar_select %p1051, %s1052, %s1049
        %s1054 = sand.u32 %s1053, 7
        %s1055 = ssub.s32 0, %s1054
        %s1056 = scalar_select %p1051, %s1055, %s1054
        %v1057 = vlaneseq
        %s1058 = smul.u32 %s1056, 128
        %v1059 = vstv %s1058
        %v1060 = vadd.s32 %v1059, 41
        %vm1061 = vcmp.eq.s32.totalorder %v1057, %v1060
        %s1062 = smul.addr %s1050, 8
        %s1063 = scalar_lea.vmem [#allocation15], %s1062
        %1064 = vst.msk [vmem:[%s1063] sm:$0xff] %vm1061, 2147483648
        %s1065 = smul.addr %s1050, 8
        %s1066 = scalar_lea.vmem [#allocation16], %s1065
        %1067 = vst.msk [vmem:[%s1066] sm:$0xff] %vm1061, 2147483647
        %1068 = xla_tuple %1064, %1067
        %v1069 = vrot.slane %v1048, 1
        %s1070 = vtos %v1069
        %s1071 = sshrl.u32 %s1070, 3
        %p1072 = scmp.lt.s32.totalorder %s1070, 0
        %s1073 = ssub.s32 0, %s1070
        %s1074 = scalar_select %p1072, %s1073, %s1070
        %s1075 = sand.u32 %s1074, 7
        %s1076 = ssub.s32 0, %s1075
        %s1077 = scalar_select %p1072, %s1076, %s1075
        %v1078 = vlaneseq
        %s1079 = smul.u32 %s1077, 128
        %v1080 = vstv %s1079
        %v1081 = vadd.s32 %v1080, 42
        %vm1082 = vcmp.eq.s32.totalorder %v1078, %v1081
        %s1083 = smul.addr %s1071, 8
        %s1084 = scalar_lea.vmem [#allocation15], %s1083
        %1085 = vst.msk [vmem:[%s1084] sm:$0xff] %vm1082, 2147483648
        %s1086 = smul.addr %s1071, 8
        %s1087 = scalar_lea.vmem [#allocation16], %s1086
        %1088 = vst.msk [vmem:[%s1087] sm:$0xff] %vm1082, 2147483647
        %1089 = xla_tuple %1085, %1088
        %v1090 = vrot.slane %v1069, 1
        %s1091 = vtos %v1090
        %s1092 = sshrl.u32 %s1091, 3
        %p1093 = scmp.lt.s32.totalorder %s1091, 0
        %s1094 = ssub.s32 0, %s1091
        %s1095 = scalar_select %p1093, %s1094, %s1091
        %s1096 = sand.u32 %s1095, 7
        %s1097 = ssub.s32 0, %s1096
        %s1098 = scalar_select %p1093, %s1097, %s1096
        %v1099 = vlaneseq
        %s1100 = smul.u32 %s1098, 128
        %v1101 = vstv %s1100
        %v1102 = vadd.s32 %v1101, 43
        %vm1103 = vcmp.eq.s32.totalorder %v1099, %v1102
        %s1104 = smul.addr %s1092, 8
        %s1105 = scalar_lea.vmem [#allocation15], %s1104
        %1106 = vst.msk [vmem:[%s1105] sm:$0xff] %vm1103, 2147483648
        %s1107 = smul.addr %s1092, 8
        %s1108 = scalar_lea.vmem [#allocation16], %s1107
        %1109 = vst.msk [vmem:[%s1108] sm:$0xff] %vm1103, 2147483647
        %1110 = xla_tuple %1106, %1109
        %v1111 = vrot.slane %v1090, 1
        %s1112 = vtos %v1111
        %s1113 = sshrl.u32 %s1112, 3
        %p1114 = scmp.lt.s32.totalorder %s1112, 0
        %s1115 = ssub.s32 0, %s1112
        %s1116 = scalar_select %p1114, %s1115, %s1112
        %s1117 = sand.u32 %s1116, 7
        %s1118 = ssub.s32 0, %s1117
        %s1119 = scalar_select %p1114, %s1118, %s1117
        %v1120 = vlaneseq
        %s1121 = smul.u32 %s1119, 128
        %v1122 = vstv %s1121
        %v1123 = vadd.s32 %v1122, 44
        %vm1124 = vcmp.eq.s32.totalorder %v1120, %v1123
        %s1125 = smul.addr %s1113, 8
        %s1126 = scalar_lea.vmem [#allocation15], %s1125
        %1127 = vst.msk [vmem:[%s1126] sm:$0xff] %vm1124, 2147483648
        %s1128 = smul.addr %s1113, 8
        %s1129 = scalar_lea.vmem [#allocation16], %s1128
        %1130 = vst.msk [vmem:[%s1129] sm:$0xff] %vm1124, 2147483647
        %1131 = xla_tuple %1127, %1130
        %v1132 = vrot.slane %v1111, 1
        %s1133 = vtos %v1132
        %s1134 = sshrl.u32 %s1133, 3
        %p1135 = scmp.lt.s32.totalorder %s1133, 0
        %s1136 = ssub.s32 0, %s1133
        %s1137 = scalar_select %p1135, %s1136, %s1133
        %s1138 = sand.u32 %s1137, 7
        %s1139 = ssub.s32 0, %s1138
        %s1140 = scalar_select %p1135, %s1139, %s1138
        %v1141 = vlaneseq
        %s1142 = smul.u32 %s1140, 128
        %v1143 = vstv %s1142
        %v1144 = vadd.s32 %v1143, 45
        %vm1145 = vcmp.eq.s32.totalorder %v1141, %v1144
        %s1146 = smul.addr %s1134, 8
        %s1147 = scalar_lea.vmem [#allocation15], %s1146
        %1148 = vst.msk [vmem:[%s1147] sm:$0xff] %vm1145, 2147483648
        %s1149 = smul.addr %s1134, 8
        %s1150 = scalar_lea.vmem [#allocation16], %s1149
        %1151 = vst.msk [vmem:[%s1150] sm:$0xff] %vm1145, 2147483647
        %1152 = xla_tuple %1148, %1151
        %v1153 = vrot.slane %v1132, 1
        %s1154 = vtos %v1153
        %s1155 = sshrl.u32 %s1154, 3
        %p1156 = scmp.lt.s32.totalorder %s1154, 0
        %s1157 = ssub.s32 0, %s1154
        %s1158 = scalar_select %p1156, %s1157, %s1154
        %s1159 = sand.u32 %s1158, 7
        %s1160 = ssub.s32 0, %s1159
        %s1161 = scalar_select %p1156, %s1160, %s1159
        %v1162 = vlaneseq
        %s1163 = smul.u32 %s1161, 128
        %v1164 = vstv %s1163
        %v1165 = vadd.s32 %v1164, 46
        %vm1166 = vcmp.eq.s32.totalorder %v1162, %v1165
        %s1167 = smul.addr %s1155, 8
        %s1168 = scalar_lea.vmem [#allocation15], %s1167
        %1169 = vst.msk [vmem:[%s1168] sm:$0xff] %vm1166, 2147483648
        %s1170 = smul.addr %s1155, 8
        %s1171 = scalar_lea.vmem [#allocation16], %s1170
        %1172 = vst.msk [vmem:[%s1171] sm:$0xff] %vm1166, 2147483647
        %1173 = xla_tuple %1169, %1172
        %v1174 = vrot.slane %v1153, 1
        %s1175 = vtos %v1174
        %s1176 = sshrl.u32 %s1175, 3
        %p1177 = scmp.lt.s32.totalorder %s1175, 0
        %s1178 = ssub.s32 0, %s1175
        %s1179 = scalar_select %p1177, %s1178, %s1175
        %s1180 = sand.u32 %s1179, 7
        %s1181 = ssub.s32 0, %s1180
        %s1182 = scalar_select %p1177, %s1181, %s1180
        %v1183 = vlaneseq
        %s1184 = smul.u32 %s1182, 128
        %v1185 = vstv %s1184
        %v1186 = vadd.s32 %v1185, 47
        %vm1187 = vcmp.eq.s32.totalorder %v1183, %v1186
        %s1188 = smul.addr %s1176, 8
        %s1189 = scalar_lea.vmem [#allocation15], %s1188
        %1190 = vst.msk [vmem:[%s1189] sm:$0xff] %vm1187, 2147483648
        %s1191 = smul.addr %s1176, 8
        %s1192 = scalar_lea.vmem [#allocation16], %s1191
        %1193 = vst.msk [vmem:[%s1192] sm:$0xff] %vm1187, 2147483647
        %1194 = xla_tuple %1190, %1193
        %v1195 = vrot.slane %v1174, 1
        %s1196 = vtos %v178
        %s1197 = sshrl.u32 %s1196, 3
        %p1198 = scmp.lt.s32.totalorder %s1196, 0
        %s1199 = ssub.s32 0, %s1196
        %s1200 = scalar_select %p1198, %s1199, %s1196
        %s1201 = sand.u32 %s1200, 7
        %s1202 = ssub.s32 0, %s1201
        %s1203 = scalar_select %p1198, %s1202, %s1201
        %v1204 = vlaneseq
        %s1205 = smul.u32 %s1203, 128
        %v1206 = vstv %s1205
        %v1207 = vadd.s32 %v1206, 48
        %vm1208 = vcmp.eq.s32.totalorder %v1204, %v1207
        %s1209 = smul.addr %s1197, 8
        %s1210 = scalar_lea.vmem [#allocation15], %s1209
        %1211 = vst.msk [vmem:[%s1210] sm:$0xff] %vm1208, 2147483648
        %s1212 = smul.addr %s1197, 8
        %s1213 = scalar_lea.vmem [#allocation16], %s1212
        %1214 = vst.msk [vmem:[%s1213] sm:$0xff] %vm1208, 2147483647
        %1215 = xla_tuple %1211, %1214
        %v1216 = vrot.slane %v178, 1
        %s1217 = vtos %v1216
        %s1218 = sshrl.u32 %s1217, 3
        %p1219 = scmp.lt.s32.totalorder %s1217, 0
        %s1220 = ssub.s32 0, %s1217
        %s1221 = scalar_select %p1219, %s1220, %s1217
        %s1222 = sand.u32 %s1221, 7
        %s1223 = ssub.s32 0, %s1222
        %s1224 = scalar_select %p1219, %s1223, %s1222
        %v1225 = vlaneseq
        %s1226 = smul.u32 %s1224, 128
        %v1227 = vstv %s1226
        %v1228 = vadd.s32 %v1227, 49
        %vm1229 = vcmp.eq.s32.totalorder %v1225, %v1228
        %s1230 = smul.addr %s1218, 8
        %s1231 = scalar_lea.vmem [#allocation15], %s1230
        %1232 = vst.msk [vmem:[%s1231] sm:$0xff] %vm1229, 2147483648
        %s1233 = smul.addr %s1218, 8
        %s1234 = scalar_lea.vmem [#allocation16], %s1233
        %1235 = vst.msk [vmem:[%s1234] sm:$0xff] %vm1229, 2147483647
        %1236 = xla_tuple %1232, %1235
        %v1237 = vrot.slane %v1216, 1
        %s1238 = vtos %v1237
        %s1239 = sshrl.u32 %s1238, 3
        %p1240 = scmp.lt.s32.totalorder %s1238, 0
        %s1241 = ssub.s32 0, %s1238
        %s1242 = scalar_select %p1240, %s1241, %s1238
        %s1243 = sand.u32 %s1242, 7
        %s1244 = ssub.s32 0, %s1243
        %s1245 = scalar_select %p1240, %s1244, %s1243
        %v1246 = vlaneseq
        %s1247 = smul.u32 %s1245, 128
        %v1248 = vstv %s1247
        %v1249 = vadd.s32 %v1248, 50
        %vm1250 = vcmp.eq.s32.totalorder %v1246, %v1249
        %s1251 = smul.addr %s1239, 8
        %s1252 = scalar_lea.vmem [#allocation15], %s1251
        %1253 = vst.msk [vmem:[%s1252] sm:$0xff] %vm1250, 2147483648
        %s1254 = smul.addr %s1239, 8
        %s1255 = scalar_lea.vmem [#allocation16], %s1254
        %1256 = vst.msk [vmem:[%s1255] sm:$0xff] %vm1250, 2147483647
        %1257 = xla_tuple %1253, %1256
        %v1258 = vrot.slane %v1237, 1
        %s1259 = vtos %v1258
        %s1260 = sshrl.u32 %s1259, 3
        %p1261 = scmp.lt.s32.totalorder %s1259, 0
        %s1262 = ssub.s32 0, %s1259
        %s1263 = scalar_select %p1261, %s1262, %s1259
        %s1264 = sand.u32 %s1263, 7
        %s1265 = ssub.s32 0, %s1264
        %s1266 = scalar_select %p1261, %s1265, %s1264
        %v1267 = vlaneseq
        %s1268 = smul.u32 %s1266, 128
        %v1269 = vstv %s1268
        %v1270 = vadd.s32 %v1269, 51
        %vm1271 = vcmp.eq.s32.totalorder %v1267, %v1270
        %s1272 = smul.addr %s1260, 8
        %s1273 = scalar_lea.vmem [#allocation15], %s1272
        %1274 = vst.msk [vmem:[%s1273] sm:$0xff] %vm1271, 2147483648
        %s1275 = smul.addr %s1260, 8
        %s1276 = scalar_lea.vmem [#allocation16], %s1275
        %1277 = vst.msk [vmem:[%s1276] sm:$0xff] %vm1271, 2147483647
        %1278 = xla_tuple %1274, %1277
        %v1279 = vrot.slane %v1258, 1
        %s1280 = vtos %v1279
        %s1281 = sshrl.u32 %s1280, 3
        %p1282 = scmp.lt.s32.totalorder %s1280, 0
        %s1283 = ssub.s32 0, %s1280
        %s1284 = scalar_select %p1282, %s1283, %s1280
        %s1285 = sand.u32 %s1284, 7
        %s1286 = ssub.s32 0, %s1285
        %s1287 = scalar_select %p1282, %s1286, %s1285
        %v1288 = vlaneseq
        %s1289 = smul.u32 %s1287, 128
        %v1290 = vstv %s1289
        %v1291 = vadd.s32 %v1290, 52
        %vm1292 = vcmp.eq.s32.totalorder %v1288, %v1291
        %s1293 = smul.addr %s1281, 8
        %s1294 = scalar_lea.vmem [#allocation15], %s1293
        %1295 = vst.msk [vmem:[%s1294] sm:$0xff] %vm1292, 2147483648
        %s1296 = smul.addr %s1281, 8
        %s1297 = scalar_lea.vmem [#allocation16], %s1296
        %1298 = vst.msk [vmem:[%s1297] sm:$0xff] %vm1292, 2147483647
        %1299 = xla_tuple %1295, %1298
        %v1300 = vrot.slane %v1279, 1
        %s1301 = vtos %v1300
        %s1302 = sshrl.u32 %s1301, 3
        %p1303 = scmp.lt.s32.totalorder %s1301, 0
        %s1304 = ssub.s32 0, %s1301
        %s1305 = scalar_select %p1303, %s1304, %s1301
        %s1306 = sand.u32 %s1305, 7
        %s1307 = ssub.s32 0, %s1306
        %s1308 = scalar_select %p1303, %s1307, %s1306
        %v1309 = vlaneseq
        %s1310 = smul.u32 %s1308, 128
        %v1311 = vstv %s1310
        %v1312 = vadd.s32 %v1311, 53
        %vm1313 = vcmp.eq.s32.totalorder %v1309, %v1312
        %s1314 = smul.addr %s1302, 8
        %s1315 = scalar_lea.vmem [#allocation15], %s1314
        %1316 = vst.msk [vmem:[%s1315] sm:$0xff] %vm1313, 2147483648
        %s1317 = smul.addr %s1302, 8
        %s1318 = scalar_lea.vmem [#allocation16], %s1317
        %1319 = vst.msk [vmem:[%s1318] sm:$0xff] %vm1313, 2147483647
        %1320 = xla_tuple %1316, %1319
        %v1321 = vrot.slane %v1300, 1
        %s1322 = vtos %v1321
        %s1323 = sshrl.u32 %s1322, 3
        %p1324 = scmp.lt.s32.totalorder %s1322, 0
        %s1325 = ssub.s32 0, %s1322
        %s1326 = scalar_select %p1324, %s1325, %s1322
        %s1327 = sand.u32 %s1326, 7
        %s1328 = ssub.s32 0, %s1327
        %s1329 = scalar_select %p1324, %s1328, %s1327
        %v1330 = vlaneseq
        %s1331 = smul.u32 %s1329, 128
        %v1332 = vstv %s1331
        %v1333 = vadd.s32 %v1332, 54
        %vm1334 = vcmp.eq.s32.totalorder %v1330, %v1333
        %s1335 = smul.addr %s1323, 8
        %s1336 = scalar_lea.vmem [#allocation15], %s1335
        %1337 = vst.msk [vmem:[%s1336] sm:$0xff] %vm1334, 2147483648
        %s1338 = smul.addr %s1323, 8
        %s1339 = scalar_lea.vmem [#allocation16], %s1338
        %1340 = vst.msk [vmem:[%s1339] sm:$0xff] %vm1334, 2147483647
        %1341 = xla_tuple %1337, %1340
        %v1342 = vrot.slane %v1321, 1
        %s1343 = vtos %v1342
        %s1344 = sshrl.u32 %s1343, 3
        %p1345 = scmp.lt.s32.totalorder %s1343, 0
        %s1346 = ssub.s32 0, %s1343
        %s1347 = scalar_select %p1345, %s1346, %s1343
        %s1348 = sand.u32 %s1347, 7
        %s1349 = ssub.s32 0, %s1348
        %s1350 = scalar_select %p1345, %s1349, %s1348
        %v1351 = vlaneseq
        %s1352 = smul.u32 %s1350, 128
        %v1353 = vstv %s1352
        %v1354 = vadd.s32 %v1353, 55
        %vm1355 = vcmp.eq.s32.totalorder %v1351, %v1354
        %s1356 = smul.addr %s1344, 8
        %s1357 = scalar_lea.vmem [#allocation15], %s1356
        %1358 = vst.msk [vmem:[%s1357] sm:$0xff] %vm1355, 2147483648
        %s1359 = smul.addr %s1344, 8
        %s1360 = scalar_lea.vmem [#allocation16], %s1359
        %1361 = vst.msk [vmem:[%s1360] sm:$0xff] %vm1355, 2147483647
        %1362 = xla_tuple %1358, %1361
        %v1363 = vrot.slane %v1342, 1
        %s1364 = vtos %v179
        %s1365 = sshrl.u32 %s1364, 3
        %p1366 = scmp.lt.s32.totalorder %s1364, 0
        %s1367 = ssub.s32 0, %s1364
        %s1368 = scalar_select %p1366, %s1367, %s1364
        %s1369 = sand.u32 %s1368, 7
        %s1370 = ssub.s32 0, %s1369
        %s1371 = scalar_select %p1366, %s1370, %s1369
        %v1372 = vlaneseq
        %s1373 = smul.u32 %s1371, 128
        %v1374 = vstv %s1373
        %v1375 = vadd.s32 %v1374, 56
        %vm1376 = vcmp.eq.s32.totalorder %v1372, %v1375
        %s1377 = smul.addr %s1365, 8
        %s1378 = scalar_lea.vmem [#allocation15], %s1377
        %1379 = vst.msk [vmem:[%s1378] sm:$0xff] %vm1376, 2147483648
        %s1380 = smul.addr %s1365, 8
        %s1381 = scalar_lea.vmem [#allocation16], %s1380
        %1382 = vst.msk [vmem:[%s1381] sm:$0xff] %vm1376, 2147483647
        %1383 = xla_tuple %1379, %1382
        %v1384 = vrot.slane %v179, 1
        %s1385 = vtos %v1384
        %s1386 = sshrl.u32 %s1385, 3
        %p1387 = scmp.lt.s32.totalorder %s1385, 0
        %s1388 = ssub.s32 0, %s1385
        %s1389 = scalar_select %p1387, %s1388, %s1385
        %s1390 = sand.u32 %s1389, 7
        %s1391 = ssub.s32 0, %s1390
        %s1392 = scalar_select %p1387, %s1391, %s1390
        %v1393 = vlaneseq
        %s1394 = smul.u32 %s1392, 128
        %v1395 = vstv %s1394
        %v1396 = vadd.s32 %v1395, 57
        %vm1397 = vcmp.eq.s32.totalorder %v1393, %v1396
        %s1398 = smul.addr %s1386, 8
        %s1399 = scalar_lea.vmem [#allocation15], %s1398
        %1400 = vst.msk [vmem:[%s1399] sm:$0xff] %vm1397, 2147483648
        %s1401 = smul.addr %s1386, 8
        %s1402 = scalar_lea.vmem [#allocation16], %s1401
        %1403 = vst.msk [vmem:[%s1402] sm:$0xff] %vm1397, 2147483647
        %1404 = xla_tuple %1400, %1403
        %v1405 = vrot.slane %v1384, 1
        %s1406 = vtos %v1405
        %s1407 = sshrl.u32 %s1406, 3
        %p1408 = scmp.lt.s32.totalorder %s1406, 0
        %s1409 = ssub.s32 0, %s1406
        %s1410 = scalar_select %p1408, %s1409, %s1406
        %s1411 = sand.u32 %s1410, 7
        %s1412 = ssub.s32 0, %s1411
        %s1413 = scalar_select %p1408, %s1412, %s1411
        %v1414 = vlaneseq
        %s1415 = smul.u32 %s1413, 128
        %v1416 = vstv %s1415
        %v1417 = vadd.s32 %v1416, 58
        %vm1418 = vcmp.eq.s32.totalorder %v1414, %v1417
        %s1419 = smul.addr %s1407, 8
        %s1420 = scalar_lea.vmem [#allocation15], %s1419
        %1421 = vst.msk [vmem:[%s1420] sm:$0xff] %vm1418, 2147483648
        %s1422 = smul.addr %s1407, 8
        %s1423 = scalar_lea.vmem [#allocation16], %s1422
        %1424 = vst.msk [vmem:[%s1423] sm:$0xff] %vm1418, 2147483647
        %1425 = xla_tuple %1421, %1424
        %v1426 = vrot.slane %v1405, 1
        %s1427 = vtos %v1426
        %s1428 = sshrl.u32 %s1427, 3
        %p1429 = scmp.lt.s32.totalorder %s1427, 0
        %s1430 = ssub.s32 0, %s1427
        %s1431 = scalar_select %p1429, %s1430, %s1427
        %s1432 = sand.u32 %s1431, 7
        %s1433 = ssub.s32 0, %s1432
        %s1434 = scalar_select %p1429, %s1433, %s1432
        %v1435 = vlaneseq
        %s1436 = smul.u32 %s1434, 128
        %v1437 = vstv %s1436
        %v1438 = vadd.s32 %v1437, 59
        %vm1439 = vcmp.eq.s32.totalorder %v1435, %v1438
        %s1440 = smul.addr %s1428, 8
        %s1441 = scalar_lea.vmem [#allocation15], %s1440
        %1442 = vst.msk [vmem:[%s1441] sm:$0xff] %vm1439, 2147483648
        %s1443 = smul.addr %s1428, 8
        %s1444 = scalar_lea.vmem [#allocation16], %s1443
        %1445 = vst.msk [vmem:[%s1444] sm:$0xff] %vm1439, 2147483647
        %1446 = xla_tuple %1442, %1445
        %v1447 = vrot.slane %v1426, 1
        %s1448 = vtos %v1447
        %s1449 = sshrl.u32 %s1448, 3
        %p1450 = scmp.lt.s32.totalorder %s1448, 0
        %s1451 = ssub.s32 0, %s1448
        %s1452 = scalar_select %p1450, %s1451, %s1448
        %s1453 = sand.u32 %s1452, 7
        %s1454 = ssub.s32 0, %s1453
        %s1455 = scalar_select %p1450, %s1454, %s1453
        %v1456 = vlaneseq
        %s1457 = smul.u32 %s1455, 128
        %v1458 = vstv %s1457
        %v1459 = vadd.s32 %v1458, 60
        %vm1460 = vcmp.eq.s32.totalorder %v1456, %v1459
        %s1461 = smul.addr %s1449, 8
        %s1462 = scalar_lea.vmem [#allocation15], %s1461
        %1463 = vst.msk [vmem:[%s1462] sm:$0xff] %vm1460, 2147483648
        %s1464 = smul.addr %s1449, 8
        %s1465 = scalar_lea.vmem [#allocation16], %s1464
        %1466 = vst.msk [vmem:[%s1465] sm:$0xff] %vm1460, 2147483647
        %1467 = xla_tuple %1463, %1466
        %v1468 = vrot.slane %v1447, 1
        %s1469 = vtos %v1468
        %s1470 = sshrl.u32 %s1469, 3
        %p1471 = scmp.lt.s32.totalorder %s1469, 0
        %s1472 = ssub.s32 0, %s1469
        %s1473 = scalar_select %p1471, %s1472, %s1469
        %s1474 = sand.u32 %s1473, 7
        %s1475 = ssub.s32 0, %s1474
        %s1476 = scalar_select %p1471, %s1475, %s1474
        %v1477 = vlaneseq
        %s1478 = smul.u32 %s1476, 128
        %v1479 = vstv %s1478
        %v1480 = vadd.s32 %v1479, 61
        %vm1481 = vcmp.eq.s32.totalorder %v1477, %v1480
        %s1482 = smul.addr %s1470, 8
        %s1483 = scalar_lea.vmem [#allocation15], %s1482
        %1484 = vst.msk [vmem:[%s1483] sm:$0xff] %vm1481, 2147483648
        %s1485 = smul.addr %s1470, 8
        %s1486 = scalar_lea.vmem [#allocation16], %s1485
        %1487 = vst.msk [vmem:[%s1486] sm:$0xff] %vm1481, 2147483647
        %1488 = xla_tuple %1484, %1487
        %v1489 = vrot.slane %v1468, 1
        %s1490 = vtos %v1489
        %s1491 = sshrl.u32 %s1490, 3
        %p1492 = scmp.lt.s32.totalorder %s1490, 0
        %s1493 = ssub.s32 0, %s1490
        %s1494 = scalar_select %p1492, %s1493, %s1490
        %s1495 = sand.u32 %s1494, 7
        %s1496 = ssub.s32 0, %s1495
        %s1497 = scalar_select %p1492, %s1496, %s1495
        %v1498 = vlaneseq
        %s1499 = smul.u32 %s1497, 128
        %v1500 = vstv %s1499
        %v1501 = vadd.s32 %v1500, 62
        %vm1502 = vcmp.eq.s32.totalorder %v1498, %v1501
        %s1503 = smul.addr %s1491, 8
        %s1504 = scalar_lea.vmem [#allocation15], %s1503
        %1505 = vst.msk [vmem:[%s1504] sm:$0xff] %vm1502, 2147483648
        %s1506 = smul.addr %s1491, 8
        %s1507 = scalar_lea.vmem [#allocation16], %s1506
        %1508 = vst.msk [vmem:[%s1507] sm:$0xff] %vm1502, 2147483647
        %1509 = xla_tuple %1505, %1508
        %v1510 = vrot.slane %v1489, 1
        %s1511 = vtos %v1510
        %s1512 = sshrl.u32 %s1511, 3
        %p1513 = scmp.lt.s32.totalorder %s1511, 0
        %s1514 = ssub.s32 0, %s1511
        %s1515 = scalar_select %p1513, %s1514, %s1511
        %s1516 = sand.u32 %s1515, 7
        %s1517 = ssub.s32 0, %s1516
        %s1518 = scalar_select %p1513, %s1517, %s1516
        %v1519 = vlaneseq
        %s1520 = smul.u32 %s1518, 128
        %v1521 = vstv %s1520
        %v1522 = vadd.s32 %v1521, 63
        %vm1523 = vcmp.eq.s32.totalorder %v1519, %v1522
        %s1524 = smul.addr %s1512, 8
        %s1525 = scalar_lea.vmem [#allocation15], %s1524
        %1526 = vst.msk [vmem:[%s1525] sm:$0xff] %vm1523, 2147483648
        %s1527 = smul.addr %s1512, 8
        %s1528 = scalar_lea.vmem [#allocation16], %s1527
        %1529 = vst.msk [vmem:[%s1528] sm:$0xff] %vm1523, 2147483647
        %1530 = xla_tuple %1526, %1529
        %v1531 = vrot.slane %v1510, 1
        %s1532 = vtos %v180
        %s1533 = sshrl.u32 %s1532, 3
        %p1534 = scmp.lt.s32.totalorder %s1532, 0
        %s1535 = ssub.s32 0, %s1532
        %s1536 = scalar_select %p1534, %s1535, %s1532
        %s1537 = sand.u32 %s1536, 7
        %s1538 = ssub.s32 0, %s1537
        %s1539 = scalar_select %p1534, %s1538, %s1537
        %v1540 = vlaneseq
        %s1541 = smul.u32 %s1539, 128
        %v1542 = vstv %s1541
        %v1543 = vadd.s32 %v1542, 64
        %vm1544 = vcmp.eq.s32.totalorder %v1540, %v1543
        %s1545 = smul.addr %s1533, 8
        %s1546 = scalar_lea.vmem [#allocation15], %s1545
        %1547 = vst.msk [vmem:[%s1546] sm:$0xff] %vm1544, 2147483648
        %s1548 = smul.addr %s1533, 8
        %s1549 = scalar_lea.vmem [#allocation16], %s1548
        %1550 = vst.msk [vmem:[%s1549] sm:$0xff] %vm1544, 2147483647
        %1551 = xla_tuple %1547, %1550
        %v1552 = vrot.slane %v180, 1
        %s1553 = vtos %v1552
        %s1554 = sshrl.u32 %s1553, 3
        %p1555 = scmp.lt.s32.totalorder %s1553, 0
        %s1556 = ssub.s32 0, %s1553
        %s1557 = scalar_select %p1555, %s1556, %s1553
        %s1558 = sand.u32 %s1557, 7
        %s1559 = ssub.s32 0, %s1558
        %s1560 = scalar_select %p1555, %s1559, %s1558
        %v1561 = vlaneseq
        %s1562 = smul.u32 %s1560, 128
        %v1563 = vstv %s1562
        %v1564 = vadd.s32 %v1563, 65
        %vm1565 = vcmp.eq.s32.totalorder %v1561, %v1564
        %s1566 = smul.addr %s1554, 8
        %s1567 = scalar_lea.vmem [#allocation15], %s1566
        %1568 = vst.msk [vmem:[%s1567] sm:$0xff] %vm1565, 2147483648
        %s1569 = smul.addr %s1554, 8
        %s1570 = scalar_lea.vmem [#allocation16], %s1569
        %1571 = vst.msk [vmem:[%s1570] sm:$0xff] %vm1565, 2147483647
        %1572 = xla_tuple %1568, %1571
        %v1573 = vrot.slane %v1552, 1
        %s1574 = vtos %v1573
        %s1575 = sshrl.u32 %s1574, 3
        %p1576 = scmp.lt.s32.totalorder %s1574, 0
        %s1577 = ssub.s32 0, %s1574
        %s1578 = scalar_select %p1576, %s1577, %s1574
        %s1579 = sand.u32 %s1578, 7
        %s1580 = ssub.s32 0, %s1579
        %s1581 = scalar_select %p1576, %s1580, %s1579
        %v1582 = vlaneseq
        %s1583 = smul.u32 %s1581, 128
        %v1584 = vstv %s1583
        %v1585 = vadd.s32 %v1584, 66
        %vm1586 = vcmp.eq.s32.totalorder %v1582, %v1585
        %s1587 = smul.addr %s1575, 8
        %s1588 = scalar_lea.vmem [#allocation15], %s1587
        %1589 = vst.msk [vmem:[%s1588] sm:$0xff] %vm1586, 2147483648
        %s1590 = smul.addr %s1575, 8
        %s1591 = scalar_lea.vmem [#allocation16], %s1590
        %1592 = vst.msk [vmem:[%s1591] sm:$0xff] %vm1586, 2147483647
        %1593 = xla_tuple %1589, %1592
        %v1594 = vrot.slane %v1573, 1
        %s1595 = vtos %v1594
        %s1596 = sshrl.u32 %s1595, 3
        %p1597 = scmp.lt.s32.totalorder %s1595, 0
        %s1598 = ssub.s32 0, %s1595
        %s1599 = scalar_select %p1597, %s1598, %s1595
        %s1600 = sand.u32 %s1599, 7
        %s1601 = ssub.s32 0, %s1600
        %s1602 = scalar_select %p1597, %s1601, %s1600
        %v1603 = vlaneseq
        %s1604 = smul.u32 %s1602, 128
        %v1605 = vstv %s1604
        %v1606 = vadd.s32 %v1605, 67
        %vm1607 = vcmp.eq.s32.totalorder %v1603, %v1606
        %s1608 = smul.addr %s1596, 8
        %s1609 = scalar_lea.vmem [#allocation15], %s1608
        %1610 = vst.msk [vmem:[%s1609] sm:$0xff] %vm1607, 2147483648
        %s1611 = smul.addr %s1596, 8
        %s1612 = scalar_lea.vmem [#allocation16], %s1611
        %1613 = vst.msk [vmem:[%s1612] sm:$0xff] %vm1607, 2147483647
        %1614 = xla_tuple %1610, %1613
        %v1615 = vrot.slane %v1594, 1
        %s1616 = vtos %v1615
        %s1617 = sshrl.u32 %s1616, 3
        %p1618 = scmp.lt.s32.totalorder %s1616, 0
        %s1619 = ssub.s32 0, %s1616
        %s1620 = scalar_select %p1618, %s1619, %s1616
        %s1621 = sand.u32 %s1620, 7
        %s1622 = ssub.s32 0, %s1621
        %s1623 = scalar_select %p1618, %s1622, %s1621
        %v1624 = vlaneseq
        %s1625 = smul.u32 %s1623, 128
        %v1626 = vstv %s1625
        %v1627 = vadd.s32 %v1626, 68
        %vm1628 = vcmp.eq.s32.totalorder %v1624, %v1627
        %s1629 = smul.addr %s1617, 8
        %s1630 = scalar_lea.vmem [#allocation15], %s1629
        %1631 = vst.msk [vmem:[%s1630] sm:$0xff] %vm1628, 2147483648
        %s1632 = smul.addr %s1617, 8
        %s1633 = scalar_lea.vmem [#allocation16], %s1632
        %1634 = vst.msk [vmem:[%s1633] sm:$0xff] %vm1628, 2147483647
        %1635 = xla_tuple %1631, %1634
        %v1636 = vrot.slane %v1615, 1
        %s1637 = vtos %v1636
        %s1638 = sshrl.u32 %s1637, 3
        %p1639 = scmp.lt.s32.totalorder %s1637, 0
        %s1640 = ssub.s32 0, %s1637
        %s1641 = scalar_select %p1639, %s1640, %s1637
        %s1642 = sand.u32 %s1641, 7
        %s1643 = ssub.s32 0, %s1642
        %s1644 = scalar_select %p1639, %s1643, %s1642
        %v1645 = vlaneseq
        %s1646 = smul.u32 %s1644, 128
        %v1647 = vstv %s1646
        %v1648 = vadd.s32 %v1647, 69
        %vm1649 = vcmp.eq.s32.totalorder %v1645, %v1648
        %s1650 = smul.addr %s1638, 8
        %s1651 = scalar_lea.vmem [#allocation15], %s1650
        %1652 = vst.msk [vmem:[%s1651] sm:$0xff] %vm1649, 2147483648
        %s1653 = smul.addr %s1638, 8
        %s1654 = scalar_lea.vmem [#allocation16], %s1653
        %1655 = vst.msk [vmem:[%s1654] sm:$0xff] %vm1649, 2147483647
        %1656 = xla_tuple %1652, %1655
        %v1657 = vrot.slane %v1636, 1
        %s1658 = vtos %v1657
        %s1659 = sshrl.u32 %s1658, 3
        %p1660 = scmp.lt.s32.totalorder %s1658, 0
        %s1661 = ssub.s32 0, %s1658
        %s1662 = scalar_select %p1660, %s1661, %s1658
        %s1663 = sand.u32 %s1662, 7
        %s1664 = ssub.s32 0, %s1663
        %s1665 = scalar_select %p1660, %s1664, %s1663
        %v1666 = vlaneseq
        %s1667 = smul.u32 %s1665, 128
        %v1668 = vstv %s1667
        %v1669 = vadd.s32 %v1668, 70
        %vm1670 = vcmp.eq.s32.totalorder %v1666, %v1669
        %s1671 = smul.addr %s1659, 8
        %s1672 = scalar_lea.vmem [#allocation15], %s1671
        %1673 = vst.msk [vmem:[%s1672] sm:$0xff] %vm1670, 2147483648
        %s1674 = smul.addr %s1659, 8
        %s1675 = scalar_lea.vmem [#allocation16], %s1674
        %1676 = vst.msk [vmem:[%s1675] sm:$0xff] %vm1670, 2147483647
        %1677 = xla_tuple %1673, %1676
        %v1678 = vrot.slane %v1657, 1
        %s1679 = vtos %v1678
        %s1680 = sshrl.u32 %s1679, 3
        %p1681 = scmp.lt.s32.totalorder %s1679, 0
        %s1682 = ssub.s32 0, %s1679
        %s1683 = scalar_select %p1681, %s1682, %s1679
        %s1684 = sand.u32 %s1683, 7
        %s1685 = ssub.s32 0, %s1684
        %s1686 = scalar_select %p1681, %s1685, %s1684
        %v1687 = vlaneseq
        %s1688 = smul.u32 %s1686, 128
        %v1689 = vstv %s1688
        %v1690 = vadd.s32 %v1689, 71
        %vm1691 = vcmp.eq.s32.totalorder %v1687, %v1690
        %s1692 = smul.addr %s1680, 8
        %s1693 = scalar_lea.vmem [#allocation15], %s1692
        %1694 = vst.msk [vmem:[%s1693] sm:$0xff] %vm1691, 2147483648
        %s1695 = smul.addr %s1680, 8
        %s1696 = scalar_lea.vmem [#allocation16], %s1695
        %1697 = vst.msk [vmem:[%s1696] sm:$0xff] %vm1691, 2147483647
        %1698 = xla_tuple %1694, %1697
        %v1699 = vrot.slane %v1678, 1
        %s1700 = vtos %v181
        %s1701 = sshrl.u32 %s1700, 3
        %p1702 = scmp.lt.s32.totalorder %s1700, 0
        %s1703 = ssub.s32 0, %s1700
        %s1704 = scalar_select %p1702, %s1703, %s1700
        %s1705 = sand.u32 %s1704, 7
        %s1706 = ssub.s32 0, %s1705
        %s1707 = scalar_select %p1702, %s1706, %s1705
        %v1708 = vlaneseq
        %s1709 = smul.u32 %s1707, 128
        %v1710 = vstv %s1709
        %v1711 = vadd.s32 %v1710, 72
        %vm1712 = vcmp.eq.s32.totalorder %v1708, %v1711
        %s1713 = smul.addr %s1701, 8
        %s1714 = scalar_lea.vmem [#allocation15], %s1713
        %1715 = vst.msk [vmem:[%s1714] sm:$0xff] %vm1712, 2147483648
        %s1716 = smul.addr %s1701, 8
        %s1717 = scalar_lea.vmem [#allocation16], %s1716
        %1718 = vst.msk [vmem:[%s1717] sm:$0xff] %vm1712, 2147483647
        %1719 = xla_tuple %1715, %1718
        %v1720 = vrot.slane %v181, 1
        %s1721 = vtos %v1720
        %s1722 = sshrl.u32 %s1721, 3
        %p1723 = scmp.lt.s32.totalorder %s1721, 0
        %s1724 = ssub.s32 0, %s1721
        %s1725 = scalar_select %p1723, %s1724, %s1721
        %s1726 = sand.u32 %s1725, 7
        %s1727 = ssub.s32 0, %s1726
        %s1728 = scalar_select %p1723, %s1727, %s1726
        %v1729 = vlaneseq
        %s1730 = smul.u32 %s1728, 128
        %v1731 = vstv %s1730
        %v1732 = vadd.s32 %v1731, 73
        %vm1733 = vcmp.eq.s32.totalorder %v1729, %v1732
        %s1734 = smul.addr %s1722, 8
        %s1735 = scalar_lea.vmem [#allocation15], %s1734
        %1736 = vst.msk [vmem:[%s1735] sm:$0xff] %vm1733, 2147483648
        %s1737 = smul.addr %s1722, 8
        %s1738 = scalar_lea.vmem [#allocation16], %s1737
        %1739 = vst.msk [vmem:[%s1738] sm:$0xff] %vm1733, 2147483647
        %1740 = xla_tuple %1736, %1739
        %v1741 = vrot.slane %v1720, 1
        %s1742 = vtos %v1741
        %s1743 = sshrl.u32 %s1742, 3
        %p1744 = scmp.lt.s32.totalorder %s1742, 0
        %s1745 = ssub.s32 0, %s1742
        %s1746 = scalar_select %p1744, %s1745, %s1742
        %s1747 = sand.u32 %s1746, 7
        %s1748 = ssub.s32 0, %s1747
        %s1749 = scalar_select %p1744, %s1748, %s1747
        %v1750 = vlaneseq
        %s1751 = smul.u32 %s1749, 128
        %v1752 = vstv %s1751
        %v1753 = vadd.s32 %v1752, 74
        %vm1754 = vcmp.eq.s32.totalorder %v1750, %v1753
        %s1755 = smul.addr %s1743, 8
        %s1756 = scalar_lea.vmem [#allocation15], %s1755
        %1757 = vst.msk [vmem:[%s1756] sm:$0xff] %vm1754, 2147483648
        %s1758 = smul.addr %s1743, 8
        %s1759 = scalar_lea.vmem [#allocation16], %s1758
        %1760 = vst.msk [vmem:[%s1759] sm:$0xff] %vm1754, 2147483647
        %1761 = xla_tuple %1757, %1760
        %v1762 = vrot.slane %v1741, 1
        %s1763 = vtos %v1762
        %s1764 = sshrl.u32 %s1763, 3
        %p1765 = scmp.lt.s32.totalorder %s1763, 0
        %s1766 = ssub.s32 0, %s1763
        %s1767 = scalar_select %p1765, %s1766, %s1763
        %s1768 = sand.u32 %s1767, 7
        %s1769 = ssub.s32 0, %s1768
        %s1770 = scalar_select %p1765, %s1769, %s1768
        %v1771 = vlaneseq
        %s1772 = smul.u32 %s1770, 128
        %v1773 = vstv %s1772
        %v1774 = vadd.s32 %v1773, 75
        %vm1775 = vcmp.eq.s32.totalorder %v1771, %v1774
        %s1776 = smul.addr %s1764, 8
        %s1777 = scalar_lea.vmem [#allocation15], %s1776
        %1778 = vst.msk [vmem:[%s1777] sm:$0xff] %vm1775, 2147483648
        %s1779 = smul.addr %s1764, 8
        %s1780 = scalar_lea.vmem [#allocation16], %s1779
        %1781 = vst.msk [vmem:[%s1780] sm:$0xff] %vm1775, 2147483647
        %1782 = xla_tuple %1778, %1781
        %v1783 = vrot.slane %v1762, 1
        %s1784 = vtos %v1783
        %s1785 = sshrl.u32 %s1784, 3
        %p1786 = scmp.lt.s32.totalorder %s1784, 0
        %s1787 = ssub.s32 0, %s1784
        %s1788 = scalar_select %p1786, %s1787, %s1784
        %s1789 = sand.u32 %s1788, 7
        %s1790 = ssub.s32 0, %s1789
        %s1791 = scalar_select %p1786, %s1790, %s1789
        %v1792 = vlaneseq
        %s1793 = smul.u32 %s1791, 128
        %v1794 = vstv %s1793
        %v1795 = vadd.s32 %v1794, 76
        %vm1796 = vcmp.eq.s32.totalorder %v1792, %v1795
        %s1797 = smul.addr %s1785, 8
        %s1798 = scalar_lea.vmem [#allocation15], %s1797
        %1799 = vst.msk [vmem:[%s1798] sm:$0xff] %vm1796, 2147483648
        %s1800 = smul.addr %s1785, 8
        %s1801 = scalar_lea.vmem [#allocation16], %s1800
        %1802 = vst.msk [vmem:[%s1801] sm:$0xff] %vm1796, 2147483647
        %1803 = xla_tuple %1799, %1802
        %v1804 = vrot.slane %v1783, 1
        %s1805 = vtos %v1804
        %s1806 = sshrl.u32 %s1805, 3
        %p1807 = scmp.lt.s32.totalorder %s1805, 0
        %s1808 = ssub.s32 0, %s1805
        %s1809 = scalar_select %p1807, %s1808, %s1805
        %s1810 = sand.u32 %s1809, 7
        %s1811 = ssub.s32 0, %s1810
        %s1812 = scalar_select %p1807, %s1811, %s1810
        %v1813 = vlaneseq
        %s1814 = smul.u32 %s1812, 128
        %v1815 = vstv %s1814
        %v1816 = vadd.s32 %v1815, 77
        %vm1817 = vcmp.eq.s32.totalorder %v1813, %v1816
        %s1818 = smul.addr %s1806, 8
        %s1819 = scalar_lea.vmem [#allocation15], %s1818
        %1820 = vst.msk [vmem:[%s1819] sm:$0xff] %vm1817, 2147483648
        %s1821 = smul.addr %s1806, 8
        %s1822 = scalar_lea.vmem [#allocation16], %s1821
        %1823 = vst.msk [vmem:[%s1822] sm:$0xff] %vm1817, 2147483647
        %1824 = xla_tuple %1820, %1823
        %v1825 = vrot.slane %v1804, 1
        %s1826 = vtos %v1825
        %s1827 = sshrl.u32 %s1826, 3
        %p1828 = scmp.lt.s32.totalorder %s1826, 0
        %s1829 = ssub.s32 0, %s1826
        %s1830 = scalar_select %p1828, %s1829, %s1826
        %s1831 = sand.u32 %s1830, 7
        %s1832 = ssub.s32 0, %s1831
        %s1833 = scalar_select %p1828, %s1832, %s1831
        %v1834 = vlaneseq
        %s1835 = smul.u32 %s1833, 128
        %v1836 = vstv %s1835
        %v1837 = vadd.s32 %v1836, 78
        %vm1838 = vcmp.eq.s32.totalorder %v1834, %v1837
        %s1839 = smul.addr %s1827, 8
        %s1840 = scalar_lea.vmem [#allocation15], %s1839
        %1841 = vst.msk [vmem:[%s1840] sm:$0xff] %vm1838, 2147483648
        %s1842 = smul.addr %s1827, 8
        %s1843 = scalar_lea.vmem [#allocation16], %s1842
        %1844 = vst.msk [vmem:[%s1843] sm:$0xff] %vm1838, 2147483647
        %1845 = xla_tuple %1841, %1844
        %v1846 = vrot.slane %v1825, 1
        %s1847 = vtos %v1846
        %s1848 = sshrl.u32 %s1847, 3
        %p1849 = scmp.lt.s32.totalorder %s1847, 0
        %s1850 = ssub.s32 0, %s1847
        %s1851 = scalar_select %p1849, %s1850, %s1847
        %s1852 = sand.u32 %s1851, 7
        %s1853 = ssub.s32 0, %s1852
        %s1854 = scalar_select %p1849, %s1853, %s1852
        %v1855 = vlaneseq
        %s1856 = smul.u32 %s1854, 128
        %v1857 = vstv %s1856
        %v1858 = vadd.s32 %v1857, 79
        %vm1859 = vcmp.eq.s32.totalorder %v1855, %v1858
        %s1860 = smul.addr %s1848, 8
        %s1861 = scalar_lea.vmem [#allocation15], %s1860
        %1862 = vst.msk [vmem:[%s1861] sm:$0xff] %vm1859, 2147483648
        %s1863 = smul.addr %s1848, 8
        %s1864 = scalar_lea.vmem [#allocation16], %s1863
        %1865 = vst.msk [vmem:[%s1864] sm:$0xff] %vm1859, 2147483647
        %1866 = xla_tuple %1862, %1865
        %v1867 = vrot.slane %v1846, 1
        %s1868 = vtos %v182
        %s1869 = sshrl.u32 %s1868, 3
        %p1870 = scmp.lt.s32.totalorder %s1868, 0
        %s1871 = ssub.s32 0, %s1868
        %s1872 = scalar_select %p1870, %s1871, %s1868
        %s1873 = sand.u32 %s1872, 7
        %s1874 = ssub.s32 0, %s1873
        %s1875 = scalar_select %p1870, %s1874, %s1873
        %v1876 = vlaneseq
        %s1877 = smul.u32 %s1875, 128
        %v1878 = vstv %s1877
        %v1879 = vadd.s32 %v1878, 80
        %vm1880 = vcmp.eq.s32.totalorder %v1876, %v1879
        %s1881 = smul.addr %s1869, 8
        %s1882 = scalar_lea.vmem [#allocation15], %s1881
        %1883 = vst.msk [vmem:[%s1882] sm:$0xff] %vm1880, 2147483648
        %s1884 = smul.addr %s1869, 8
        %s1885 = scalar_lea.vmem [#allocation16], %s1884
        %1886 = vst.msk [vmem:[%s1885] sm:$0xff] %vm1880, 2147483647
        %1887 = xla_tuple %1883, %1886
        %v1888 = vrot.slane %v182, 1
        %s1889 = vtos %v1888
        %s1890 = sshrl.u32 %s1889, 3
        %p1891 = scmp.lt.s32.totalorder %s1889, 0
        %s1892 = ssub.s32 0, %s1889
        %s1893 = scalar_select %p1891, %s1892, %s1889
        %s1894 = sand.u32 %s1893, 7
        %s1895 = ssub.s32 0, %s1894
        %s1896 = scalar_select %p1891, %s1895, %s1894
        %v1897 = vlaneseq
        %s1898 = smul.u32 %s1896, 128
        %v1899 = vstv %s1898
        %v1900 = vadd.s32 %v1899, 81
        %vm1901 = vcmp.eq.s32.totalorder %v1897, %v1900
        %s1902 = smul.addr %s1890, 8
        %s1903 = scalar_lea.vmem [#allocation15], %s1902
        %1904 = vst.msk [vmem:[%s1903] sm:$0xff] %vm1901, 2147483648
        %s1905 = smul.addr %s1890, 8
        %s1906 = scalar_lea.vmem [#allocation16], %s1905
        %1907 = vst.msk [vmem:[%s1906] sm:$0xff] %vm1901, 2147483647
        %1908 = xla_tuple %1904, %1907
        %v1909 = vrot.slane %v1888, 1
        %s1910 = vtos %v1909
        %s1911 = sshrl.u32 %s1910, 3
        %p1912 = scmp.lt.s32.totalorder %s1910, 0
        %s1913 = ssub.s32 0, %s1910
        %s1914 = scalar_select %p1912, %s1913, %s1910
        %s1915 = sand.u32 %s1914, 7
        %s1916 = ssub.s32 0, %s1915
        %s1917 = scalar_select %p1912, %s1916, %s1915
        %v1918 = vlaneseq
        %s1919 = smul.u32 %s1917, 128
        %v1920 = vstv %s1919
        %v1921 = vadd.s32 %v1920, 82
        %vm1922 = vcmp.eq.s32.totalorder %v1918, %v1921
        %s1923 = smul.addr %s1911, 8
        %s1924 = scalar_lea.vmem [#allocation15], %s1923
        %1925 = vst.msk [vmem:[%s1924] sm:$0xff] %vm1922, 2147483648
        %s1926 = smul.addr %s1911, 8
        %s1927 = scalar_lea.vmem [#allocation16], %s1926
        %1928 = vst.msk [vmem:[%s1927] sm:$0xff] %vm1922, 2147483647
        %1929 = xla_tuple %1925, %1928
        %v1930 = vrot.slane %v1909, 1
        %s1931 = vtos %v1930
        %s1932 = sshrl.u32 %s1931, 3
        %p1933 = scmp.lt.s32.totalorder %s1931, 0
        %s1934 = ssub.s32 0, %s1931
        %s1935 = scalar_select %p1933, %s1934, %s1931
        %s1936 = sand.u32 %s1935, 7
        %s1937 = ssub.s32 0, %s1936
        %s1938 = scalar_select %p1933, %s1937, %s1936
        %v1939 = vlaneseq
        %s1940 = smul.u32 %s1938, 128
        %v1941 = vstv %s1940
        %v1942 = vadd.s32 %v1941, 83
        %vm1943 = vcmp.eq.s32.totalorder %v1939, %v1942
        %s1944 = smul.addr %s1932, 8
        %s1945 = scalar_lea.vmem [#allocation15], %s1944
        %1946 = vst.msk [vmem:[%s1945] sm:$0xff] %vm1943, 2147483648
        %s1947 = smul.addr %s1932, 8
        %s1948 = scalar_lea.vmem [#allocation16], %s1947
        %1949 = vst.msk [vmem:[%s1948] sm:$0xff] %vm1943, 2147483647
        %1950 = xla_tuple %1946, %1949
        %v1951 = vrot.slane %v1930, 1
        %s1952 = vtos %v1951
        %s1953 = sshrl.u32 %s1952, 3
        %p1954 = scmp.lt.s32.totalorder %s1952, 0
        %s1955 = ssub.s32 0, %s1952
        %s1956 = scalar_select %p1954, %s1955, %s1952
        %s1957 = sand.u32 %s1956, 7
        %s1958 = ssub.s32 0, %s1957
        %s1959 = scalar_select %p1954, %s1958, %s1957
        %v1960 = vlaneseq
        %s1961 = smul.u32 %s1959, 128
        %v1962 = vstv %s1961
        %v1963 = vadd.s32 %v1962, 84
        %vm1964 = vcmp.eq.s32.totalorder %v1960, %v1963
        %s1965 = smul.addr %s1953, 8
        %s1966 = scalar_lea.vmem [#allocation15], %s1965
        %1967 = vst.msk [vmem:[%s1966] sm:$0xff] %vm1964, 2147483648
        %s1968 = smul.addr %s1953, 8
        %s1969 = scalar_lea.vmem [#allocation16], %s1968
        %1970 = vst.msk [vmem:[%s1969] sm:$0xff] %vm1964, 2147483647
        %1971 = xla_tuple %1967, %1970
        %v1972 = vrot.slane %v1951, 1
        %s1973 = vtos %v1972
        %s1974 = sshrl.u32 %s1973, 3
        %p1975 = scmp.lt.s32.totalorder %s1973, 0
        %s1976 = ssub.s32 0, %s1973
        %s1977 = scalar_select %p1975, %s1976, %s1973
        %s1978 = sand.u32 %s1977, 7
        %s1979 = ssub.s32 0, %s1978
        %s1980 = scalar_select %p1975, %s1979, %s1978
        %v1981 = vlaneseq
        %s1982 = smul.u32 %s1980, 128
        %v1983 = vstv %s1982
        %v1984 = vadd.s32 %v1983, 85
        %vm1985 = vcmp.eq.s32.totalorder %v1981, %v1984
        %s1986 = smul.addr %s1974, 8
        %s1987 = scalar_lea.vmem [#allocation15], %s1986
        %1988 = vst.msk [vmem:[%s1987] sm:$0xff] %vm1985, 2147483648
        %s1989 = smul.addr %s1974, 8
        %s1990 = scalar_lea.vmem [#allocation16], %s1989
        %1991 = vst.msk [vmem:[%s1990] sm:$0xff] %vm1985, 2147483647
        %1992 = xla_tuple %1988, %1991
        %v1993 = vrot.slane %v1972, 1
        %s1994 = vtos %v1993
        %s1995 = sshrl.u32 %s1994, 3
        %p1996 = scmp.lt.s32.totalorder %s1994, 0
        %s1997 = ssub.s32 0, %s1994
        %s1998 = scalar_select %p1996, %s1997, %s1994
        %s1999 = sand.u32 %s1998, 7
        %s2000 = ssub.s32 0, %s1999
        %s2001 = scalar_select %p1996, %s2000, %s1999
        %v2002 = vlaneseq
        %s2003 = smul.u32 %s2001, 128
        %v2004 = vstv %s2003
        %v2005 = vadd.s32 %v2004, 86
        %vm2006 = vcmp.eq.s32.totalorder %v2002, %v2005
        %s2007 = smul.addr %s1995, 8
        %s2008 = scalar_lea.vmem [#allocation15], %s2007
        %2009 = vst.msk [vmem:[%s2008] sm:$0xff] %vm2006, 2147483648
        %s2010 = smul.addr %s1995, 8
        %s2011 = scalar_lea.vmem [#allocation16], %s2010
        %2012 = vst.msk [vmem:[%s2011] sm:$0xff] %vm2006, 2147483647
        %2013 = xla_tuple %2009, %2012
        %v2014 = vrot.slane %v1993, 1
        %s2015 = vtos %v2014
        %s2016 = sshrl.u32 %s2015, 3
        %p2017 = scmp.lt.s32.totalorder %s2015, 0
        %s2018 = ssub.s32 0, %s2015
        %s2019 = scalar_select %p2017, %s2018, %s2015
        %s2020 = sand.u32 %s2019, 7
        %s2021 = ssub.s32 0, %s2020
        %s2022 = scalar_select %p2017, %s2021, %s2020
        %v2023 = vlaneseq
        %s2024 = smul.u32 %s2022, 128
        %v2025 = vstv %s2024
        %v2026 = vadd.s32 %v2025, 87
        %vm2027 = vcmp.eq.s32.totalorder %v2023, %v2026
        %s2028 = smul.addr %s2016, 8
        %s2029 = scalar_lea.vmem [#allocation15], %s2028
        %2030 = vst.msk [vmem:[%s2029] sm:$0xff] %vm2027, 2147483648
        %s2031 = smul.addr %s2016, 8
        %s2032 = scalar_lea.vmem [#allocation16], %s2031
        %2033 = vst.msk [vmem:[%s2032] sm:$0xff] %vm2027, 2147483647
        %2034 = xla_tuple %2030, %2033
        %v2035 = vrot.slane %v2014, 1
        %s2036 = vtos %v183
        %s2037 = sshrl.u32 %s2036, 3
        %p2038 = scmp.lt.s32.totalorder %s2036, 0
        %s2039 = ssub.s32 0, %s2036
        %s2040 = scalar_select %p2038, %s2039, %s2036
        %s2041 = sand.u32 %s2040, 7
        %s2042 = ssub.s32 0, %s2041
        %s2043 = scalar_select %p2038, %s2042, %s2041
        %v2044 = vlaneseq
        %s2045 = smul.u32 %s2043, 128
        %v2046 = vstv %s2045
        %v2047 = vadd.s32 %v2046, 88
        %vm2048 = vcmp.eq.s32.totalorder %v2044, %v2047
        %s2049 = smul.addr %s2037, 8
        %s2050 = scalar_lea.vmem [#allocation15], %s2049
        %2051 = vst.msk [vmem:[%s2050] sm:$0xff] %vm2048, 2147483648
        %s2052 = smul.addr %s2037, 8
        %s2053 = scalar_lea.vmem [#allocation16], %s2052
        %2054 = vst.msk [vmem:[%s2053] sm:$0xff] %vm2048, 2147483647
        %2055 = xla_tuple %2051, %2054
        %v2056 = vrot.slane %v183, 1
        %s2057 = vtos %v2056
        %s2058 = sshrl.u32 %s2057, 3
        %p2059 = scmp.lt.s32.totalorder %s2057, 0
        %s2060 = ssub.s32 0, %s2057
        %s2061 = scalar_select %p2059, %s2060, %s2057
        %s2062 = sand.u32 %s2061, 7
        %s2063 = ssub.s32 0, %s2062
        %s2064 = scalar_select %p2059, %s2063, %s2062
        %v2065 = vlaneseq
        %s2066 = smul.u32 %s2064, 128
        %v2067 = vstv %s2066
        %v2068 = vadd.s32 %v2067, 89
        %vm2069 = vcmp.eq.s32.totalorder %v2065, %v2068
        %s2070 = smul.addr %s2058, 8
        %s2071 = scalar_lea.vmem [#allocation15], %s2070
        %2072 = vst.msk [vmem:[%s2071] sm:$0xff] %vm2069, 2147483648
        %s2073 = smul.addr %s2058, 8
        %s2074 = scalar_lea.vmem [#allocation16], %s2073
        %2075 = vst.msk [vmem:[%s2074] sm:$0xff] %vm2069, 2147483647
        %2076 = xla_tuple %2072, %2075
        %v2077 = vrot.slane %v2056, 1
        %s2078 = vtos %v2077
        %s2079 = sshrl.u32 %s2078, 3
        %p2080 = scmp.lt.s32.totalorder %s2078, 0
        %s2081 = ssub.s32 0, %s2078
        %s2082 = scalar_select %p2080, %s2081, %s2078
        %s2083 = sand.u32 %s2082, 7
        %s2084 = ssub.s32 0, %s2083
        %s2085 = scalar_select %p2080, %s2084, %s2083
        %v2086 = vlaneseq
        %s2087 = smul.u32 %s2085, 128
        %v2088 = vstv %s2087
        %v2089 = vadd.s32 %v2088, 90
        %vm2090 = vcmp.eq.s32.totalorder %v2086, %v2089
        %s2091 = smul.addr %s2079, 8
        %s2092 = scalar_lea.vmem [#allocation15], %s2091
        %2093 = vst.msk [vmem:[%s2092] sm:$0xff] %vm2090, 2147483648
        %s2094 = smul.addr %s2079, 8
        %s2095 = scalar_lea.vmem [#allocation16], %s2094
        %2096 = vst.msk [vmem:[%s2095] sm:$0xff] %vm2090, 2147483647
        %2097 = xla_tuple %2093, %2096
        %v2098 = vrot.slane %v2077, 1
        %s2099 = vtos %v2098
        %s2100 = sshrl.u32 %s2099, 3
        %p2101 = scmp.lt.s32.totalorder %s2099, 0
        %s2102 = ssub.s32 0, %s2099
        %s2103 = scalar_select %p2101, %s2102, %s2099
        %s2104 = sand.u32 %s2103, 7
        %s2105 = ssub.s32 0, %s2104
        %s2106 = scalar_select %p2101, %s2105, %s2104
        %v2107 = vlaneseq
        %s2108 = smul.u32 %s2106, 128
        %v2109 = vstv %s2108
        %v2110 = vadd.s32 %v2109, 91
        %vm2111 = vcmp.eq.s32.totalorder %v2107, %v2110
        %s2112 = smul.addr %s2100, 8
        %s2113 = scalar_lea.vmem [#allocation15], %s2112
        %2114 = vst.msk [vmem:[%s2113] sm:$0xff] %vm2111, 2147483648
        %s2115 = smul.addr %s2100, 8
        %s2116 = scalar_lea.vmem [#allocation16], %s2115
        %2117 = vst.msk [vmem:[%s2116] sm:$0xff] %vm2111, 2147483647
        %2118 = xla_tuple %2114, %2117
        %v2119 = vrot.slane %v2098, 1
        %s2120 = vtos %v2119
        %s2121 = sshrl.u32 %s2120, 3
        %p2122 = scmp.lt.s32.totalorder %s2120, 0
        %s2123 = ssub.s32 0, %s2120
        %s2124 = scalar_select %p2122, %s2123, %s2120
        %s2125 = sand.u32 %s2124, 7
        %s2126 = ssub.s32 0, %s2125
        %s2127 = scalar_select %p2122, %s2126, %s2125
        %v2128 = vlaneseq
        %s2129 = smul.u32 %s2127, 128
        %v2130 = vstv %s2129
        %v2131 = vadd.s32 %v2130, 92
        %vm2132 = vcmp.eq.s32.totalorder %v2128, %v2131
        %s2133 = smul.addr %s2121, 8
        %s2134 = scalar_lea.vmem [#allocation15], %s2133
        %2135 = vst.msk [vmem:[%s2134] sm:$0xff] %vm2132, 2147483648
        %s2136 = smul.addr %s2121, 8
        %s2137 = scalar_lea.vmem [#allocation16], %s2136
        %2138 = vst.msk [vmem:[%s2137] sm:$0xff] %vm2132, 2147483647
        %2139 = xla_tuple %2135, %2138
        %v2140 = vrot.slane %v2119, 1
        %s2141 = vtos %v2140
        %s2142 = sshrl.u32 %s2141, 3
        %p2143 = scmp.lt.s32.totalorder %s2141, 0
        %s2144 = ssub.s32 0, %s2141
        %s2145 = scalar_select %p2143, %s2144, %s2141
        %s2146 = sand.u32 %s2145, 7
        %s2147 = ssub.s32 0, %s2146
        %s2148 = scalar_select %p2143, %s2147, %s2146
        %v2149 = vlaneseq
        %s2150 = smul.u32 %s2148, 128
        %v2151 = vstv %s2150
        %v2152 = vadd.s32 %v2151, 93
        %vm2153 = vcmp.eq.s32.totalorder %v2149, %v2152
        %s2154 = smul.addr %s2142, 8
        %s2155 = scalar_lea.vmem [#allocation15], %s2154
        %2156 = vst.msk [vmem:[%s2155] sm:$0xff] %vm2153, 2147483648
        %s2157 = smul.addr %s2142, 8
        %s2158 = scalar_lea.vmem [#allocation16], %s2157
        %2159 = vst.msk [vmem:[%s2158] sm:$0xff] %vm2153, 2147483647
        %2160 = xla_tuple %2156, %2159
        %v2161 = vrot.slane %v2140, 1
        %s2162 = vtos %v2161
        %s2163 = sshrl.u32 %s2162, 3
        %p2164 = scmp.lt.s32.totalorder %s2162, 0
        %s2165 = ssub.s32 0, %s2162
        %s2166 = scalar_select %p2164, %s2165, %s2162
        %s2167 = sand.u32 %s2166, 7
        %s2168 = ssub.s32 0, %s2167
        %s2169 = scalar_select %p2164, %s2168, %s2167
        %v2170 = vlaneseq
        %s2171 = smul.u32 %s2169, 128
        %v2172 = vstv %s2171
        %v2173 = vadd.s32 %v2172, 94
        %vm2174 = vcmp.eq.s32.totalorder %v2170, %v2173
        %s2175 = smul.addr %s2163, 8
        %s2176 = scalar_lea.vmem [#allocation15], %s2175
        %2177 = vst.msk [vmem:[%s2176] sm:$0xff] %vm2174, 2147483648
        %s2178 = smul.addr %s2163, 8
        %s2179 = scalar_lea.vmem [#allocation16], %s2178
        %2180 = vst.msk [vmem:[%s2179] sm:$0xff] %vm2174, 2147483647
        %2181 = xla_tuple %2177, %2180
        %v2182 = vrot.slane %v2161, 1
        %s2183 = vtos %v2182
        %s2184 = sshrl.u32 %s2183, 3
        %p2185 = scmp.lt.s32.totalorder %s2183, 0
        %s2186 = ssub.s32 0, %s2183
        %s2187 = scalar_select %p2185, %s2186, %s2183
        %s2188 = sand.u32 %s2187, 7
        %s2189 = ssub.s32 0, %s2188
        %s2190 = scalar_select %p2185, %s2189, %s2188
        %v2191 = vlaneseq
        %s2192 = smul.u32 %s2190, 128
        %v2193 = vstv %s2192
        %v2194 = vadd.s32 %v2193, 95
        %vm2195 = vcmp.eq.s32.totalorder %v2191, %v2194
        %s2196 = smul.addr %s2184, 8
        %s2197 = scalar_lea.vmem [#allocation15], %s2196
        %2198 = vst.msk [vmem:[%s2197] sm:$0xff] %vm2195, 2147483648
        %s2199 = smul.addr %s2184, 8
        %s2200 = scalar_lea.vmem [#allocation16], %s2199
        %2201 = vst.msk [vmem:[%s2200] sm:$0xff] %vm2195, 2147483647
        %2202 = xla_tuple %2198, %2201
        %v2203 = vrot.slane %v2182, 1
        %s2204 = vtos %v184
        %s2205 = sshrl.u32 %s2204, 3
        %p2206 = scmp.lt.s32.totalorder %s2204, 0
        %s2207 = ssub.s32 0, %s2204
        %s2208 = scalar_select %p2206, %s2207, %s2204
        %s2209 = sand.u32 %s2208, 7
        %s2210 = ssub.s32 0, %s2209
        %s2211 = scalar_select %p2206, %s2210, %s2209
        %v2212 = vlaneseq
        %s2213 = smul.u32 %s2211, 128
        %v2214 = vstv %s2213
        %v2215 = vadd.s32 %v2214, 96
        %vm2216 = vcmp.eq.s32.totalorder %v2212, %v2215
        %s2217 = smul.addr %s2205, 8
        %s2218 = scalar_lea.vmem [#allocation15], %s2217
        %2219 = vst.msk [vmem:[%s2218] sm:$0xff] %vm2216, 2147483648
        %s2220 = smul.addr %s2205, 8
        %s2221 = scalar_lea.vmem [#allocation16], %s2220
        %2222 = vst.msk [vmem:[%s2221] sm:$0xff] %vm2216, 2147483647
        %2223 = xla_tuple %2219, %2222
        %v2224 = vrot.slane %v184, 1
        %s2225 = vtos %v2224
        %s2226 = sshrl.u32 %s2225, 3
        %p2227 = scmp.lt.s32.totalorder %s2225, 0
        %s2228 = ssub.s32 0, %s2225
        %s2229 = scalar_select %p2227, %s2228, %s2225
        %s2230 = sand.u32 %s2229, 7
        %s2231 = ssub.s32 0, %s2230
        %s2232 = scalar_select %p2227, %s2231, %s2230
        %v2233 = vlaneseq
        %s2234 = smul.u32 %s2232, 128
        %v2235 = vstv %s2234
        %v2236 = vadd.s32 %v2235, 97
        %vm2237 = vcmp.eq.s32.totalorder %v2233, %v2236
        %s2238 = smul.addr %s2226, 8
        %s2239 = scalar_lea.vmem [#allocation15], %s2238
        %2240 = vst.msk [vmem:[%s2239] sm:$0xff] %vm2237, 2147483648
        %s2241 = smul.addr %s2226, 8
        %s2242 = scalar_lea.vmem [#allocation16], %s2241
        %2243 = vst.msk [vmem:[%s2242] sm:$0xff] %vm2237, 2147483647
        %2244 = xla_tuple %2240, %2243
        %v2245 = vrot.slane %v2224, 1
        %s2246 = vtos %v2245
        %s2247 = sshrl.u32 %s2246, 3
        %p2248 = scmp.lt.s32.totalorder %s2246, 0
        %s2249 = ssub.s32 0, %s2246
        %s2250 = scalar_select %p2248, %s2249, %s2246
        %s2251 = sand.u32 %s2250, 7
        %s2252 = ssub.s32 0, %s2251
        %s2253 = scalar_select %p2248, %s2252, %s2251
        %v2254 = vlaneseq
        %s2255 = smul.u32 %s2253, 128
        %v2256 = vstv %s2255
        %v2257 = vadd.s32 %v2256, 98
        %vm2258 = vcmp.eq.s32.totalorder %v2254, %v2257
        %s2259 = smul.addr %s2247, 8
        %s2260 = scalar_lea.vmem [#allocation15], %s2259
        %2261 = vst.msk [vmem:[%s2260] sm:$0xff] %vm2258, 2147483648
        %s2262 = smul.addr %s2247, 8
        %s2263 = scalar_lea.vmem [#allocation16], %s2262
        %2264 = vst.msk [vmem:[%s2263] sm:$0xff] %vm2258, 2147483647
        %2265 = xla_tuple %2261, %2264
        %v2266 = vrot.slane %v2245, 1
        %s2267 = vtos %v2266
        %s2268 = sshrl.u32 %s2267, 3
        %p2269 = scmp.lt.s32.totalorder %s2267, 0
        %s2270 = ssub.s32 0, %s2267
        %s2271 = scalar_select %p2269, %s2270, %s2267
        %s2272 = sand.u32 %s2271, 7
        %s2273 = ssub.s32 0, %s2272
        %s2274 = scalar_select %p2269, %s2273, %s2272
        %v2275 = vlaneseq
        %s2276 = smul.u32 %s2274, 128
        %v2277 = vstv %s2276
        %v2278 = vadd.s32 %v2277, 99
        %vm2279 = vcmp.eq.s32.totalorder %v2275, %v2278
        %s2280 = smul.addr %s2268, 8
        %s2281 = scalar_lea.vmem [#allocation15], %s2280
        %2282 = vst.msk [vmem:[%s2281] sm:$0xff] %vm2279, 2147483648
        %s2283 = smul.addr %s2268, 8
        %s2284 = scalar_lea.vmem [#allocation16], %s2283
        %2285 = vst.msk [vmem:[%s2284] sm:$0xff] %vm2279, 2147483647
        %2286 = xla_tuple %2282, %2285
        %v2287 = vrot.slane %v2266, 1
        %s2288 = vtos %v2287
        %s2289 = sshrl.u32 %s2288, 3
        %p2290 = scmp.lt.s32.totalorder %s2288, 0
        %s2291 = ssub.s32 0, %s2288
        %s2292 = scalar_select %p2290, %s2291, %s2288
        %s2293 = sand.u32 %s2292, 7
        %s2294 = ssub.s32 0, %s2293
        %s2295 = scalar_select %p2290, %s2294, %s2293
        %v2296 = vlaneseq
        %s2297 = smul.u32 %s2295, 128
        %v2298 = vstv %s2297
        %v2299 = vadd.s32 %v2298, 100
        %vm2300 = vcmp.eq.s32.totalorder %v2296, %v2299
        %s2301 = smul.addr %s2289, 8
        %s2302 = scalar_lea.vmem [#allocation15], %s2301
        %2303 = vst.msk [vmem:[%s2302] sm:$0xff] %vm2300, 2147483648
        %s2304 = smul.addr %s2289, 8
        %s2305 = scalar_lea.vmem [#allocation16], %s2304
        %2306 = vst.msk [vmem:[%s2305] sm:$0xff] %vm2300, 2147483647
        %2307 = xla_tuple %2303, %2306
        %v2308 = vrot.slane %v2287, 1
        %s2309 = vtos %v2308
        %s2310 = sshrl.u32 %s2309, 3
        %p2311 = scmp.lt.s32.totalorder %s2309, 0
        %s2312 = ssub.s32 0, %s2309
        %s2313 = scalar_select %p2311, %s2312, %s2309
        %s2314 = sand.u32 %s2313, 7
        %s2315 = ssub.s32 0, %s2314
        %s2316 = scalar_select %p2311, %s2315, %s2314
        %v2317 = vlaneseq
        %s2318 = smul.u32 %s2316, 128
        %v2319 = vstv %s2318
        %v2320 = vadd.s32 %v2319, 101
        %vm2321 = vcmp.eq.s32.totalorder %v2317, %v2320
        %s2322 = smul.addr %s2310, 8
        %s2323 = scalar_lea.vmem [#allocation15], %s2322
        %2324 = vst.msk [vmem:[%s2323] sm:$0xff] %vm2321, 2147483648
        %s2325 = smul.addr %s2310, 8
        %s2326 = scalar_lea.vmem [#allocation16], %s2325
        %2327 = vst.msk [vmem:[%s2326] sm:$0xff] %vm2321, 2147483647
        %2328 = xla_tuple %2324, %2327
        %v2329 = vrot.slane %v2308, 1
        %s2330 = vtos %v2329
        %s2331 = sshrl.u32 %s2330, 3
        %p2332 = scmp.lt.s32.totalorder %s2330, 0
        %s2333 = ssub.s32 0, %s2330
        %s2334 = scalar_select %p2332, %s2333, %s2330
        %s2335 = sand.u32 %s2334, 7
        %s2336 = ssub.s32 0, %s2335
        %s2337 = scalar_select %p2332, %s2336, %s2335
        %v2338 = vlaneseq
        %s2339 = smul.u32 %s2337, 128
        %v2340 = vstv %s2339
        %v2341 = vadd.s32 %v2340, 102
        %vm2342 = vcmp.eq.s32.totalorder %v2338, %v2341
        %s2343 = smul.addr %s2331, 8
        %s2344 = scalar_lea.vmem [#allocation15], %s2343
        %2345 = vst.msk [vmem:[%s2344] sm:$0xff] %vm2342, 2147483648
        %s2346 = smul.addr %s2331, 8
        %s2347 = scalar_lea.vmem [#allocation16], %s2346
        %2348 = vst.msk [vmem:[%s2347] sm:$0xff] %vm2342, 2147483647
        %2349 = xla_tuple %2345, %2348
        %v2350 = vrot.slane %v2329, 1
        %s2351 = vtos %v2350
        %s2352 = sshrl.u32 %s2351, 3
        %p2353 = scmp.lt.s32.totalorder %s2351, 0
        %s2354 = ssub.s32 0, %s2351
        %s2355 = scalar_select %p2353, %s2354, %s2351
        %s2356 = sand.u32 %s2355, 7
        %s2357 = ssub.s32 0, %s2356
        %s2358 = scalar_select %p2353, %s2357, %s2356
        %v2359 = vlaneseq
        %s2360 = smul.u32 %s2358, 128
        %v2361 = vstv %s2360
        %v2362 = vadd.s32 %v2361, 103
        %vm2363 = vcmp.eq.s32.totalorder %v2359, %v2362
        %s2364 = smul.addr %s2352, 8
        %s2365 = scalar_lea.vmem [#allocation15], %s2364
        %2366 = vst.msk [vmem:[%s2365] sm:$0xff] %vm2363, 2147483648
        %s2367 = smul.addr %s2352, 8
        %s2368 = scalar_lea.vmem [#allocation16], %s2367
        %2369 = vst.msk [vmem:[%s2368] sm:$0xff] %vm2363, 2147483647
        %2370 = xla_tuple %2366, %2369
        %v2371 = vrot.slane %v2350, 1
        %s2372 = vtos %v185
        %s2373 = sshrl.u32 %s2372, 3
        %p2374 = scmp.lt.s32.totalorder %s2372, 0
        %s2375 = ssub.s32 0, %s2372
        %s2376 = scalar_select %p2374, %s2375, %s2372
        %s2377 = sand.u32 %s2376, 7
        %s2378 = ssub.s32 0, %s2377
        %s2379 = scalar_select %p2374, %s2378, %s2377
        %v2380 = vlaneseq
        %s2381 = smul.u32 %s2379, 128
        %v2382 = vstv %s2381
        %v2383 = vadd.s32 %v2382, 104
        %vm2384 = vcmp.eq.s32.totalorder %v2380, %v2383
        %s2385 = smul.addr %s2373, 8
        %s2386 = scalar_lea.vmem [#allocation15], %s2385
        %2387 = vst.msk [vmem:[%s2386] sm:$0xff] %vm2384, 2147483648
        %s2388 = smul.addr %s2373, 8
        %s2389 = scalar_lea.vmem [#allocation16], %s2388
        %2390 = vst.msk [vmem:[%s2389] sm:$0xff] %vm2384, 2147483647
        %2391 = xla_tuple %2387, %2390
        %v2392 = vrot.slane %v185, 1
        %s2393 = vtos %v2392
        %s2394 = sshrl.u32 %s2393, 3
        %p2395 = scmp.lt.s32.totalorder %s2393, 0
        %s2396 = ssub.s32 0, %s2393
        %s2397 = scalar_select %p2395, %s2396, %s2393
        %s2398 = sand.u32 %s2397, 7
        %s2399 = ssub.s32 0, %s2398
        %s2400 = scalar_select %p2395, %s2399, %s2398
        %v2401 = vlaneseq
        %s2402 = smul.u32 %s2400, 128
        %v2403 = vstv %s2402
        %v2404 = vadd.s32 %v2403, 105
        %vm2405 = vcmp.eq.s32.totalorder %v2401, %v2404
        %s2406 = smul.addr %s2394, 8
        %s2407 = scalar_lea.vmem [#allocation15], %s2406
        %2408 = vst.msk [vmem:[%s2407] sm:$0xff] %vm2405, 2147483648
        %s2409 = smul.addr %s2394, 8
        %s2410 = scalar_lea.vmem [#allocation16], %s2409
        %2411 = vst.msk [vmem:[%s2410] sm:$0xff] %vm2405, 2147483647
        %2412 = xla_tuple %2408, %2411
        %v2413 = vrot.slane %v2392, 1
        %s2414 = vtos %v2413
        %s2415 = sshrl.u32 %s2414, 3
        %p2416 = scmp.lt.s32.totalorder %s2414, 0
        %s2417 = ssub.s32 0, %s2414
        %s2418 = scalar_select %p2416, %s2417, %s2414
        %s2419 = sand.u32 %s2418, 7
        %s2420 = ssub.s32 0, %s2419
        %s2421 = scalar_select %p2416, %s2420, %s2419
        %v2422 = vlaneseq
        %s2423 = smul.u32 %s2421, 128
        %v2424 = vstv %s2423
        %v2425 = vadd.s32 %v2424, 106
        %vm2426 = vcmp.eq.s32.totalorder %v2422, %v2425
        %s2427 = smul.addr %s2415, 8
        %s2428 = scalar_lea.vmem [#allocation15], %s2427
        %2429 = vst.msk [vmem:[%s2428] sm:$0xff] %vm2426, 2147483648
        %s2430 = smul.addr %s2415, 8
        %s2431 = scalar_lea.vmem [#allocation16], %s2430
        %2432 = vst.msk [vmem:[%s2431] sm:$0xff] %vm2426, 2147483647
        %2433 = xla_tuple %2429, %2432
        %v2434 = vrot.slane %v2413, 1
        %s2435 = vtos %v2434
        %s2436 = sshrl.u32 %s2435, 3
        %p2437 = scmp.lt.s32.totalorder %s2435, 0
        %s2438 = ssub.s32 0, %s2435
        %s2439 = scalar_select %p2437, %s2438, %s2435
        %s2440 = sand.u32 %s2439, 7
        %s2441 = ssub.s32 0, %s2440
        %s2442 = scalar_select %p2437, %s2441, %s2440
        %v2443 = vlaneseq
        %s2444 = smul.u32 %s2442, 128
        %v2445 = vstv %s2444
        %v2446 = vadd.s32 %v2445, 107
        %vm2447 = vcmp.eq.s32.totalorder %v2443, %v2446
        %s2448 = smul.addr %s2436, 8
        %s2449 = scalar_lea.vmem [#allocation15], %s2448
        %2450 = vst.msk [vmem:[%s2449] sm:$0xff] %vm2447, 2147483648
        %s2451 = smul.addr %s2436, 8
        %s2452 = scalar_lea.vmem [#allocation16], %s2451
        %2453 = vst.msk [vmem:[%s2452] sm:$0xff] %vm2447, 2147483647
        %2454 = xla_tuple %2450, %2453
        %v2455 = vrot.slane %v2434, 1
        %s2456 = vtos %v2455
        %s2457 = sshrl.u32 %s2456, 3
        %p2458 = scmp.lt.s32.totalorder %s2456, 0
        %s2459 = ssub.s32 0, %s2456
        %s2460 = scalar_select %p2458, %s2459, %s2456
        %s2461 = sand.u32 %s2460, 7
        %s2462 = ssub.s32 0, %s2461
        %s2463 = scalar_select %p2458, %s2462, %s2461
        %v2464 = vlaneseq
        %s2465 = smul.u32 %s2463, 128
        %v2466 = vstv %s2465
        %v2467 = vadd.s32 %v2466, 108
        %vm2468 = vcmp.eq.s32.totalorder %v2464, %v2467
        %s2469 = smul.addr %s2457, 8
        %s2470 = scalar_lea.vmem [#allocation15], %s2469
        %2471 = vst.msk [vmem:[%s2470] sm:$0xff] %vm2468, 2147483648
        %s2472 = smul.addr %s2457, 8
        %s2473 = scalar_lea.vmem [#allocation16], %s2472
        %2474 = vst.msk [vmem:[%s2473] sm:$0xff] %vm2468, 2147483647
        %2475 = xla_tuple %2471, %2474
        %v2476 = vrot.slane %v2455, 1
        %s2477 = vtos %v2476
        %s2478 = sshrl.u32 %s2477, 3
        %p2479 = scmp.lt.s32.totalorder %s2477, 0
        %s2480 = ssub.s32 0, %s2477
        %s2481 = scalar_select %p2479, %s2480, %s2477
        %s2482 = sand.u32 %s2481, 7
        %s2483 = ssub.s32 0, %s2482
        %s2484 = scalar_select %p2479, %s2483, %s2482
        %v2485 = vlaneseq
        %s2486 = smul.u32 %s2484, 128
        %v2487 = vstv %s2486
        %v2488 = vadd.s32 %v2487, 109
        %vm2489 = vcmp.eq.s32.totalorder %v2485, %v2488
        %s2490 = smul.addr %s2478, 8
        %s2491 = scalar_lea.vmem [#allocation15], %s2490
        %2492 = vst.msk [vmem:[%s2491] sm:$0xff] %vm2489, 2147483648
        %s2493 = smul.addr %s2478, 8
        %s2494 = scalar_lea.vmem [#allocation16], %s2493
        %2495 = vst.msk [vmem:[%s2494] sm:$0xff] %vm2489, 2147483647
        %2496 = xla_tuple %2492, %2495
        %v2497 = vrot.slane %v2476, 1
        %s2498 = vtos %v2497
        %s2499 = sshrl.u32 %s2498, 3
        %p2500 = scmp.lt.s32.totalorder %s2498, 0
        %s2501 = ssub.s32 0, %s2498
        %s2502 = scalar_select %p2500, %s2501, %s2498
        %s2503 = sand.u32 %s2502, 7
        %s2504 = ssub.s32 0, %s2503
        %s2505 = scalar_select %p2500, %s2504, %s2503
        %v2506 = vlaneseq
        %s2507 = smul.u32 %s2505, 128
        %v2508 = vstv %s2507
        %v2509 = vadd.s32 %v2508, 110
        %vm2510 = vcmp.eq.s32.totalorder %v2506, %v2509
        %s2511 = smul.addr %s2499, 8
        %s2512 = scalar_lea.vmem [#allocation15], %s2511
        %2513 = vst.msk [vmem:[%s2512] sm:$0xff] %vm2510, 2147483648
        %s2514 = smul.addr %s2499, 8
        %s2515 = scalar_lea.vmem [#allocation16], %s2514
        %2516 = vst.msk [vmem:[%s2515] sm:$0xff] %vm2510, 2147483647
        %2517 = xla_tuple %2513, %2516
        %v2518 = vrot.slane %v2497, 1
        %s2519 = vtos %v2518
        %s2520 = sshrl.u32 %s2519, 3
        %p2521 = scmp.lt.s32.totalorder %s2519, 0
        %s2522 = ssub.s32 0, %s2519
        %s2523 = scalar_select %p2521, %s2522, %s2519
        %s2524 = sand.u32 %s2523, 7
        %s2525 = ssub.s32 0, %s2524
        %s2526 = scalar_select %p2521, %s2525, %s2524
        %v2527 = vlaneseq
        %s2528 = smul.u32 %s2526, 128
        %v2529 = vstv %s2528
        %v2530 = vadd.s32 %v2529, 111
        %vm2531 = vcmp.eq.s32.totalorder %v2527, %v2530
        %s2532 = smul.addr %s2520, 8
        %s2533 = scalar_lea.vmem [#allocation15], %s2532
        %2534 = vst.msk [vmem:[%s2533] sm:$0xff] %vm2531, 2147483648
        %s2535 = smul.addr %s2520, 8
        %s2536 = scalar_lea.vmem [#allocation16], %s2535
        %2537 = vst.msk [vmem:[%s2536] sm:$0xff] %vm2531, 2147483647
        %2538 = xla_tuple %2534, %2537
        %v2539 = vrot.slane %v2518, 1
        %s2540 = vtos %v186
        %s2541 = sshrl.u32 %s2540, 3
        %p2542 = scmp.lt.s32.totalorder %s2540, 0
        %s2543 = ssub.s32 0, %s2540
        %s2544 = scalar_select %p2542, %s2543, %s2540
        %s2545 = sand.u32 %s2544, 7
        %s2546 = ssub.s32 0, %s2545
        %s2547 = scalar_select %p2542, %s2546, %s2545
        %v2548 = vlaneseq
        %s2549 = smul.u32 %s2547, 128
        %v2550 = vstv %s2549
        %v2551 = vadd.s32 %v2550, 112
        %vm2552 = vcmp.eq.s32.totalorder %v2548, %v2551
        %s2553 = smul.addr %s2541, 8
        %s2554 = scalar_lea.vmem [#allocation15], %s2553
        %2555 = vst.msk [vmem:[%s2554] sm:$0xff] %vm2552, 2147483648
        %s2556 = smul.addr %s2541, 8
        %s2557 = scalar_lea.vmem [#allocation16], %s2556
        %2558 = vst.msk [vmem:[%s2557] sm:$0xff] %vm2552, 2147483647
        %2559 = xla_tuple %2555, %2558
        %v2560 = vrot.slane %v186, 1
        %s2561 = vtos %v2560
        %s2562 = sshrl.u32 %s2561, 3
        %p2563 = scmp.lt.s32.totalorder %s2561, 0
        %s2564 = ssub.s32 0, %s2561
        %s2565 = scalar_select %p2563, %s2564, %s2561
        %s2566 = sand.u32 %s2565, 7
        %s2567 = ssub.s32 0, %s2566
        %s2568 = scalar_select %p2563, %s2567, %s2566
        %v2569 = vlaneseq
        %s2570 = smul.u32 %s2568, 128
        %v2571 = vstv %s2570
        %v2572 = vadd.s32 %v2571, 113
        %vm2573 = vcmp.eq.s32.totalorder %v2569, %v2572
        %s2574 = smul.addr %s2562, 8
        %s2575 = scalar_lea.vmem [#allocation15], %s2574
        %2576 = vst.msk [vmem:[%s2575] sm:$0xff] %vm2573, 2147483648
        %s2577 = smul.addr %s2562, 8
        %s2578 = scalar_lea.vmem [#allocation16], %s2577
        %2579 = vst.msk [vmem:[%s2578] sm:$0xff] %vm2573, 2147483647
        %2580 = xla_tuple %2576, %2579
        %v2581 = vrot.slane %v2560, 1
        %s2582 = vtos %v2581
        %s2583 = sshrl.u32 %s2582, 3
        %p2584 = scmp.lt.s32.totalorder %s2582, 0
        %s2585 = ssub.s32 0, %s2582
        %s2586 = scalar_select %p2584, %s2585, %s2582
        %s2587 = sand.u32 %s2586, 7
        %s2588 = ssub.s32 0, %s2587
        %s2589 = scalar_select %p2584, %s2588, %s2587
        %v2590 = vlaneseq
        %s2591 = smul.u32 %s2589, 128
        %v2592 = vstv %s2591
        %v2593 = vadd.s32 %v2592, 114
        %vm2594 = vcmp.eq.s32.totalorder %v2590, %v2593
        %s2595 = smul.addr %s2583, 8
        %s2596 = scalar_lea.vmem [#allocation15], %s2595
        %2597 = vst.msk [vmem:[%s2596] sm:$0xff] %vm2594, 2147483648
        %s2598 = smul.addr %s2583, 8
        %s2599 = scalar_lea.vmem [#allocation16], %s2598
        %2600 = vst.msk [vmem:[%s2599] sm:$0xff] %vm2594, 2147483647
        %2601 = xla_tuple %2597, %2600
        %v2602 = vrot.slane %v2581, 1
        %s2603 = vtos %v2602
        %s2604 = sshrl.u32 %s2603, 3
        %p2605 = scmp.lt.s32.totalorder %s2603, 0
        %s2606 = ssub.s32 0, %s2603
        %s2607 = scalar_select %p2605, %s2606, %s2603
        %s2608 = sand.u32 %s2607, 7
        %s2609 = ssub.s32 0, %s2608
        %s2610 = scalar_select %p2605, %s2609, %s2608
        %v2611 = vlaneseq
        %s2612 = smul.u32 %s2610, 128
        %v2613 = vstv %s2612
        %v2614 = vadd.s32 %v2613, 115
        %vm2615 = vcmp.eq.s32.totalorder %v2611, %v2614
        %s2616 = smul.addr %s2604, 8
        %s2617 = scalar_lea.vmem [#allocation15], %s2616
        %2618 = vst.msk [vmem:[%s2617] sm:$0xff] %vm2615, 2147483648
        %s2619 = smul.addr %s2604, 8
        %s2620 = scalar_lea.vmem [#allocation16], %s2619
        %2621 = vst.msk [vmem:[%s2620] sm:$0xff] %vm2615, 2147483647
        %2622 = xla_tuple %2618, %2621
        %v2623 = vrot.slane %v2602, 1
        %s2624 = vtos %v2623
        %s2625 = sshrl.u32 %s2624, 3
        %p2626 = scmp.lt.s32.totalorder %s2624, 0
        %s2627 = ssub.s32 0, %s2624
        %s2628 = scalar_select %p2626, %s2627, %s2624
        %s2629 = sand.u32 %s2628, 7
        %s2630 = ssub.s32 0, %s2629
        %s2631 = scalar_select %p2626, %s2630, %s2629
        %v2632 = vlaneseq
        %s2633 = smul.u32 %s2631, 128
        %v2634 = vstv %s2633
        %v2635 = vadd.s32 %v2634, 116
        %vm2636 = vcmp.eq.s32.totalorder %v2632, %v2635
        %s2637 = smul.addr %s2625, 8
        %s2638 = scalar_lea.vmem [#allocation15], %s2637
        %2639 = vst.msk [vmem:[%s2638] sm:$0xff] %vm2636, 2147483648
        %s2640 = smul.addr %s2625, 8
        %s2641 = scalar_lea.vmem [#allocation16], %s2640
        %2642 = vst.msk [vmem:[%s2641] sm:$0xff] %vm2636, 2147483647
        %2643 = xla_tuple %2639, %2642
        %v2644 = vrot.slane %v2623, 1
        %s2645 = vtos %v2644
        %s2646 = sshrl.u32 %s2645, 3
        %p2647 = scmp.lt.s32.totalorder %s2645, 0
        %s2648 = ssub.s32 0, %s2645
        %s2649 = scalar_select %p2647, %s2648, %s2645
        %s2650 = sand.u32 %s2649, 7
        %s2651 = ssub.s32 0, %s2650
        %s2652 = scalar_select %p2647, %s2651, %s2650
        %v2653 = vlaneseq
        %s2654 = smul.u32 %s2652, 128
        %v2655 = vstv %s2654
        %v2656 = vadd.s32 %v2655, 117
        %vm2657 = vcmp.eq.s32.totalorder %v2653, %v2656
        %s2658 = smul.addr %s2646, 8
        %s2659 = scalar_lea.vmem [#allocation15], %s2658
        %2660 = vst.msk [vmem:[%s2659] sm:$0xff] %vm2657, 2147483648
        %s2661 = smul.addr %s2646, 8
        %s2662 = scalar_lea.vmem [#allocation16], %s2661
        %2663 = vst.msk [vmem:[%s2662] sm:$0xff] %vm2657, 2147483647
        %2664 = xla_tuple %2660, %2663
        %v2665 = vrot.slane %v2644, 1
        %s2666 = vtos %v2665
        %s2667 = sshrl.u32 %s2666, 3
        %p2668 = scmp.lt.s32.totalorder %s2666, 0
        %s2669 = ssub.s32 0, %s2666
        %s2670 = scalar_select %p2668, %s2669, %s2666
        %s2671 = sand.u32 %s2670, 7
        %s2672 = ssub.s32 0, %s2671
        %s2673 = scalar_select %p2668, %s2672, %s2671
        %v2674 = vlaneseq
        %s2675 = smul.u32 %s2673, 128
        %v2676 = vstv %s2675
        %v2677 = vadd.s32 %v2676, 118
        %vm2678 = vcmp.eq.s32.totalorder %v2674, %v2677
        %s2679 = smul.addr %s2667, 8
        %s2680 = scalar_lea.vmem [#allocation15], %s2679
        %2681 = vst.msk [vmem:[%s2680] sm:$0xff] %vm2678, 2147483648
        %s2682 = smul.addr %s2667, 8
        %s2683 = scalar_lea.vmem [#allocation16], %s2682
        %2684 = vst.msk [vmem:[%s2683] sm:$0xff] %vm2678, 2147483647
        %2685 = xla_tuple %2681, %2684
        %v2686 = vrot.slane %v2665, 1
        %s2687 = vtos %v2686
        %s2688 = sshrl.u32 %s2687, 3
        %p2689 = scmp.lt.s32.totalorder %s2687, 0
        %s2690 = ssub.s32 0, %s2687
        %s2691 = scalar_select %p2689, %s2690, %s2687
        %s2692 = sand.u32 %s2691, 7
        %s2693 = ssub.s32 0, %s2692
        %s2694 = scalar_select %p2689, %s2693, %s2692
        %v2695 = vlaneseq
        %s2696 = smul.u32 %s2694, 128
        %v2697 = vstv %s2696
        %v2698 = vadd.s32 %v2697, 119
        %vm2699 = vcmp.eq.s32.totalorder %v2695, %v2698
        %s2700 = smul.addr %s2688, 8
        %s2701 = scalar_lea.vmem [#allocation15], %s2700
        %2702 = vst.msk [vmem:[%s2701] sm:$0xff] %vm2699, 2147483648
        %s2703 = smul.addr %s2688, 8
        %s2704 = scalar_lea.vmem [#allocation16], %s2703
        %2705 = vst.msk [vmem:[%s2704] sm:$0xff] %vm2699, 2147483647
        %2706 = xla_tuple %2702, %2705
        %v2707 = vrot.slane %v2686, 1
        %s2708 = vtos %v187
        %s2709 = sshrl.u32 %s2708, 3
        %p2710 = scmp.lt.s32.totalorder %s2708, 0
        %s2711 = ssub.s32 0, %s2708
        %s2712 = scalar_select %p2710, %s2711, %s2708
        %s2713 = sand.u32 %s2712, 7
        %s2714 = ssub.s32 0, %s2713
        %s2715 = scalar_select %p2710, %s2714, %s2713
        %v2716 = vlaneseq
        %s2717 = smul.u32 %s2715, 128
        %v2718 = vstv %s2717
        %v2719 = vadd.s32 %v2718, 120
        %vm2720 = vcmp.eq.s32.totalorder %v2716, %v2719
        %s2721 = smul.addr %s2709, 8
        %s2722 = scalar_lea.vmem [#allocation15], %s2721
        %2723 = vst.msk [vmem:[%s2722] sm:$0xff] %vm2720, 2147483648
        %s2724 = smul.addr %s2709, 8
        %s2725 = scalar_lea.vmem [#allocation16], %s2724
        %2726 = vst.msk [vmem:[%s2725] sm:$0xff] %vm2720, 2147483647
        %2727 = xla_tuple %2723, %2726
        %v2728 = vrot.slane %v187, 1
        %s2729 = vtos %v2728
        %s2730 = sshrl.u32 %s2729, 3
        %p2731 = scmp.lt.s32.totalorder %s2729, 0
        %s2732 = ssub.s32 0, %s2729
        %s2733 = scalar_select %p2731, %s2732, %s2729
        %s2734 = sand.u32 %s2733, 7
        %s2735 = ssub.s32 0, %s2734
        %s2736 = scalar_select %p2731, %s2735, %s2734
        %v2737 = vlaneseq
        %s2738 = smul.u32 %s2736, 128
        %v2739 = vstv %s2738
        %v2740 = vadd.s32 %v2739, 121
        %vm2741 = vcmp.eq.s32.totalorder %v2737, %v2740
        %s2742 = smul.addr %s2730, 8
        %s2743 = scalar_lea.vmem [#allocation15], %s2742
        %2744 = vst.msk [vmem:[%s2743] sm:$0xff] %vm2741, 2147483648
        %s2745 = smul.addr %s2730, 8
        %s2746 = scalar_lea.vmem [#allocation16], %s2745
        %2747 = vst.msk [vmem:[%s2746] sm:$0xff] %vm2741, 2147483647
        %2748 = xla_tuple %2744, %2747
        %v2749 = vrot.slane %v2728, 1
        %s2750 = vtos %v2749
        %s2751 = sshrl.u32 %s2750, 3
        %p2752 = scmp.lt.s32.totalorder %s2750, 0
        %s2753 = ssub.s32 0, %s2750
        %s2754 = scalar_select %p2752, %s2753, %s2750
        %s2755 = sand.u32 %s2754, 7
        %s2756 = ssub.s32 0, %s2755
        %s2757 = scalar_select %p2752, %s2756, %s2755
        %v2758 = vlaneseq
        %s2759 = smul.u32 %s2757, 128
        %v2760 = vstv %s2759
        %v2761 = vadd.s32 %v2760, 122
        %vm2762 = vcmp.eq.s32.totalorder %v2758, %v2761
        %s2763 = smul.addr %s2751, 8
        %s2764 = scalar_lea.vmem [#allocation15], %s2763
        %2765 = vst.msk [vmem:[%s2764] sm:$0xff] %vm2762, 2147483648
        %s2766 = smul.addr %s2751, 8
        %s2767 = scalar_lea.vmem [#allocation16], %s2766
        %2768 = vst.msk [vmem:[%s2767] sm:$0xff] %vm2762, 2147483647
        %2769 = xla_tuple %2765, %2768
        %v2770 = vrot.slane %v2749, 1
        %s2771 = vtos %v2770
        %s2772 = sshrl.u32 %s2771, 3
        %p2773 = scmp.lt.s32.totalorder %s2771, 0
        %s2774 = ssub.s32 0, %s2771
        %s2775 = scalar_select %p2773, %s2774, %s2771
        %s2776 = sand.u32 %s2775, 7
        %s2777 = ssub.s32 0, %s2776
        %s2778 = scalar_select %p2773, %s2777, %s2776
        %v2779 = vlaneseq
        %s2780 = smul.u32 %s2778, 128
        %v2781 = vstv %s2780
        %v2782 = vadd.s32 %v2781, 123
        %vm2783 = vcmp.eq.s32.totalorder %v2779, %v2782
        %s2784 = smul.addr %s2772, 8
        %s2785 = scalar_lea.vmem [#allocation15], %s2784
        %2786 = vst.msk [vmem:[%s2785] sm:$0xff] %vm2783, 2147483648
        %s2787 = smul.addr %s2772, 8
        %s2788 = scalar_lea.vmem [#allocation16], %s2787
        %2789 = vst.msk [vmem:[%s2788] sm:$0xff] %vm2783, 2147483647
        %2790 = xla_tuple %2786, %2789
        %v2791 = vrot.slane %v2770, 1
        %s2792 = vtos %v2791
        %s2793 = sshrl.u32 %s2792, 3
        %p2794 = scmp.lt.s32.totalorder %s2792, 0
        %s2795 = ssub.s32 0, %s2792
        %s2796 = scalar_select %p2794, %s2795, %s2792
        %s2797 = sand.u32 %s2796, 7
        %s2798 = ssub.s32 0, %s2797
        %s2799 = scalar_select %p2794, %s2798, %s2797
        %v2800 = vlaneseq
        %s2801 = smul.u32 %s2799, 128
        %v2802 = vstv %s2801
        %v2803 = vadd.s32 %v2802, 124
        %vm2804 = vcmp.eq.s32.totalorder %v2800, %v2803
        %s2805 = smul.addr %s2793, 8
        %s2806 = scalar_lea.vmem [#allocation15], %s2805
        %2807 = vst.msk [vmem:[%s2806] sm:$0xff] %vm2804, 2147483648
        %s2808 = smul.addr %s2793, 8
        %s2809 = scalar_lea.vmem [#allocation16], %s2808
        %2810 = vst.msk [vmem:[%s2809] sm:$0xff] %vm2804, 2147483647
        %2811 = xla_tuple %2807, %2810
        %v2812 = vrot.slane %v2791, 1
        %s2813 = vtos %v2812
        %s2814 = sshrl.u32 %s2813, 3
        %p2815 = scmp.lt.s32.totalorder %s2813, 0
        %s2816 = ssub.s32 0, %s2813
        %s2817 = scalar_select %p2815, %s2816, %s2813
        %s2818 = sand.u32 %s2817, 7
        %s2819 = ssub.s32 0, %s2818
        %s2820 = scalar_select %p2815, %s2819, %s2818
        %v2821 = vlaneseq
        %s2822 = smul.u32 %s2820, 128
        %v2823 = vstv %s2822
        %v2824 = vadd.s32 %v2823, 125
        %vm2825 = vcmp.eq.s32.totalorder %v2821, %v2824
        %s2826 = smul.addr %s2814, 8
        %s2827 = scalar_lea.vmem [#allocation15], %s2826
        %2828 = vst.msk [vmem:[%s2827] sm:$0xff] %vm2825, 2147483648
        %s2829 = smul.addr %s2814, 8
        %s2830 = scalar_lea.vmem [#allocation16], %s2829
        %2831 = vst.msk [vmem:[%s2830] sm:$0xff] %vm2825, 2147483647
        %2832 = xla_tuple %2828, %2831
        %v2833 = vrot.slane %v2812, 1
        %s2834 = vtos %v2833
        %s2835 = sshrl.u32 %s2834, 3
        %p2836 = scmp.lt.s32.totalorder %s2834, 0
        %s2837 = ssub.s32 0, %s2834
        %s2838 = scalar_select %p2836, %s2837, %s2834
        %s2839 = sand.u32 %s2838, 7
        %s2840 = ssub.s32 0, %s2839
        %s2841 = scalar_select %p2836, %s2840, %s2839
        %v2842 = vlaneseq
        %s2843 = smul.u32 %s2841, 128
        %v2844 = vstv %s2843
        %v2845 = vadd.s32 %v2844, 126
        %vm2846 = vcmp.eq.s32.totalorder %v2842, %v2845
        %s2847 = smul.addr %s2835, 8
        %s2848 = scalar_lea.vmem [#allocation15], %s2847
        %2849 = vst.msk [vmem:[%s2848] sm:$0xff] %vm2846, 2147483648
        %s2850 = smul.addr %s2835, 8
        %s2851 = scalar_lea.vmem [#allocation16], %s2850
        %2852 = vst.msk [vmem:[%s2851] sm:$0xff] %vm2846, 2147483647
        %2853 = xla_tuple %2849, %2852
        %v2854 = vrot.slane %v2833, 1
        %s2855 = vtos %v2854
        %s2856 = sshrl.u32 %s2855, 3
        %p2857 = scmp.lt.s32.totalorder %s2855, 0
        %s2858 = ssub.s32 0, %s2855
        %s2859 = scalar_select %p2857, %s2858, %s2855
        %s2860 = sand.u32 %s2859, 7
        %s2861 = ssub.s32 0, %s2860
        %s2862 = scalar_select %p2857, %s2861, %s2860
        %v2863 = vlaneseq
        %s2864 = smul.u32 %s2862, 128
        %v2865 = vstv %s2864
        %v2866 = vadd.s32 %v2865, 127
        %vm2867 = vcmp.eq.s32.totalorder %v2863, %v2866
        %s2868 = smul.addr %s2856, 8
        %s2869 = scalar_lea.vmem [#allocation15], %s2868
        %2870 = vst.msk [vmem:[%s2869] sm:$0xff] %vm2867, 2147483648
        %s2871 = smul.addr %s2856, 8
        %s2872 = scalar_lea.vmem [#allocation16], %s2871
        %2873 = vst.msk [vmem:[%s2872] sm:$0xff] %vm2867, 2147483647
        %2874 = xla_tuple %2870, %2873
        %v2875 = vrot.slane %v2854, 1
      $region45: #{custom-call} parent=2 // loop_footer
        %s70 = sadd.s32 1, %s66
      $region46: #{custom-call} parent=2 // loop_footer_branch
        %65 = sbr.rel target = $region42
      $region47: #{custom-call} parent=2 // loop_exit
        _
      %s2876 = scalar_lea.vmem [#allocation12], 7
      %v2877 = vld [vmem:[%s2876] ss:$-1 sm:$0xff]
      %s2878 = scalar_lea.vmem [#allocation12], 7
      %v2879 = vld [vmem:[%s2878] ss:$-1 sm:$0xff]
      %2880 = vst [vmem:[#allocation12] sm:$0xff] %v2879
      %2881 = vst [vmem:[#allocation12] sm:$0xff] %v2877
      %s2882 = scalar_lea.vmem [#allocation14], 7
      %v2883 = vld [vmem:[%s2882] ss:$-1 sm:$0xff]
      %s2884 = scalar_lea.vmem [#allocation14], 7
      %v2885 = vld [vmem:[%s2884] ss:$-1 sm:$0xff]
      %2886 = vst [vmem:[#allocation14] sm:$0xff] %v2885
      %2887 = vst [vmem:[#allocation14] sm:$0xff] %v2883
      %2888 = xla_tuple %2881, %2887
      %v2889 = vld [vmem:[#allocation11] sm:$0xff]
      %v2890 = vld [vmem:[#allocation13] sm:$0xff]
      %2891 = xla_tuple %v2889, %v2890
      %v2892 = vld [vmem:[#allocation12] sm:$0xff]
      %v2893 = vld [vmem:[#allocation14] sm:$0xff]
      %2894 = xla_tuple %v2892, %v2893
      %vm2895 = vcmp.gt.s32.totalorder %v2889, %v2892
      %vm2896 = vcmp.eq.s32.totalorder %v2889, %v2892
      %vm2897 = vcmp.lt.s32.totalorder %v2890, %v2893
      %vm2898 = vmand %vm2896, %vm2897
      %vm2899 = vmor %vm2895, %vm2898
      %v2900 = vsel %vm2899, %v2889, %v2892
      %2901 = vst [vmem:[#allocation11] sm:$0xff] %v2900
      %v2902 = vsel %vm2899, %v2892, %v2889
      %2903 = vst [vmem:[#allocation12] sm:$0xff] %v2902
      %v2904 = vsel %vm2899, %v2890, %v2893
      %2905 = vst [vmem:[#allocation13] sm:$0xff] %v2904
      %v2906 = vsel %vm2899, %v2893, %v2890
      %2907 = vst [vmem:[#allocation14] sm:$0xff] %v2906
      %2908 = xla_tuple %2903, %2907
      %2909 = xla_tuple [#allocation11], [#allocation13]
      %v2910 = vld [vmem:[#allocation11] sm:$0xff]
      %v2911 = vld [vmem:[#allocation13] sm:$0xff]
      %2912 = xla_tuple %v2910, %v2911
      %v2914 = vunpack.c.l.s4 839939668
      %v2915 = vunpack.c.0.s8 %v2914
      %v2916 = vlaneseq
      %v2917 = vshrl.u32 %v2916, 7
      %v2918 = vsub.s32 %v2915, %v2917
      %v2919 = vrot.slane %v2910, %v2918
      %v2921 = vunpack.c.l.s4 839939668
      %v2922 = vunpack.c.0.s8 %v2921
      %v2923 = vlaneseq
      %v2924 = vshrl.u32 %v2923, 7
      %v2925 = vsub.s32 %v2922, %v2924
      %v2926 = vrot.slane %v2911, %v2925
      %2927 = xla_tuple %v2919, %v2926
      %vm2928 = vcmp.gt.s32.totalorder %v2910, %v2919
      %vm2929 = vcmp.eq.s32.totalorder %v2910, %v2919
      %vm2930 = vcmp.lt.s32.totalorder %v2911, %v2926
      %vm2931 = vmand %vm2929, %vm2930
      %vm2932 = vmor %vm2928, %vm2931
      %v2933 = vlaneseq
      %v2934 = vshrl.u32 %v2933, 7
      %v2935 = vand.u32 %v2934, 4
      %vm2936 = vcmp.ne.s32.totalorder %v2935, 0
      %vm2937 = vmxor %vm2932, %vm2936
      %v2938 = vsel %vm2937, %v2910, %v2919
      %v2939 = vsel %vm2937, %v2911, %v2926
      %2940 = xla_tuple %v2938, %v2939
      %v2942 = vunpack.c.l.s4 1417023538
      %v2943 = vunpack.c.0.s8 %v2942
      %v2944 = vlaneseq
      %v2945 = vshrl.u32 %v2944, 7
      %v2946 = vsub.s32 %v2943, %v2945
      %v2947 = vrot.slane %v2938, %v2946
      %v2949 = vunpack.c.l.s4 1417023538
      %v2950 = vunpack.c.0.s8 %v2949
      %v2951 = vlaneseq
      %v2952 = vshrl.u32 %v2951, 7
      %v2953 = vsub.s32 %v2950, %v2952
      %v2954 = vrot.slane %v2939, %v2953
      %2955 = xla_tuple %v2947, %v2954
      %vm2956 = vcmp.gt.s32.totalorder %v2938, %v2947
      %vm2957 = vcmp.eq.s32.totalorder %v2938, %v2947
      %vm2958 = vcmp.lt.s32.totalorder %v2939, %v2954
      %vm2959 = vmand %vm2957, %vm2958
      %vm2960 = vmor %vm2956, %vm2959
      %v2961 = vlaneseq
      %v2962 = vshrl.u32 %v2961, 7
      %v2963 = vand.u32 %v2962, 2
      %vm2964 = vcmp.ne.s32.totalorder %v2963, 0
      %vm2965 = vmxor %vm2960, %vm2964
      %v2966 = vsel %vm2965, %v2938, %v2947
      %v2967 = vsel %vm2965, %v2939, %v2954
      %2968 = xla_tuple %v2966, %v2967
      %v2970 = vunpack.c.l.s4 1732584193
      %v2971 = vunpack.c.0.s8 %v2970
      %v2972 = vlaneseq
      %v2973 = vshrl.u32 %v2972, 7
      %v2974 = vsub.s32 %v2971, %v2973
      %v2975 = vrot.slane %v2966, %v2974
      %v2977 = vunpack.c.l.s4 1732584193
      %v2978 = vunpack.c.0.s8 %v2977
      %v2979 = vlaneseq
      %v2980 = vshrl.u32 %v2979, 7
      %v2981 = vsub.s32 %v2978, %v2980
      %v2982 = vrot.slane %v2967, %v2981
      %2983 = xla_tuple %v2975, %v2982
      %vm2984 = vcmp.gt.s32.totalorder %v2966, %v2975
      %vm2985 = vcmp.eq.s32.totalorder %v2966, %v2975
      %vm2986 = vcmp.lt.s32.totalorder %v2967, %v2982
      %vm2987 = vmand %vm2985, %vm2986
      %vm2988 = vmor %vm2984, %vm2987
      %v2989 = vlaneseq
      %v2990 = vshrl.u32 %v2989, 7
      %v2991 = vand.u32 %v2990, 1
      %vm2992 = vcmp.ne.s32.totalorder %v2991, 0
      %vm2993 = vmxor %vm2988, %vm2992
      %v2994 = vsel %vm2993, %v2966, %v2975
      %v2995 = vsel %vm2993, %v2967, %v2982
      %2996 = xla_tuple %v2994, %v2995
      %2997 = vst [vmem:[#allocation11] sm:$0xff] %v2994
      %2998 = vst [vmem:[#allocation13] sm:$0xff] %v2995
      %2999 = xla_tuple %2997, %2998
      %v3000 = vld [vmem:[#allocation11] sm:$0xff]
      %v3001 = vld [vmem:[#allocation13] sm:$0xff]
      %3002 = xla_tuple %v3000, %v3001
      %v3004 = vunpack.c.l.s4 839939668
      %v3005 = vunpack.c.0.s8 %v3004
      %v3006 = vlaneseq
      %v3007 = vshrl.u32 %v3006, 7
      %v3008 = vsub.s32 %v3005, %v3007
      %v3009 = vrot.slane %v3000, %v3008
      %v3011 = vunpack.c.l.s4 839939668
      %v3012 = vunpack.c.0.s8 %v3011
      %v3013 = vlaneseq
      %v3014 = vshrl.u32 %v3013, 7
      %v3015 = vsub.s32 %v3012, %v3014
      %v3016 = vrot.slane %v3001, %v3015
      %3017 = xla_tuple %v3009, %v3016
      %vm3018 = vcmp.gt.s32.totalorder %v3000, %v3009
      %vm3019 = vcmp.eq.s32.totalorder %v3000, %v3009
      %vm3020 = vcmp.lt.s32.totalorder %v3001, %v3016
      %vm3021 = vmand %vm3019, %vm3020
      %vm3022 = vmor %vm3018, %vm3021
      %v3023 = vlaneseq
      %v3024 = vshrl.u32 %v3023, 7
      %v3025 = vand.u32 %v3024, 4
      %vm3026 = vcmp.ne.s32.totalorder %v3025, 0
      %vm3027 = vmxor %vm3022, %vm3026
      %v3028 = vsel %vm3027, %v3000, %v3009
      %v3029 = vsel %vm3027, %v3001, %v3016
      %3030 = xla_tuple %v3028, %v3029
      %v3032 = vunpack.c.l.s4 1417023538
      %v3033 = vunpack.c.0.s8 %v3032
      %v3034 = vlaneseq
      %v3035 = vshrl.u32 %v3034, 7
      %v3036 = vsub.s32 %v3033, %v3035
      %v3037 = vrot.slane %v3028, %v3036
      %v3039 = vunpack.c.l.s4 1417023538
      %v3040 = vunpack.c.0.s8 %v3039
      %v3041 = vlaneseq
      %v3042 = vshrl.u32 %v3041, 7
      %v3043 = vsub.s32 %v3040, %v3042
      %v3044 = vrot.slane %v3029, %v3043
      %3045 = xla_tuple %v3037, %v3044
      %vm3046 = vcmp.gt.s32.totalorder %v3028, %v3037
      %vm3047 = vcmp.eq.s32.totalorder %v3028, %v3037
      %vm3048 = vcmp.lt.s32.totalorder %v3029, %v3044
      %vm3049 = vmand %vm3047, %vm3048
      %vm3050 = vmor %vm3046, %vm3049
      %v3051 = vlaneseq
      %v3052 = vshrl.u32 %v3051, 7
      %v3053 = vand.u32 %v3052, 2
      %vm3054 = vcmp.ne.s32.totalorder %v3053, 0
      %vm3055 = vmxor %vm3050, %vm3054
      %v3056 = vsel %vm3055, %v3028, %v3037
      %v3057 = vsel %vm3055, %v3029, %v3044
      %3058 = xla_tuple %v3056, %v3057
      %v3060 = vunpack.c.l.s4 1732584193
      %v3061 = vunpack.c.0.s8 %v3060
      %v3062 = vlaneseq
      %v3063 = vshrl.u32 %v3062, 7
      %v3064 = vsub.s32 %v3061, %v3063
      %v3065 = vrot.slane %v3056, %v3064
      %v3067 = vunpack.c.l.s4 1732584193
      %v3068 = vunpack.c.0.s8 %v3067
      %v3069 = vlaneseq
      %v3070 = vshrl.u32 %v3069, 7
      %v3071 = vsub.s32 %v3068, %v3070
      %v3072 = vrot.slane %v3057, %v3071
      %3073 = xla_tuple %v3065, %v3072
      %vm3074 = vcmp.gt.s32.totalorder %v3056, %v3065
      %vm3075 = vcmp.eq.s32.totalorder %v3056, %v3065
      %vm3076 = vcmp.lt.s32.totalorder %v3057, %v3072
      %vm3077 = vmand %vm3075, %vm3076
      %vm3078 = vmor %vm3074, %vm3077
      %v3079 = vlaneseq
      %v3080 = vshrl.u32 %v3079, 7
      %v3081 = vand.u32 %v3080, 1
      %vm3082 = vcmp.ne.s32.totalorder %v3081, 0
      %vm3083 = vmxor %vm3078, %vm3082
      %v3084 = vsel %vm3083, %v3056, %v3065
      %v3085 = vsel %vm3083, %v3057, %v3072
      %3086 = xla_tuple %v3084, %v3085
      %3087 = vst [vmem:[#allocation11] sm:$0xff] %v3084
      %3088 = vst [vmem:[#allocation13] sm:$0xff] %v3085
      %3089 = xla_tuple %3087, %3088
      %3090 = xla_tuple [#allocation12], [#allocation14]
      %v3091 = vld [vmem:[#allocation12] sm:$0xff]
      %v3092 = vld [vmem:[#allocation14] sm:$0xff]
      %3093 = xla_tuple %v3091, %v3092
      %v3095 = vunpack.c.l.s4 839939668
      %v3096 = vunpack.c.0.s8 %v3095
      %v3097 = vlaneseq
      %v3098 = vshrl.u32 %v3097, 7
      %v3099 = vsub.s32 %v3096, %v3098
      %v3100 = vrot.slane %v3091, %v3099
      %v3102 = vunpack.c.l.s4 839939668
      %v3103 = vunpack.c.0.s8 %v3102
      %v3104 = vlaneseq
      %v3105 = vshrl.u32 %v3104, 7
      %v3106 = vsub.s32 %v3103, %v3105
      %v3107 = vrot.slane %v3092, %v3106
      %3108 = xla_tuple %v3100, %v3107
      %vm3109 = vcmp.gt.s32.totalorder %v3091, %v3100
      %vm3110 = vcmp.eq.s32.totalorder %v3091, %v3100
      %vm3111 = vcmp.lt.s32.totalorder %v3092, %v3107
      %vm3112 = vmand %vm3110, %vm3111
      %vm3113 = vmor %vm3109, %vm3112
      %v3114 = vlaneseq
      %v3115 = vshrl.u32 %v3114, 7
      %v3116 = vand.u32 %v3115, 4
      %vm3117 = vcmp.ne.s32.totalorder %v3116, 0
      %vm3118 = vmxor %vm3113, %vm3117
      %v3119 = vsel %vm3118, %v3091, %v3100
      %v3120 = vsel %vm3118, %v3092, %v3107
      %3121 = xla_tuple %v3119, %v3120
      %v3123 = vunpack.c.l.s4 1417023538
      %v3124 = vunpack.c.0.s8 %v3123
      %v3125 = vlaneseq
      %v3126 = vshrl.u32 %v3125, 7
      %v3127 = vsub.s32 %v3124, %v3126
      %v3128 = vrot.slane %v3119, %v3127
      %v3130 = vunpack.c.l.s4 1417023538
      %v3131 = vunpack.c.0.s8 %v3130
      %v3132 = vlaneseq
      %v3133 = vshrl.u32 %v3132, 7
      %v3134 = vsub.s32 %v3131, %v3133
      %v3135 = vrot.slane %v3120, %v3134
      %3136 = xla_tuple %v3128, %v3135
      %vm3137 = vcmp.gt.s32.totalorder %v3119, %v3128
      %vm3138 = vcmp.eq.s32.totalorder %v3119, %v3128
      %vm3139 = vcmp.lt.s32.totalorder %v3120, %v3135
      %vm3140 = vmand %vm3138, %vm3139
      %vm3141 = vmor %vm3137, %vm3140
      %v3142 = vlaneseq
      %v3143 = vshrl.u32 %v3142, 7
      %v3144 = vand.u32 %v3143, 2
      %vm3145 = vcmp.ne.s32.totalorder %v3144, 0
      %vm3146 = vmxor %vm3141, %vm3145
      %v3147 = vsel %vm3146, %v3119, %v3128
      %v3148 = vsel %vm3146, %v3120, %v3135
      %3149 = xla_tuple %v3147, %v3148
      %v3151 = vunpack.c.l.s4 1732584193
      %v3152 = vunpack.c.0.s8 %v3151
      %v3153 = vlaneseq
      %v3154 = vshrl.u32 %v3153, 7
      %v3155 = vsub.s32 %v3152, %v3154
      %v3156 = vrot.slane %v3147, %v3155
      %v3158 = vunpack.c.l.s4 1732584193
      %v3159 = vunpack.c.0.s8 %v3158
      %v3160 = vlaneseq
      %v3161 = vshrl.u32 %v3160, 7
      %v3162 = vsub.s32 %v3159, %v3161
      %v3163 = vrot.slane %v3148, %v3162
      %3164 = xla_tuple %v3156, %v3163
      %vm3165 = vcmp.gt.s32.totalorder %v3147, %v3156
      %vm3166 = vcmp.eq.s32.totalorder %v3147, %v3156
      %vm3167 = vcmp.lt.s32.totalorder %v3148, %v3163
      %vm3168 = vmand %vm3166, %vm3167
      %vm3169 = vmor %vm3165, %vm3168
      %v3170 = vlaneseq
      %v3171 = vshrl.u32 %v3170, 7
      %v3172 = vand.u32 %v3171, 1
      %vm3173 = vcmp.ne.s32.totalorder %v3172, 0
      %vm3174 = vmxor %vm3169, %vm3173
      %v3175 = vsel %vm3174, %v3147, %v3156
      %v3176 = vsel %vm3174, %v3148, %v3163
      %3177 = xla_tuple %v3175, %v3176
      %3178 = vst [vmem:[#allocation12] sm:$0xff] %v3175
      %3179 = vst [vmem:[#allocation14] sm:$0xff] %v3176
      %3180 = xla_tuple %3178, %3179
      %v3181 = vld [vmem:[#allocation12] sm:$0xff]
      %v3182 = vld [vmem:[#allocation14] sm:$0xff]
      %3183 = xla_tuple %v3181, %v3182
      %v3185 = vunpack.c.l.s4 839939668
      %v3186 = vunpack.c.0.s8 %v3185
      %v3187 = vlaneseq
      %v3188 = vshrl.u32 %v3187, 7
      %v3189 = vsub.s32 %v3186, %v3188
      %v3190 = vrot.slane %v3181, %v3189
      %v3192 = vunpack.c.l.s4 839939668
      %v3193 = vunpack.c.0.s8 %v3192
      %v3194 = vlaneseq
      %v3195 = vshrl.u32 %v3194, 7
      %v3196 = vsub.s32 %v3193, %v3195
      %v3197 = vrot.slane %v3182, %v3196
      %3198 = xla_tuple %v3190, %v3197
      %vm3199 = vcmp.gt.s32.totalorder %v3181, %v3190
      %vm3200 = vcmp.eq.s32.totalorder %v3181, %v3190
      %vm3201 = vcmp.lt.s32.totalorder %v3182, %v3197
      %vm3202 = vmand %vm3200, %vm3201
      %vm3203 = vmor %vm3199, %vm3202
      %v3204 = vlaneseq
      %v3205 = vshrl.u32 %v3204, 7
      %v3206 = vand.u32 %v3205, 4
      %vm3207 = vcmp.ne.s32.totalorder %v3206, 0
      %vm3208 = vmxor %vm3203, %vm3207
      %v3209 = vsel %vm3208, %v3181, %v3190
      %v3210 = vsel %vm3208, %v3182, %v3197
      %3211 = xla_tuple %v3209, %v3210
      %v3213 = vunpack.c.l.s4 1417023538
      %v3214 = vunpack.c.0.s8 %v3213
      %v3215 = vlaneseq
      %v3216 = vshrl.u32 %v3215, 7
      %v3217 = vsub.s32 %v3214, %v3216
      %v3218 = vrot.slane %v3209, %v3217
      %v3220 = vunpack.c.l.s4 1417023538
      %v3221 = vunpack.c.0.s8 %v3220
      %v3222 = vlaneseq
      %v3223 = vshrl.u32 %v3222, 7
      %v3224 = vsub.s32 %v3221, %v3223
      %v3225 = vrot.slane %v3210, %v3224
      %3226 = xla_tuple %v3218, %v3225
      %vm3227 = vcmp.gt.s32.totalorder %v3209, %v3218
      %vm3228 = vcmp.eq.s32.totalorder %v3209, %v3218
      %vm3229 = vcmp.lt.s32.totalorder %v3210, %v3225
      %vm3230 = vmand %vm3228, %vm3229
      %vm3231 = vmor %vm3227, %vm3230
      %v3232 = vlaneseq
      %v3233 = vshrl.u32 %v3232, 7
      %v3234 = vand.u32 %v3233, 2
      %vm3235 = vcmp.ne.s32.totalorder %v3234, 0
      %vm3236 = vmxor %vm3231, %vm3235
      %v3237 = vsel %vm3236, %v3209, %v3218
      %v3238 = vsel %vm3236, %v3210, %v3225
      %3239 = xla_tuple %v3237, %v3238
      %v3241 = vunpack.c.l.s4 1732584193
      %v3242 = vunpack.c.0.s8 %v3241
      %v3243 = vlaneseq
      %v3244 = vshrl.u32 %v3243, 7
      %v3245 = vsub.s32 %v3242, %v3244
      %v3246 = vrot.slane %v3237, %v3245
      %v3248 = vunpack.c.l.s4 1732584193
      %v3249 = vunpack.c.0.s8 %v3248
      %v3250 = vlaneseq
      %v3251 = vshrl.u32 %v3250, 7
      %v3252 = vsub.s32 %v3249, %v3251
      %v3253 = vrot.slane %v3238, %v3252
      %3254 = xla_tuple %v3246, %v3253
      %vm3255 = vcmp.gt.s32.totalorder %v3237, %v3246
      %vm3256 = vcmp.eq.s32.totalorder %v3237, %v3246
      %vm3257 = vcmp.lt.s32.totalorder %v3238, %v3253
      %vm3258 = vmand %vm3256, %vm3257
      %vm3259 = vmor %vm3255, %vm3258
      %v3260 = vlaneseq
      %v3261 = vshrl.u32 %v3260, 7
      %v3262 = vand.u32 %v3261, 1
      %vm3263 = vcmp.ne.s32.totalorder %v3262, 0
      %vm3264 = vmxor %vm3259, %vm3263
      %v3265 = vsel %vm3264, %v3237, %v3246
      %v3266 = vsel %vm3264, %v3238, %v3253
      %3267 = xla_tuple %v3265, %v3266
      %3268 = vst [vmem:[#allocation12] sm:$0xff] %v3265
      %3269 = vst [vmem:[#allocation14] sm:$0xff] %v3266
      %3270 = xla_tuple %3268, %3269
    %v3271 = vld [vmem:[#allocation11] sm:$0xff]
    %vm3272 = vcmp.lt.s32.totalorder %v3271, 0
    %v3273 = vsub.s32 2147483647, %v3271
    %v3274 = vsel %vm3272, %v3273, %v3271
    %3275 = vst [vmem:[#allocation11] sm:$0xff] %v3274
    %v3276 = vld [vmem:[#allocation11] sm:$0xff]
    %3277 = vst [vmem:[#allocation7] sm:$0xff] %v3276
    %v3278 = vld [vmem:[#allocation13] sm:$0xff]
    %3279 = vst [vmem:[#allocation9] sm:$0xff] %v3278
    %s3281 = sshllo.u32 0, 1
    %v3283 = vld [vmem:[#allocation7] sm:%s3281]
    %s3284 = sshllo.u32 0, 1
    %3285 = vst [vmem:[#allocation8] sm:%s3284] %v3283
    %s3287 = sshllo.u32 0, 1
    %v3289 = vld [vmem:[#allocation9] sm:%s3287]
    %s3290 = sshllo.u32 0, 1
    %3291 = vst [vmem:[#allocation10] sm:%s3290] %v3289
    // Predicated region
    $region48: #{custom-call} parent=1 // pred_check
      _
    $region49: #{custom-call} parent=1 // pred_check_branch
      %3293 = sbr.rel (0) target = $region51
    $region50: #{custom-call} parent=1 // pred_region
      // Predicated region
      $region52: #{custom-call} parent=50 // pred_check
        _
      $region53: #{custom-call} parent=50 // pred_check_branch
        %3295 = sbr.rel target = $region55
      $region54: #{custom-call} parent=50 // pred_region
        // Predicated region
        $region67: #{custom-call} parent=54 // pred_check
          _
        $region68: #{custom-call} parent=54 // pred_check_branch
          %3310 = sbr.rel (0) target = $region70
        $region69: #{custom-call} parent=54 // pred_region
          loop: start=0, step=1, limit=1
          $region71: #{custom-call} parent=69 // loop_pre_header
            _
          $region72: #{custom-call} parent=69 // loop_header
            %s3313 = sphi 0, %s3317
            %p3314 = scmp.ge.s32.totalorder %s3313, 1
            %s3318 = sphi [#allocation8], [#allocation8]
            %s3319 = sphi %s1, %s1
          $region73: #{custom-call} parent=69 // loop_header_branch
            %3316 = sbr.rel (%p3314) target = $region77
          $region74: #{custom-call} parent=69 // loop_body
            %v3320 = vld [vmem:[%s3318] sm:$0x1]
            %3321 = vst [vmem:[%s3319] sm:$0x1] %v3320
          $region75: #{custom-call} parent=69 // loop_footer
            %s3317 = sadd.s32 1, %s3313
          $region76: #{custom-call} parent=69 // loop_footer_branch
            %3312 = sbr.rel target = $region72
          $region77: #{custom-call} parent=69 // loop_exit
            _
        $region70: #{custom-call} parent=54 // pred_fallthru
          _
      $region55: #{custom-call} parent=50 // pred_fallthru
        _
      // Predicated region
      $region56: #{custom-call} parent=50 // pred_check
        _
      $region57: #{custom-call} parent=50 // pred_check_branch
        %3297 = sbr.rel (0) target = $region59
      $region58: #{custom-call} parent=50 // pred_region
        loop: start=0, step=1, limit=1
        $region60: #{custom-call} parent=58 // loop_pre_header
          _
        $region61: #{custom-call} parent=58 // loop_header
          %s3300 = sphi 0, %s3304
          %p3301 = scmp.ge.s32.totalorder %s3300, 1
          %s3305 = sphi [#allocation8], [#allocation8]
          %s3306 = sphi %s1, %s1
        $region62: #{custom-call} parent=58 // loop_header_branch
          %3303 = sbr.rel (%p3301) target = $region66
        $region63: #{custom-call} parent=58 // loop_body
          %v3307 = vld [vmem:[%s3305] sm:$0x1]
          %3308 = vst [vmem:[%s3306] sm:$0x1] %v3307
        $region64: #{custom-call} parent=58 // loop_footer
          %s3304 = sadd.s32 1, %s3300
        $region65: #{custom-call} parent=58 // loop_footer_branch
          %3299 = sbr.rel target = $region61
        $region66: #{custom-call} parent=58 // loop_exit
          _
      $region59: #{custom-call} parent=50 // pred_fallthru
        _
    $region51: #{custom-call} parent=1 // pred_fallthru
      _
    %3322 = vnop
    // Predicated region
    $region78: #{custom-call} parent=1 // pred_check
      _
    $region79: #{custom-call} parent=1 // pred_check_branch
      %3324 = sbr.rel (0) target = $region81
    $region80: #{custom-call} parent=1 // pred_region
      // Predicated region
      $region82: #{custom-call} parent=80 // pred_check
        _
      $region83: #{custom-call} parent=80 // pred_check_branch
        %3326 = sbr.rel target = $region85
      $region84: #{custom-call} parent=80 // pred_region
        // Predicated region
        $region97: #{custom-call} parent=84 // pred_check
          _
        $region98: #{custom-call} parent=84 // pred_check_branch
          %3341 = sbr.rel (0) target = $region100
        $region99: #{custom-call} parent=84 // pred_region
          loop: start=0, step=1, limit=1
          $region101: #{custom-call} parent=99 // loop_pre_header
            _
          $region102: #{custom-call} parent=99 // loop_header
            %s3344 = sphi 0, %s3348
            %p3345 = scmp.ge.s32.totalorder %s3344, 1
            %s3349 = sphi [#allocation10], [#allocation10]
            %s3350 = sphi %s2, %s2
          $region103: #{custom-call} parent=99 // loop_header_branch
            %3347 = sbr.rel (%p3345) target = $region107
          $region104: #{custom-call} parent=99 // loop_body
            %v3351 = vld [vmem:[%s3349] sm:$0x1]
            %3352 = vst [vmem:[%s3350] sm:$0x1] %v3351
          $region105: #{custom-call} parent=99 // loop_footer
            %s3348 = sadd.s32 1, %s3344
          $region106: #{custom-call} parent=99 // loop_footer_branch
            %3343 = sbr.rel target = $region102
          $region107: #{custom-call} parent=99 // loop_exit
            _
        $region100: #{custom-call} parent=84 // pred_fallthru
          _
      $region85: #{custom-call} parent=80 // pred_fallthru
        _
      // Predicated region
      $region86: #{custom-call} parent=80 // pred_check
        _
      $region87: #{custom-call} parent=80 // pred_check_branch
        %3328 = sbr.rel (0) target = $region89
      $region88: #{custom-call} parent=80 // pred_region
        loop: start=0, step=1, limit=1
        $region90: #{custom-call} parent=88 // loop_pre_header
          _
        $region91: #{custom-call} parent=88 // loop_header
          %s3331 = sphi 0, %s3335
          %p3332 = scmp.ge.s32.totalorder %s3331, 1
          %s3336 = sphi [#allocation10], [#allocation10]
          %s3337 = sphi %s2, %s2
        $region92: #{custom-call} parent=88 // loop_header_branch
          %3334 = sbr.rel (%p3332) target = $region96
        $region93: #{custom-call} parent=88 // loop_body
          %v3338 = vld [vmem:[%s3336] sm:$0x1]
          %3339 = vst [vmem:[%s3337] sm:$0x1] %v3338
        $region94: #{custom-call} parent=88 // loop_footer
          %s3335 = sadd.s32 1, %s3331
        $region95: #{custom-call} parent=88 // loop_footer_branch
          %3330 = sbr.rel target = $region91
        $region96: #{custom-call} parent=88 // loop_exit
          _
      $region89: #{custom-call} parent=80 // pred_fallthru
        _
    $region81: #{custom-call} parent=1 // pred_fallthru
      _
    %3353 = vnop

// kernel: _lambda_.1
$region0: #{_lambda_.1}
  #allocation0 [shape = 'u32[]', space=smem, size = 0x4, offset = 0x4, fixed_abs, tag = 'smem constant byte address 0x4 - core index']
  #allocation1 [shape = 'u32[144,128]{1,0:T(1,128)}', space=vmem, size = 0x12000, scoped, tag = 'internal scratch']
  #allocation2 [shape = 's32[1]{0}', space=sflag, size = 0x4, scoped, tag = 'scoped memory for _lambda_.1']
  #allocation3 [shape = 'u8[512]{0}', space=smem, size = 0x200, scoped, tag = 'prefetched SMEM operand 0']
  #allocation4 [shape = 'u8[512]{0}', space=smem, size = 0x200, scoped, tag = 'prefetched SMEM operand 1']
  #allocation5 [shape = 'u8[512]{0}', space=smem, size = 0x200, scoped, tag = 'prefetched SMEM operand 2']
  #allocation6 [shape = 'u8[512]{0}', space=smem, size = 0x200, scoped, tag = 'prefetched SMEM operand 3']
  %s0 = inlined_call_operand.hbm [shape: s32[4], index: 0, kind: input, shape index: {}]
  %s1 = inlined_call_operand.hbm [shape: s32[4], index: 1, kind: input, shape index: {}]
  %s2 = inlined_call_operand.hbm [shape: s32[4], index: 2, kind: input, shape index: {}]
  %s3 = inlined_call_operand.hbm [shape: s32[4], index: 3, kind: input, shape index: {}]
  %s4 = inlined_call_operand.hbm [shape: bf16[16,128], index: 4, kind: input, shape index: {}]
  %s5 = inlined_call_operand.hbm [shape: bf16[4,128,128], index: 5, kind: input, shape index: {}]
  %s6 = inlined_call_operand.hbm [shape: f32[4,1,128], index: 6, kind: input, shape index: {}]
  %s7 = inlined_call_operand.hbm [shape: bf16[4,128,128], index: 7, kind: input, shape index: {}]
  %s8 = inlined_call_operand.hbm [shape: f32[4,16,1], index: 8, kind: input, shape index: {}]
  %s9 = inlined_call_operand.hbm [shape: f32[16,128], index: 9, kind: output, shape index: {}]
  %s10 = sld [smem:[#allocation0]]
  $region81: #{_lambda_.1} parent=0
    _
  %s12 = ssub.s32 1, %s10
  %s13 = scalar_select 0, %s12, %s10
  %15 = dma.hbm_to_smem %s0, 16, [#allocation3], [#allocation2]
  %17 = dma.hbm_to_smem %s1, 16, [#allocation4], [#allocation2]
  %19 = dma.hbm_to_smem %s2, 16, [#allocation5], [#allocation2]
  %21 = dma.hbm_to_smem %s3, 16, [#allocation6], [#allocation2]
  %22 = dma.done [#allocation2], 64
  %23 = sfence
  $region1: #{_lambda_.1} parent=0
    #allocation7 [shape = 'u8[8192]{0}', space=vmem, size = 0x2000, scoped, tag = 'input window, operand 4']
    #allocation8 [shape = 's32[2]{0}', space=sflag, size = 0x8, scoped, tag = 'scoped memory for _lambda_.1']
    #allocation9 [shape = 's32[2]{0}', space=sflag, size = 0x8, scoped, tag = 'scoped memory for _lambda_.1']
    #allocation10 [shape = 'u8[65536]{0}', space=vmem, size = 0x10000, scoped, tag = 'input window, operand 5']
    #allocation11 [shape = 's32[2]{0}', space=sflag, size = 0x8, scoped, tag = 'scoped memory for _lambda_.1']
    #allocation12 [shape = 'u8[1024]{0}', space=vmem, size = 0x400, scoped, tag = 'input window, operand 6']
    #allocation13 [shape = 'u8[65536]{0}', space=vmem, size = 0x10000, scoped, tag = 'input window, operand 7']
    #allocation14 [shape = 's32[2]{0}', space=sflag, size = 0x8, scoped, tag = 'scoped memory for _lambda_.1']
    #allocation15 [shape = 'u8[16384]{0}', space=vmem, size = 0x4000, scoped, tag = 'input window, operand 8']
    #allocation16 [shape = 'u8[16384]{0}', space=vmem, size = 0x4000, scoped, tag = 'output window, operand 0']
    %24 = vsyncpa [#allocation8], 0
    %s25 = scalar_lea.sflag [#allocation8], 1
    %26 = vsyncpa %s25, 0
    %27 = vsyncpa [#allocation11], 0
    %s28 = scalar_lea.sflag [#allocation11], 1
    %29 = vsyncpa %s28, 0
    %30 = vsyncpa [#allocation14], 0
    %s31 = scalar_lea.sflag [#allocation14], 1
    %32 = vsyncpa %s31, 0
    %33 = vsyncpa [#allocation9], 0
    %s34 = scalar_lea.sflag [#allocation9], 1
    %35 = vsyncpa %s34, 0
    loop: start=0, step=1, limit=6
    $region2: #{_lambda_.1} parent=1 // loop_pre_header
      _
    $region3: #{_lambda_.1} parent=1 // loop_header
      %s37 = sphi 0, %s41
      %p38 = scmp.ge.s32.totalorder %s37, 6
      %s44 = sphi 0, %s56
      %s45 = sphi 0, %s52
      %s46 = sphi 0, %s44
      %s47 = sphi 0, %s45
      %s48 = sphi 0, %s46
      %s49 = sphi 0, %s47
      %s61 = sphi 0, %s63
      %s64 = sphi 0, %s61
      %s65 = sphi 0, %s64
      %s81 = sphi 0, %s65
      %s97 = sphi 0, %s99
      %s100 = sphi 0, %s97
      %s101 = sphi 0, %s100
      %s117 = sphi 0, %s101
      %s133 = sphi 0, %s135
      %s136 = sphi 0, %s133
      %s137 = sphi 0, %s136
      %s153 = sphi 0, %s137
      %s169 = sphi 0, %s171
      %s172 = sphi 0, %s169
      %s173 = sphi 0, %s172
      %s189 = sphi 0, %s173
      %s201 = sphi 0, %s203
      %s204 = sphi 0, %s201
      %s205 = sphi 0, %s204
      %s221 = sphi 0, %s205
      %s229 = sphi 0, %s231
      %s232 = sphi 0, %s229
      %s233 = sphi 0, %s232
      %s249 = sphi 0, %s233
    $region4: #{_lambda_.1} parent=1 // loop_header_branch
      %40 = sbr.rel (%p38) target = $region8
    $region5: #{_lambda_.1} parent=1 // loop_body
      %s42 = ssub.s32 %s37, 1
      %s43 = ssub.s32 %s37, 2
      %s50 = sadd.s32 1, %s45
      %p51 = scmp.ge.s32.totalorder %s50, 1
      %s52 = scalar_select %p51, 0, %s50
      %s53 = sadd.s32 1, %s44
      %s54 = scalar_select %p51, %s53, %s44
      %p55 = scmp.ge.s32.totalorder %s54, 4
      %s56 = scalar_select %p55, 0, %s54
      %s57 = sld [smem:[#allocation3 + %s44]]
      %s58 = sld [smem:[#allocation3 + %s56]]
      %s59 = ssub.s32 %s57, %s58
      %p60 = scmp.eq.s32.totalorder %s59, 0
      %s62 = sadd.s32 %s61, 1
      %s63 = scalar_select %p60, %s61, %s62
      %p66 = pneg %p60
      %p67 = scmp.eq.s32.totalorder %s37, 3
      %p68 = por %p66, %p67
      %p69 = scmp.ne.s32.totalorder %s61, %s64
      %p70 = scmp.eq.s32.totalorder %s37, 0
      %p71 = por %p69, %p70
      %p72 = scmp.ne.s32.totalorder %s61, %s64
      %p73 = scmp.eq.s32.totalorder %s42, 3
      %p74 = por %p72, %p73
      %p75 = scmp.ne.s32.totalorder %s64, %s65
      %p76 = scmp.eq.s32.totalorder %s42, 0
      %p77 = por %p75, %p76
      %p78 = scmp.ne.s32.totalorder %s64, %s65
      %p79 = scmp.eq.s32.totalorder %s43, 3
      %p80 = por %p78, %p79
      %p82 = scmp.ne.s32.totalorder %s65, %s81
      %p83 = scmp.eq.s32.totalorder %s43, 0
      %p84 = por %p82, %p83
      %s85 = sld [smem:[#allocation4 + %s44]]
      %s86 = sld [smem:[#allocation6 + %s44]]
      %p87 = scmp.eq.s32.totalorder %s86, 1
      %s88 = scalar_select %p87, %s45, 0
      %s89 = sld [smem:[#allocation4 + %s56]]
      %s90 = sld [smem:[#allocation6 + %s56]]
      %p91 = scmp.eq.s32.totalorder %s90, 1
      %s92 = scalar_select %p91, %s52, 0
      %s93 = ssub.s32 %s85, %s89
      %s94 = ssub.s32 %s88, %s92
      %s95 = sor.u32 %s93, %s94
      %p96 = scmp.eq.s32.totalorder %s95, 0
      %s98 = sadd.s32 %s97, 1
      %s99 = scalar_select %p96, %s97, %s98
      %p102 = pneg %p96
      %p103 = scmp.eq.s32.totalorder %s37, 3
      %p104 = por %p102, %p103
      %p105 = scmp.ne.s32.totalorder %s97, %s100
      %p106 = scmp.eq.s32.totalorder %s37, 0
      %p107 = por %p105, %p106
      %p108 = scmp.ne.s32.totalorder %s97, %s100
      %p109 = scmp.eq.s32.totalorder %s42, 3
      %p110 = por %p108, %p109
      %p111 = scmp.ne.s32.totalorder %s100, %s101
      %p112 = scmp.eq.s32.totalorder %s42, 0
      %p113 = por %p111, %p112
      %p114 = scmp.ne.s32.totalorder %s100, %s101
      %p115 = scmp.eq.s32.totalorder %s43, 3
      %p116 = por %p114, %p115
      %p118 = scmp.ne.s32.totalorder %s101, %s117
      %p119 = scmp.eq.s32.totalorder %s43, 0
      %p120 = por %p118, %p119
      %s121 = sld [smem:[#allocation4 + %s44]]
      %s122 = sld [smem:[#allocation6 + %s44]]
      %p123 = scmp.eq.s32.totalorder %s122, 1
      %s124 = scalar_select %p123, %s45, 0
      %s125 = sld [smem:[#allocation4 + %s56]]
      %s126 = sld [smem:[#allocation6 + %s56]]
      %p127 = scmp.eq.s32.totalorder %s126, 1
      %s128 = scalar_select %p127, %s52, 0
      %s129 = ssub.s32 %s121, %s125
      %s130 = ssub.s32 %s124, %s128
      %s131 = sor.u32 %s129, %s130
      %p132 = scmp.eq.s32.totalorder %s131, 0
      %s134 = sadd.s32 %s133, 1
      %s135 = scalar_select %p132, %s133, %s134
      %p138 = pneg %p132
      %p139 = scmp.eq.s32.totalorder %s37, 3
      %p140 = por %p138, %p139
      %p141 = scmp.ne.s32.totalorder %s133, %s136
      %p142 = scmp.eq.s32.totalorder %s37, 0
      %p143 = por %p141, %p142
      %p144 = scmp.ne.s32.totalorder %s133, %s136
      %p145 = scmp.eq.s32.totalorder %s42, 3
      %p146 = por %p144, %p145
      %p147 = scmp.ne.s32.totalorder %s136, %s137
      %p148 = scmp.eq.s32.totalorder %s42, 0
      %p149 = por %p147, %p148
      %p150 = scmp.ne.s32.totalorder %s136, %s137
      %p151 = scmp.eq.s32.totalorder %s43, 3
      %p152 = por %p150, %p151
      %p154 = scmp.ne.s32.totalorder %s137, %s153
      %p155 = scmp.eq.s32.totalorder %s43, 0
      %p156 = por %p154, %p155
      %s157 = sld [smem:[#allocation4 + %s44]]
      %s158 = sld [smem:[#allocation6 + %s44]]
      %p159 = scmp.eq.s32.totalorder %s158, 1
      %s160 = scalar_select %p159, %s45, 0
      %s161 = sld [smem:[#allocation4 + %s56]]
      %s162 = sld [smem:[#allocation6 + %s56]]
      %p163 = scmp.eq.s32.totalorder %s162, 1
      %s164 = scalar_select %p163, %s52, 0
      %s165 = ssub.s32 %s157, %s161
      %s166 = ssub.s32 %s160, %s164
      %s167 = sor.u32 %s165, %s166
      %p168 = scmp.eq.s32.totalorder %s167, 0
      %s170 = sadd.s32 %s169, 1
      %s171 = scalar_select %p168, %s169, %s170
      %p174 = pneg %p168
      %p175 = scmp.eq.s32.totalorder %s37, 3
      %p176 = por %p174, %p175
      %p177 = scmp.ne.s32.totalorder %s169, %s172
      %p178 = scmp.eq.s32.totalorder %s37, 0
      %p179 = por %p177, %p178
      %p180 = scmp.ne.s32.totalorder %s169, %s172
      %p181 = scmp.eq.s32.totalorder %s42, 3
      %p182 = por %p180, %p181
      %p183 = scmp.ne.s32.totalorder %s172, %s173
      %p184 = scmp.eq.s32.totalorder %s42, 0
      %p185 = por %p183, %p184
      %p186 = scmp.ne.s32.totalorder %s172, %s173
      %p187 = scmp.eq.s32.totalorder %s43, 3
      %p188 = por %p186, %p187
      %p190 = scmp.ne.s32.totalorder %s173, %s189
      %p191 = scmp.eq.s32.totalorder %s43, 0
      %p192 = por %p190, %p191
      %s193 = sld [smem:[#allocation4 + %s44]]
      %s194 = sld [smem:[#allocation3 + %s44]]
      %s195 = sld [smem:[#allocation4 + %s56]]
      %s196 = sld [smem:[#allocation3 + %s56]]
      %s197 = ssub.s32 %s193, %s195
      %s198 = ssub.s32 %s194, %s196
      %s199 = sor.u32 %s197, %s198
      %p200 = scmp.eq.s32.totalorder %s199, 0
      %s202 = sadd.s32 %s201, 1
      %s203 = scalar_select %p200, %s201, %s202
      %p206 = pneg %p200
      %p207 = scmp.eq.s32.totalorder %s37, 3
      %p208 = por %p206, %p207
      %p209 = scmp.ne.s32.totalorder %s201, %s204
      %p210 = scmp.eq.s32.totalorder %s37, 0
      %p211 = por %p209, %p210
      %p212 = scmp.ne.s32.totalorder %s201, %s204
      %p213 = scmp.eq.s32.totalorder %s42, 3
      %p214 = por %p212, %p213
      %p215 = scmp.ne.s32.totalorder %s204, %s205
      %p216 = scmp.eq.s32.totalorder %s42, 0
      %p217 = por %p215, %p216
      %p218 = scmp.ne.s32.totalorder %s204, %s205
      %p219 = scmp.eq.s32.totalorder %s43, 3
      %p220 = por %p218, %p219
      %p222 = scmp.ne.s32.totalorder %s205, %s221
      %p223 = scmp.eq.s32.totalorder %s43, 0
      %p224 = por %p222, %p223
      %s225 = sld [smem:[#allocation3 + %s44]]
      %s226 = sld [smem:[#allocation3 + %s56]]
      %s227 = ssub.s32 %s225, %s226
      %p228 = scmp.eq.s32.totalorder %s227, 0
      %s230 = sadd.s32 %s229, 1
      %s231 = scalar_select %p228, %s229, %s230
      %p234 = pneg %p228
      %p235 = scmp.eq.s32.totalorder %s37, 3
      %p236 = por %p234, %p235
      %p237 = scmp.ne.s32.totalorder %s229, %s232
      %p238 = scmp.eq.s32.totalorder %s37, 0
      %p239 = por %p237, %p238
      %p240 = scmp.ne.s32.totalorder %s229, %s232
      %p241 = scmp.eq.s32.totalorder %s42, 3
      %p242 = por %p240, %p241
      %p243 = scmp.ne.s32.totalorder %s232, %s233
      %p244 = scmp.eq.s32.totalorder %s42, 0
      %p245 = por %p243, %p244
      %p246 = scmp.ne.s32.totalorder %s232, %s233
      %p247 = scmp.eq.s32.totalorder %s43, 3
      %p248 = por %p246, %p247
      %p250 = scmp.ne.s32.totalorder %s233, %s249
      %p251 = scmp.eq.s32.totalorder %s43, 0
      %p252 = por %p250, %p251
      %p253 = scmp.le.s32.totalorder 1, %s37
      %p254 = scmp.lt.s32.totalorder %s37, 5
      %p255 = pnand %p253, %p254
      %p256 = pneg %p255
      // Predicated region
      $region9: #{_lambda_.1} parent=5 // pred_check
        _
      $region10: #{_lambda_.1} parent=5 // pred_check_branch
        %258 = sbr.rel (%p255) target = $region12
      $region11: #{_lambda_.1} parent=5 // pred_region
        %s259 = ssub.s32 %s37, 1
      $region12: #{_lambda_.1} parent=5 // pred_fallthru
        _
      %p260 = scmp.lt.s32.totalorder %s37, 4
      // Predicated region
      $region13: #{_lambda_.1} parent=5 // pred_check
        %p261 = pneg %p260
      $region14: #{_lambda_.1} parent=5 // pred_check_branch
        %263 = sbr.rel (%p261) target = $region16
      $region15: #{_lambda_.1} parent=5 // pred_region
        // Predicated region
        $region17: #{_lambda_.1} parent=15 // pred_check
          %p264 = pneg %p71
        $region18: #{_lambda_.1} parent=15 // pred_check_branch
          %266 = sbr.rel (%p264) target = $region20
        $region19: #{_lambda_.1} parent=15 // pred_region
          %s267 = sand.u32 %s61, 1
          %s268 = scalar_lea.sflag [#allocation8], %s267
          %s269 = sand.u32 %s61, 1
          %s270 = smul.addr %s269, 8
          %s271 = scalar_lea.vmem [#allocation7], %s270
          %s272 = sld [smem:[#allocation3 + %s44]]
          %s273 = smul.u32 2, %s272
          %s275 = ssub.s32 128, 128
          %276 = vsyncadd %s268, %s275
          %s277 = smul.addr %s273, 64
          %s278 = scalar_lea.hbm %s4, %s277
          %s279 = sshll.u32 %s271, 4
          %s280 = int_to_ptr.vmem [resolvable:$true] %s279
          %285 = dma.hbm_to_vmem [thread:$0]  %s278, 128, %s280, %s268, 64, 64, 4
        $region20: #{_lambda_.1} parent=15 // pred_fallthru
          _
        // Predicated region
        $region21: #{_lambda_.1} parent=15 // pred_check
          %p286 = pneg %p107
        $region22: #{_lambda_.1} parent=15 // pred_check_branch
          %288 = sbr.rel (%p286) target = $region24
        $region23: #{_lambda_.1} parent=15 // pred_region
          %s289 = sand.u32 %s37, 1
          %s290 = scalar_lea.sflag [#allocation11], %s289
          %s291 = sand.u32 %s97, 1
          %s292 = smul.addr %s291, 64
          %s293 = scalar_lea.vmem [#allocation10], %s292
          %s294 = sld [smem:[#allocation4 + %s44]]
          %s295 = sld [smem:[#allocation6 + %s44]]
          %p296 = scmp.eq.s32.totalorder %s295, 1
          %s297 = scalar_select %p296, %s45, 0
          %s299 = ssub.s32 1024, 1024
          %300 = vsyncadd %s290, %s299
          %s301 = smul.addr %s294, 16
          %s302 = sadd.s32 %s297, %s301
          %s303 = smul.addr %s302, 64
          %s304 = scalar_lea.hbm %s5, %s303
          %s305 = sshll.u32 %s293, 4
          %s306 = int_to_ptr.vmem [resolvable:$true] %s305
          %311 = dma.hbm_to_vmem [thread:$0]  %s304, 1024, %s306, %s290, 64, 64, 4
        $region24: #{_lambda_.1} parent=15 // pred_fallthru
          _
        // Predicated region
        $region25: #{_lambda_.1} parent=15 // pred_check
          %p312 = pneg %p143
        $region26: #{_lambda_.1} parent=15 // pred_check_branch
          %314 = sbr.rel (%p312) target = $region28
        $region27: #{_lambda_.1} parent=15 // pred_region
          %s315 = sand.u32 %s37, 1
          %s316 = scalar_lea.sflag [#allocation11], %s315
          %s317 = sand.u32 %s133, 1
          %s318 = scalar_lea.vmem [#allocation12], %s317
          %s319 = sld [smem:[#allocation4 + %s44]]
          %s320 = sld [smem:[#allocation6 + %s44]]
          %p321 = scmp.eq.s32.totalorder %s320, 1
          %s322 = scalar_select %p321, %s45, 0
          %s324 = ssub.s32 16, 16
          %325 = vsyncadd %s316, %s324
          %s326 = sadd.s32 %s322, %s319
          %s327 = smul.addr %s326, 16
          %s328 = scalar_lea.hbm %s6, %s327
          %s330 = sshll.u32 %s318, 4
          %s331 = int_to_ptr.vmem [resolvable:$true] %s330
          %333 = dma.hbm_to_vmem [thread:$0]  %s328, 16, %s331, %s316
        $region28: #{_lambda_.1} parent=15 // pred_fallthru
          _
        // Predicated region
        $region29: #{_lambda_.1} parent=15 // pred_check
          %p334 = pneg %p179
        $region30: #{_lambda_.1} parent=15 // pred_check_branch
          %336 = sbr.rel (%p334) target = $region32
        $region31: #{_lambda_.1} parent=15 // pred_region
          %s337 = sand.u32 %s37, 1
          %s338 = scalar_lea.sflag [#allocation14], %s337
          %s339 = sand.u32 %s169, 1
          %s340 = smul.addr %s339, 64
          %s341 = scalar_lea.vmem [#allocation13], %s340
          %s342 = sld [smem:[#allocation4 + %s44]]
          %s343 = sld [smem:[#allocation6 + %s44]]
          %p344 = scmp.eq.s32.totalorder %s343, 1
          %s345 = scalar_select %p344, %s45, 0
          %s346 = smul.u32 16, %s345
          %s348 = ssub.s32 1024, 1024
          %349 = vsyncadd %s338, %s348
          %s350 = smul.addr %s342, 16
          %s351 = sadd.s32 %s346, %s350
          %s352 = smul.addr %s351, 64
          %s353 = scalar_lea.hbm %s7, %s352
          %s354 = sshll.u32 %s341, 4
          %s355 = int_to_ptr.vmem [resolvable:$true] %s354
          %360 = dma.hbm_to_vmem [thread:$0]  %s353, 1024, %s355, %s338, 64, 64, 4
        $region32: #{_lambda_.1} parent=15 // pred_fallthru
          _
        // Predicated region
        $region33: #{_lambda_.1} parent=15 // pred_check
          %p361 = pneg %p211
        $region34: #{_lambda_.1} parent=15 // pred_check_branch
          %363 = sbr.rel (%p361) target = $region36
        $region35: #{_lambda_.1} parent=15 // pred_region
          %s364 = sand.u32 %s37, 1
          %s365 = scalar_lea.sflag [#allocation14], %s364
          %s366 = sand.u32 %s201, 1
          %s367 = smul.addr %s366, 16
          %s368 = scalar_lea.vmem [#allocation15], %s367
          %s369 = sld [smem:[#allocation4 + %s44]]
          %s370 = sld [smem:[#allocation3 + %s44]]
          %s371 = smul.u32 2, %s370
          %s373 = ssub.s32 256, 256
          %374 = vsyncadd %s365, %s373
          %s375 = smul.addr %s369, 2
          %s376 = sadd.s32 %s371, %s375
          %s377 = smul.addr %s376, 128
          %s378 = scalar_lea.hbm %s8, %s377
          %s379 = sshll.u32 %s368, 4
          %s380 = int_to_ptr.vmem [resolvable:$true] %s379
          %385 = dma.hbm_to_vmem [thread:$0]  %s378, 256, %s380, %s365, 128, 128, 8
        $region36: #{_lambda_.1} parent=15 // pred_fallthru
          _
      $region16: #{_lambda_.1} parent=5 // pred_fallthru
        _
      %p386 = scmp.le.s32.totalorder 1, %s37
      %p387 = scmp.lt.s32.totalorder %s37, 5
      %p388 = pnand %p386, %p387
      %p389 = pneg %p388
      // Predicated region
      $region37: #{_lambda_.1} parent=5 // pred_check
        _
      $region38: #{_lambda_.1} parent=5 // pred_check_branch
        %391 = sbr.rel (%p388) target = $region40
      $region39: #{_lambda_.1} parent=5 // pred_region
        %s392 = ssub.s32 %s37, 1
        %s393 = sand.u32 %s64, 1
        %s394 = scalar_lea.sflag [#allocation8], %s393
        %s395 = sand.u32 %s64, 1
        %s396 = smul.addr %s395, 8
        %s397 = scalar_lea.vmem [#allocation7], %s396
        // Predicated region
        $region41: #{_lambda_.1} parent=39 // pred_check
          %p398 = pneg %p77
        $region42: #{_lambda_.1} parent=39 // pred_check_branch
          %400 = sbr.rel (%p398) target = $region44
        $region43: #{_lambda_.1} parent=39 // pred_region
          %401 = dma.done %s394, 128
        $region44: #{_lambda_.1} parent=39 // pred_fallthru
          _
        %s402 = sand.u32 %s42, 1
        %s403 = scalar_lea.sflag [#allocation11], %s402
        %s404 = sand.u32 %s100, 1
        %s405 = smul.addr %s404, 64
        %s406 = scalar_lea.vmem [#allocation10], %s405
        // Predicated region
        $region45: #{_lambda_.1} parent=39 // pred_check
          %p407 = pneg %p113
        $region46: #{_lambda_.1} parent=39 // pred_check_branch
          %409 = sbr.rel (%p407) target = $region48
        $region47: #{_lambda_.1} parent=39 // pred_region
          %410 = dma.done %s403, 1024
        $region48: #{_lambda_.1} parent=39 // pred_fallthru
          _
        %s411 = sand.u32 %s42, 1
        %s412 = scalar_lea.sflag [#allocation11], %s411
        %s413 = sand.u32 %s136, 1
        %s414 = scalar_lea.vmem [#allocation12], %s413
        // Predicated region
        $region49: #{_lambda_.1} parent=39 // pred_check
          %p415 = pneg %p149
        $region50: #{_lambda_.1} parent=39 // pred_check_branch
          %417 = sbr.rel (%p415) target = $region52
        $region51: #{_lambda_.1} parent=39 // pred_region
          %418 = dma.done %s412, 16
        $region52: #{_lambda_.1} parent=39 // pred_fallthru
          _
        %s419 = sand.u32 %s42, 1
        %s420 = scalar_lea.sflag [#allocation14], %s419
        %s421 = sand.u32 %s172, 1
        %s422 = smul.addr %s421, 64
        %s423 = scalar_lea.vmem [#allocation13], %s422
        // Predicated region
        $region53: #{_lambda_.1} parent=39 // pred_check
          %p424 = pneg %p185
        $region54: #{_lambda_.1} parent=39 // pred_check_branch
          %426 = sbr.rel (%p424) target = $region56
        $region55: #{_lambda_.1} parent=39 // pred_region
          %427 = dma.done %s420, 1024
        $region56: #{_lambda_.1} parent=39 // pred_fallthru
          _
        %s428 = sand.u32 %s42, 1
        %s429 = scalar_lea.sflag [#allocation14], %s428
        %s430 = sand.u32 %s204, 1
        %s431 = smul.addr %s430, 16
        %s432 = scalar_lea.vmem [#allocation15], %s431
        // Predicated region
        $region57: #{_lambda_.1} parent=39 // pred_check
          %p433 = pneg %p217
        $region58: #{_lambda_.1} parent=39 // pred_check_branch
          %435 = sbr.rel (%p433) target = $region60
        $region59: #{_lambda_.1} parent=39 // pred_region
          %436 = dma.done %s429, 256
        $region60: #{_lambda_.1} parent=39 // pred_fallthru
          _
        %s437 = sand.u32 %s64, 1
        %s438 = scalar_lea.sflag [#allocation8], %s437
        %s439 = sand.u32 %s64, 1
        %s440 = smul.addr %s439, 8
        %s441 = scalar_lea.vmem [#allocation7], %s440
        %p442 = pneg %p77
        %p443 = pneg %p74
        %s444 = sand.u32 %s42, 1
        %s445 = scalar_lea.sflag [#allocation11], %s444
        %s446 = sand.u32 %s100, 1
        %s447 = smul.addr %s446, 64
        %s448 = scalar_lea.vmem [#allocation10], %s447
        %p449 = pneg %p113
        %p450 = pneg %p110
        %s451 = sand.u32 %s42, 1
        %s452 = scalar_lea.sflag [#allocation11], %s451
        %s453 = sand.u32 %s136, 1
        %s454 = scalar_lea.vmem [#allocation12], %s453
        %p455 = pneg %p149
        %p456 = pneg %p146
        %s457 = sand.u32 %s42, 1
        %s458 = scalar_lea.sflag [#allocation14], %s457
        %s459 = sand.u32 %s172, 1
        %s460 = smul.addr %s459, 64
        %s461 = scalar_lea.vmem [#allocation13], %s460
        %p462 = pneg %p185
        %p463 = pneg %p182
        %s464 = sand.u32 %s42, 1
        %s465 = scalar_lea.sflag [#allocation14], %s464
        %s466 = sand.u32 %s204, 1
        %s467 = smul.addr %s466, 16
        %s468 = scalar_lea.vmem [#allocation15], %s467
        %p469 = pneg %p217
        %p470 = pneg %p214
        %p471 = pneg %p245
        %p472 = pneg %p242
        %s473 = sand.u32 %s232, 1
        %s474 = scalar_lea.sflag [#allocation9], %s473
        %s475 = sand.u32 %s232, 1
        %s476 = smul.addr %s475, 16
        %s477 = scalar_lea.vmem [#allocation16], %s476
        %s478 = sld [smem:[#allocation3 + %s46]]
        %s479 = smul.u32 2, %s478
        %s480 = sld [smem:[#allocation4 + %s46]]
        %s481 = sld [smem:[#allocation6 + %s46]]
        %p482 = scmp.eq.s32.totalorder %s481, 1
        %s483 = scalar_select %p482, %s47, 0
        %s484 = sld [smem:[#allocation4 + %s46]]
        %s485 = sld [smem:[#allocation6 + %s46]]
        %p486 = scmp.eq.s32.totalorder %s485, 1
        %s487 = scalar_select %p486, %s47, 0
        %s488 = sld [smem:[#allocation4 + %s46]]
        %s489 = sld [smem:[#allocation6 + %s46]]
        %p490 = scmp.eq.s32.totalorder %s489, 1
        %s491 = scalar_select %p490, %s47, 0
        %s492 = smul.u32 16, %s491
        %s493 = sld [smem:[#allocation4 + %s46]]
        %s494 = sld [smem:[#allocation3 + %s46]]
        %s495 = smul.u32 2, %s494
        %s496 = sld [smem:[#allocation3 + %s46]]
        %s497 = smul.u32 2, %s496
        %s499 = sld [smem:[#allocation5 + %s46]]
        %p500 = scmp.eq.s32.totalorder %s499, 1
        %p501 = scmp.eq.s32.totalorder %s47, 0
        %p502 = pnand %p500, %p501
        %p503 = pneg %p502
        // Predicated region
        $region61: #{_lambda_.1} parent=39 // pred_check
          _
        $region62: #{_lambda_.1} parent=39 // pred_check_branch
          %505 = sbr.rel (%p502) target = $region64
        $region63: #{_lambda_.1} parent=39 // pred_region
          %506 = vst [vmem:[%s477] sm:$0xff] 0.0
          %507 = vst [vmem:[%s477 + $0x8] sm:$0xff] 0.0
        $region64: #{_lambda_.1} parent=39 // pred_fallthru
          _
        %s508 = sld [smem:[#allocation6 + %s46]]
        %p509 = scmp.eq.s32.totalorder %s508, 1
        // Predicated region
        $region65: #{_lambda_.1} parent=39 // pred_check
          %p510 = pneg %p509
        $region66: #{_lambda_.1} parent=39 // pred_check_branch
          %512 = sbr.rel (%p510) target = $region68
        $region67: #{_lambda_.1} parent=39 // pred_region
          %v513 = vld [vmem:[%s397] sm:$0xf]
          %v514 = vld [vmem:[%s397 + $0x4] sm:$0xf]
          %v515 = vld [vmem:[%s406] sm:$0xf]
          %v516 = vld [vmem:[%s406 + $0x4] sm:$0xf]
          %v517 = vld [vmem:[%s406 + $0x8] sm:$0xf]
          %v518 = vld [vmem:[%s406 + $0xc] sm:$0xf]
          %v519 = vld [vmem:[%s406 + $0x10] sm:$0xf]
          %v520 = vld [vmem:[%s406 + $0x14] sm:$0xf]
          %v521 = vld [vmem:[%s406 + $0x18] sm:$0xf]
          %v522 = vld [vmem:[%s406 + $0x1c] sm:$0xf]
          %v523 = vld [vmem:[%s406 + $0x20] sm:$0xf]
          %v524 = vld [vmem:[%s406 + $0x24] sm:$0xf]
          %v525 = vld [vmem:[%s406 + $0x28] sm:$0xf]
          %v526 = vld [vmem:[%s406 + $0x2c] sm:$0xf]
          %v527 = vld [vmem:[%s406 + $0x30] sm:$0xf]
          %v528 = vld [vmem:[%s406 + $0x34] sm:$0xf]
          %v529 = vld [vmem:[%s406 + $0x38] sm:$0xf]
          %v530 = vld [vmem:[%s406 + $0x3c] sm:$0xf]
          %v531 = vld [vmem:[%s414] sm:$0x1]
          %v533 = vlaneseq
          %v534 = vshrl.u32 %v533, 7
          %v535 = vsub.s32 0, %v534
          %v536 = vrot.slane %v531, %v535
          %v540 = vunpack.c.l.b16 %v513
          %v541 = vunpack.c.l.b16 %v514
          %v542 = vpack.c.b16 %v541, %v540
          %v560 = vunpack.c.l.b16 %v515
          %v561 = vunpack.c.l.b16 %v516
          %v562 = vunpack.c.l.b16 %v517
          %v563 = vunpack.c.l.b16 %v518
          %v564 = vunpack.c.l.b16 %v519
          %v565 = vunpack.c.l.b16 %v520
          %v566 = vunpack.c.l.b16 %v521
          %v567 = vunpack.c.l.b16 %v522
          %v568 = vunpack.c.l.b16 %v523
          %v569 = vunpack.c.l.b16 %v524
          %v570 = vunpack.c.l.b16 %v525
          %v571 = vunpack.c.l.b16 %v526
          %v572 = vunpack.c.l.b16 %v527
          %v573 = vunpack.c.l.b16 %v528
          %v574 = vunpack.c.l.b16 %v529
          %v575 = vunpack.c.l.b16 %v530
          %v576 = vpack.c.b16 %v561, %v560
          %v577 = vpack.c.b16 %v563, %v562
          %v578 = vpack.c.b16 %v565, %v564
          %v579 = vpack.c.b16 %v567, %v566
          %v580 = vpack.c.b16 %v569, %v568
          %v581 = vpack.c.b16 %v571, %v570
          %v582 = vpack.c.b16 %v573, %v572
          %v583 = vpack.c.b16 %v575, %v574
          %592 = vmatprep.subr.bf16.mxu0 0
          %593 = vmatpush1.bf16.msra.mxu0 %v576
          %594 = vmatprep.subr.bf16.mxu0 0
          %595 = vmatpush1.bf16.msra.mxu0 %v577
          %596 = vmatprep.subr.bf16.mxu0 0
          %597 = vmatpush1.bf16.msra.mxu0 %v578
          %598 = vmatprep.subr.bf16.mxu0 0
          %599 = vmatpush1.bf16.msra.mxu0 %v579
          %600 = vmatprep.subr.bf16.mxu0 0
          %601 = vmatpush1.bf16.msra.mxu0 %v580
          %602 = vmatprep.subr.bf16.mxu0 0
          %603 = vmatpush1.bf16.msra.mxu0 %v581
          %604 = vmatprep.subr.bf16.mxu0 0
          %605 = vmatpush1.bf16.msra.mxu0 %v582
          %606 = vmatprep.subr.bf16.mxu0 0
          %607 = vmatpush1.bf16.msra.mxu0 %v583
          %608 = vmatprep.subr.bf16.mxu0 0
          %609 = vmatpush1.bf16.msra.mxu0 0
          %610 = vmatprep.subr.bf16.mxu0 0
          %611 = vmatpush1.bf16.msra.mxu0 0
          %612 = vmatprep.subr.bf16.mxu0 0
          %613 = vmatpush1.bf16.msra.mxu0 0
          %614 = vmatprep.subr.bf16.mxu0 0
          %615 = vmatpush1.bf16.msra.mxu0 0
          %616 = vmatprep.subr.bf16.mxu0 0
          %617 = vmatpush1.bf16.msra.mxu0 0
          %618 = vmatprep.subr.bf16.mxu0 0
          %619 = vmatpush1.bf16.msra.mxu0 0
          %620 = vmatprep.subr.bf16.mxu0 0
          %621 = vmatpush1.bf16.msra.mxu0 0
          %622 = vmatprep.subr.bf16.mxu0 0
          %623 = vmatpush1.bf16.msra.mxu0 0
          %624 = vmatprep.mubr.bf16.mxu0 0
          %625 = vmatmul.mubr.bf16.gmra.mrb[0].mxu0 %v542
          %v626 = vpop.f32.mrb[0].mxu0
          %v627 = vadd.f32 %v536, %v626
          %v628 = vpop.f32.mrb[0].mxu0
          %v629 = vpop.f32.mrb[0].mxu0
          %v630 = vadd.f32 %v536, %v629
          %v631 = vpop.f32.mrb[0].mxu0
          %632 = vdwg.mxu0
          %v633 = vmax.f32 %v627, 0.0
          %v634 = vmax.f32 %v630, 0.0
          %v635 = vpack.c.bf16 %v634, %v633
          %v636 = vld [vmem:[%s423] sm:$0xf]
          %v637 = vld [vmem:[%s423 + $0x4] sm:$0xf]
          %v638 = vld [vmem:[%s423 + $0x8] sm:$0xf]
          %v639 = vld [vmem:[%s423 + $0xc] sm:$0xf]
          %v640 = vld [vmem:[%s423 + $0x10] sm:$0xf]
          %v641 = vld [vmem:[%s423 + $0x14] sm:$0xf]
          %v642 = vld [vmem:[%s423 + $0x18] sm:$0xf]
          %v643 = vld [vmem:[%s423 + $0x1c] sm:$0xf]
          %v644 = vld [vmem:[%s423 + $0x20] sm:$0xf]
          %v645 = vld [vmem:[%s423 + $0x24] sm:$0xf]
          %v646 = vld [vmem:[%s423 + $0x28] sm:$0xf]
          %v647 = vld [vmem:[%s423 + $0x2c] sm:$0xf]
          %v648 = vld [vmem:[%s423 + $0x30] sm:$0xf]
          %v649 = vld [vmem:[%s423 + $0x34] sm:$0xf]
          %v650 = vld [vmem:[%s423 + $0x38] sm:$0xf]
          %v651 = vld [vmem:[%s423 + $0x3c] sm:$0xf]
          %v668 = vunpack.c.l.b16 %v636
          %v669 = vunpack.c.l.b16 %v637
          %v670 = vunpack.c.l.b16 %v638
          %v671 = vunpack.c.l.b16 %v639
          %v672 = vunpack.c.l.b16 %v640
          %v673 = vunpack.c.l.b16 %v641
          %v674 = vunpack.c.l.b16 %v642
          %v675 = vunpack.c.l.b16 %v643
          %v676 = vunpack.c.l.b16 %v644
          %v677 = vunpack.c.l.b16 %v645
          %v678 = vunpack.c.l.b16 %v646
          %v679 = vunpack.c.l.b16 %v647
          %v680 = vunpack.c.l.b16 %v648
          %v681 = vunpack.c.l.b16 %v649
          %v682 = vunpack.c.l.b16 %v650
          %v683 = vunpack.c.l.b16 %v651
          %v684 = vpack.c.b16 %v669, %v668
          %v685 = vpack.c.b16 %v671, %v670
          %v686 = vpack.c.b16 %v673, %v672
          %v687 = vpack.c.b16 %v675, %v674
          %v688 = vpack.c.b16 %v677, %v676
          %v689 = vpack.c.b16 %v679, %v678
          %v690 = vpack.c.b16 %v681, %v680
          %v691 = vpack.c.b16 %v683, %v682
          %700 = vmatprep.subr.bf16.mxu0 0
          %701 = vmatpush1.bf16.msra.mxu0 %v684
          %702 = vmatprep.subr.bf16.mxu0 0
          %703 = vmatpush1.bf16.msra.mxu0 %v685
          %704 = vmatprep.subr.bf16.mxu0 0
          %705 = vmatpush1.bf16.msra.mxu0 %v686
          %706 = vmatprep.subr.bf16.mxu0 0
          %707 = vmatpush1.bf16.msra.mxu0 %v687
          %708 = vmatprep.subr.bf16.mxu0 0
          %709 = vmatpush1.bf16.msra.mxu0 %v688
          %710 = vmatprep.subr.bf16.mxu0 0
          %711 = vmatpush1.bf16.msra.mxu0 %v689
          %712 = vmatprep.subr.bf16.mxu0 0
          %713 = vmatpush1.bf16.msra.mxu0 %v690
          %714 = vmatprep.subr.bf16.mxu0 0
          %715 = vmatpush1.bf16.msra.mxu0 %v691
          %716 = vmatprep.subr.bf16.mxu0 0
          %717 = vmatpush1.bf16.msra.mxu0 0
          %718 = vmatprep.subr.bf16.mxu0 0
          %719 = vmatpush1.bf16.msra.mxu0 0
          %720 = vmatprep.subr.bf16.mxu0 0
          %721 = vmatpush1.bf16.msra.mxu0 0
          %722 = vmatprep.subr.bf16.mxu0 0
          %723 = vmatpush1.bf16.msra.mxu0 0
          %724 = vmatprep.subr.bf16.mxu0 0
          %725 = vmatpush1.bf16.msra.mxu0 0
          %726 = vmatprep.subr.bf16.mxu0 0
          %727 = vmatpush1.bf16.msra.mxu0 0
          %728 = vmatprep.subr.bf16.mxu0 0
          %729 = vmatpush1.bf16.msra.mxu0 0
          %730 = vmatprep.subr.bf16.mxu0 0
          %731 = vmatpush1.bf16.msra.mxu0 0
          %732 = vmatprep.mubr.bf16.mxu0 0
          %733 = vmatmul.mubr.bf16.gmra.mrb[0].mxu0 %v635
          %v734 = vpop.f32.mrb[0].mxu0
          %v735 = vadd.f32 0.0, %v734
          %v736 = vpop.f32.mrb[0].mxu0
          %v737 = vpop.f32.mrb[0].mxu0
          %v738 = vadd.f32 0.0, %v737
          %v739 = vpop.f32.mrb[0].mxu0
          %740 = vdwg.mxu0
          %v741 = vld [vmem:[%s477] sm:$0xff]
          %v742 = vld [vmem:[%s477 + $0x8] sm:$0xff]
          %v743 = vld [vmem:[%s432] sm:$0xff]
          %v744 = vld [vmem:[%s432 + $0x8] sm:$0xff]
          %746 = vset.pattern.permute.xlu0 0
          %747 = vperm.xlu0 %746, %v743
          %v748 = vpop.permute.xlu0 %747
          %751 = vset.pattern.permute.xlu0 0
          %752 = vperm.xlu0 %751, %v744
          %v753 = vpop.permute.xlu0 %752
          %v755 = vmul.f32 %v748, %v735
          %v756 = vmul.f32 %v753, %v738
          %v757 = vadd.f32 %v741, %v755
          %v758 = vadd.f32 %v742, %v756
          %759 = vst [vmem:[%s477] sm:$0xff] %v757
          %760 = vst [vmem:[%s477 + $0x8] sm:$0xff] %v758
        $region68: #{_lambda_.1} parent=39 // pred_fallthru
          _
        %s761 = sand.u32 %s232, 1
        %s762 = scalar_lea.sflag [#allocation9], %s761
        %s763 = sand.u32 %s232, 1
        %s764 = smul.addr %s763, 16
        %s765 = scalar_lea.vmem [#allocation16], %s764
        // Predicated region
        $region69: #{_lambda_.1} parent=39 // pred_check
          %p766 = pneg %p242
        $region70: #{_lambda_.1} parent=39 // pred_check_branch
          %768 = sbr.rel (%p766) target = $region72
        $region71: #{_lambda_.1} parent=39 // pred_region
          %s769 = sld [smem:[#allocation3 + %s46]]
          %s770 = smul.u32 2, %s769
          %s772 = ssub.s32 256, 256
          %773 = vsyncadd %s762, %s772
          %s774 = smul.addr %s770, 128
          %s775 = scalar_lea.hbm %s9, %s774
          %s776 = sshll.u32 %s765, 4
          %s777 = int_to_ptr.vmem [resolvable:$true] %s776
          %782 = dma.vmem_to_hbm [thread:$0]  %s777, 256, %s775, %s762, 128, 128, 8
        $region72: #{_lambda_.1} parent=39 // pred_fallthru
          _
      $region40: #{_lambda_.1} parent=5 // pred_fallthru
        _
      %p783 = scmp.le.s32.totalorder 2, %s37
      // Predicated region
      $region73: #{_lambda_.1} parent=5 // pred_check
        %p784 = pneg %p783
      $region74: #{_lambda_.1} parent=5 // pred_check_branch
        %786 = sbr.rel (%p784) target = $region76
      $region75: #{_lambda_.1} parent=5 // pred_region
        %s787 = ssub.s32 %s37, 2
        // Predicated region
        $region77: #{_lambda_.1} parent=75 // pred_check
          %p788 = pneg %p248
        $region78: #{_lambda_.1} parent=75 // pred_check_branch
          %790 = sbr.rel (%p788) target = $region80
        $region79: #{_lambda_.1} parent=75 // pred_region
          %s791 = sand.u32 %s233, 1
          %s792 = scalar_lea.sflag [#allocation9], %s791
          %s793 = sand.u32 %s233, 1
          %s794 = smul.addr %s793, 16
          %s795 = scalar_lea.vmem [#allocation16], %s794
          %796 = dma.done %s792, 256
        $region80: #{_lambda_.1} parent=75 // pred_fallthru
          _
      $region76: #{_lambda_.1} parent=5 // pred_fallthru
        _
    $region6: #{_lambda_.1} parent=1 // loop_footer
      %s41 = sadd.s32 1, %s37
    $region7: #{_lambda_.1} parent=1 // loop_footer_branch
      %36 = sbr.rel target = $region3
    $region8: #{_lambda_.1} parent=1 // loop_exit
      _
    %797 = vsyncpa [#allocation8], 1
    %s798 = scalar_lea.sflag [#allocation8], 1
    %799 = vsyncpa %s798, 1
    %800 = vsyncpa [#allocation11], 1
    %s801 = scalar_lea.sflag [#allocation11], 1
    %802 = vsyncpa %s801, 1
    %803 = vsyncpa [#allocation14], 1
    %s804 = scalar_lea.sflag [#allocation14], 1
    %805 = vsyncpa %s804, 1
    %806 = vsyncpa [#allocation9], 1
    %s807 = scalar_lea.sflag [#allocation9], 1
    %808 = vsyncpa %s807, 1

</llo_original>
